<compile_context>
chip_gen: v7x
topology: tpu7x:2x2x1
jax: 0.10.0
libtpu: 0.0.40
codegen_flags: <defaults>
</compile_context>

<pallas_src>
import functools

import jax
import jax.numpy as jnp
import numpy as np
from jax.experimental import pallas as pl
from jax.experimental.pallas import tpu as pltpu

OUT_CHANNEL_F = 64


# ------------------------------ fused kernel --------------------------------

def _fused_net_kernel(x_ref, rbw_ref, rbb_ref, dcw_ref, dcb_ref, o_ref,
                      pad_ref, *, H, W, C):
    """feature_reconsnet forward for one batch element, entirely in VMEM.

    x_ref   : (1, H*W, C)      input activation (NHWC flattened to spatial x C)
    rbw_ref : (3, 2, 9*C, C)   ResBlock conv weights (tap-major im2col form)
    rbb_ref : (3, 2, 1, C)     ResBlock conv biases
    dcw_ref : (9*C, 12)        deconv 4-phase combined weight
    dcb_ref : (1, 12)          deconv 4-phase combined bias
    o_ref   : (1, H*W, 12)     phase-packed deconv output
    pad_ref : (H+2, W+2, C)    zero-halo VMEM scratch reused by every conv
    """
    HW = H * W

    # Zero the halo scratch once; only the interior is rewritten below, so the
    # 1-pixel zero border is reused by every conv and by the deconv phases.
    pad_ref[...] = jnp.zeros_like(pad_ref)

    def im2col(act):
        # act: (H*W, C) -> (H*W, 9*C) patch matrix for a 3x3 / pad=1 window.
        pad_ref[1:H + 1, 1:W + 1, :] = act.reshape(H, W, C)
        cols = [pad_ref[dy:dy + H, dx:dx + W, :].reshape(HW, C)
                for dy in range(3) for dx in range(3)]
        return jnp.concatenate(cols, axis=1)

    def conv3x3(act, w, b, relu):
        y = jnp.dot(im2col(act), w, preferred_element_type=jnp.float32) + b
        return jnp.maximum(y, 0.0) if relu else y

    x0 = x_ref[0].astype(jnp.float32)                     # (H*W, C)
    act = x0
    for i in range(3):                                    # resb1 / resb2 / resb3
        h = conv3x3(act, rbw_ref[i, 0], rbb_ref[i, 0], relu=True)
        h = conv3x3(h, rbw_ref[i, 1], rbb_ref[i, 1], relu=False)
        act = act + h                                     # residual add (fused)
    act = act + x0                                        # fused skip: x3 + x

    # deconv1: all 4 subpixel phases in one matmul over the same patch matrix.
    y = jnp.dot(im2col(act), dcw_ref[...],
                preferred_element_type=jnp.float32) + dcb_ref[...]
    o_ref[0] = y.astype(o_ref.dtype)                      # (H*W, 12)


# ------------------------------ wrapper / glue -------------------------------

def _deconv_phase_weight(wf):
    """(5,5,Cin,3) forward-conv-form deconv weight -> (9*Cin, 12) phase weight.

    Output column (ry*2+rx)*3 + co holds the weight producing output pixel
    (2p+ry, 2q+rx) channel co from the 3x3 input window starting at (p-1, q-1):
    tap (wdy, wdx) uses wf[2*wdy - ry, 2*wdx - rx] (zero where out of range).
    """
    wf1 = jnp.pad(wf, ((1, 0), (1, 0), (0, 0), (0, 0)))   # (6,6,Cin,3)
    dc = jnp.concatenate([wf1[1 - ry::2, 1 - rx::2]
                          for ry in (0, 1) for rx in (0, 1)], axis=-1)
    Cin = wf.shape[2]
    return dc.reshape(9 * Cin, 12)                        # (576, 12)


def feature_reconsnet_apply(x_nchw, params):
    N, C, H, W = x_nchw.shape
    HW = H * W
    x = jnp.transpose(x_nchw, (0, 2, 3, 1)).reshape(N, HW, C)  # NCHW -> (N,HW,C)

    # Pack ResBlock weights into tap-major im2col form.
    names = ("resb1", "resb2", "resb3")
    rb_w = jnp.stack([jnp.stack([params[n]["w1"].reshape(9 * C, C),
                                 params[n]["w2"].reshape(9 * C, C)])
                      for n in names])                         # (3,2,576,64)
    rb_b = jnp.stack([jnp.stack([params[n]["b1"].reshape(1, C),
                                 params[n]["b2"].reshape(1, C)])
                      for n in names])                         # (3,2,1,64)

    # ConvTranspose2d weight (Cin, Cout, 5, 5) -> flipped/transposed forward
    # conv form (5,5,Cin,Cout), then combined 4-phase weight.
    wt = params["deconv_w"]
    wf = jnp.transpose(wt[:, :, ::-1, ::-1], (2, 3, 0, 1))     # (5,5,64,3)
    dc_w = _deconv_phase_weight(wf)                            # (576, 12)
    dc_b = jnp.tile(params["deconv_b"], 4).reshape(1, 12)

    kern = functools.partial(_fused_net_kernel, H=H, W=W, C=C)
    out = pl.pallas_call(
        kern,
        out_shape=jax.ShapeDtypeStruct((N, HW, 12), x.dtype),
        grid=(N,),
        in_specs=[
            pl.BlockSpec((1, HW, C), lambda n: (n, 0, 0)),
            pl.BlockSpec((3, 2, 9 * C, C), lambda n: (0, 0, 0, 0)),
            pl.BlockSpec((3, 2, 1, C), lambda n: (0, 0, 0, 0)),
            pl.BlockSpec((9 * C, 12), lambda n: (0, 0)),
            pl.BlockSpec((1, 12), lambda n: (0, 0)),
        ],
        out_specs=pl.BlockSpec((1, HW, 12), lambda n: (n, 0, 0)),
        scratch_shapes=[pltpu.VMEM((H + 2, W + 2, C), jnp.float32)],
        compiler_params=pltpu.CompilerParams(
            dimension_semantics=("parallel",)),
    )(x, rb_w, rb_b, dc_w, dc_b)                               # (N, HW, 12)

    # Phase-packed (p, q, ry, rx, co) -> NCHW (N, 3, 2H, 2W). Tiny tensor.
    y = out.reshape(N, H, W, 2, 2, 3)
    y = jnp.transpose(y, (0, 5, 1, 3, 2, 4)).reshape(N, 3, 2 * H, 2 * W)
    return y


# --------------------------- deterministic init ------------------------------

def _xavier_uniform(key, shape, fan_in, fan_out):
    bound = float(np.sqrt(6.0 / (fan_in + fan_out)))
    return jax.random.uniform(key, shape, jnp.float32, -bound, bound)


def init_params(key):
    ks = jax.random.split(key, 8)
    C = OUT_CHANNEL_F
    params = {}
    for i, name in enumerate(("resb1", "resb2", "resb3")):
        # conv weights stored HWIO (3,3,Cin,Cout); real PyTorch Conv2d weights
        # (Cout,Cin,3,3) would need a (2,3,1,0) transpose.
        params[name] = dict(
            w1=_xavier_uniform(ks[2 * i], (3, 3, C, C), C * 9, C * 9),
            b1=jnp.zeros((C,), jnp.float32),
            w2=_xavier_uniform(ks[2 * i + 1], (3, 3, C, C), C * 9, C * 9),
            b2=jnp.zeros((C,), jnp.float32),
        )
    # deconv weight in true PyTorch ConvTranspose2d layout (Cin, Cout, kH, kW).
    params["deconv_w"] = _xavier_uniform(ks[6], (C, 3, 5, 5), C * 25, 3 * 25)
    bb = 1.0 / np.sqrt(C * 5 * 5)
    params["deconv_b"] = jax.random.uniform(ks[7], (3,), jnp.float32, -bb, bb)
    return params


# ------------------------------- pure-JAX ref --------------------------------

def _reference(x_nchw, params):
    x = jnp.transpose(x_nchw, (0, 2, 3, 1))

    def conv(z, w, b, pad, lhs_dil=(1, 1)):
        y = jax.lax.conv_general_dilated(
            z, w, (1, 1), pad, lhs_dilation=lhs_dil,
            dimension_numbers=("NHWC", "HWIO", "NHWC"))
        return y + b

    def rb(z, p):
        h = jnp.maximum(conv(z, p["w1"], p["b1"], ((1, 1), (1, 1))), 0.0)
        return z + conv(h, p["w2"], p["b2"], ((1, 1), (1, 1)))

    x1 = rb(x, params["resb1"])
    x2 = rb(x1, params["resb2"])
    x3 = rb(x2, params["resb3"])
    wt = params["deconv_w"]
    wf = jnp.transpose(wt[:, :, ::-1, ::-1], (2, 3, 0, 1))     # (5,5,Cin,Cout)
    y = conv(x3 + x, wf, params["deconv_b"], ((2, 3), (2, 3)), (2, 2))
    return jnp.transpose(y, (0, 3, 1, 2))


# ----------------------------------- main ------------------------------------

if __name__ == "__main__":
    key = jax.random.PRNGKey(0)
    kx, kp = jax.random.split(key)

    N, H, W = 2, 8, 8
    x = jax.random.normal(kx, (N, OUT_CHANNEL_F, H, W), jnp.float32)  # NCHW
    params = init_params(kp)

    out = jax.block_until_ready(jax.jit(feature_reconsnet_apply)(x, params))
    assert out.shape == (N, 3, 2 * H, 2 * W), out.shape

    ref = jax.block_until_ready(_reference(x, params))
    np.testing.assert_allclose(np.asarray(out), np.asarray(ref),
                               rtol=1e-3, atol=1e-3)
    print("KERNEL_OK")
</pallas_src>

<mosaic_0001>
module attributes {stable_mosaic.version = 11 : i64} {
  func.func @_fused_net_kernel(%arg0: i32, %arg1: memref<1x64x64xf32, #tpu.memory_space<vmem>>, %arg2: memref<3x2x576x64xf32, #tpu.memory_space<vmem>>, %arg3: memref<3x2x1x64xf32, #tpu.memory_space<vmem>>, %arg4: memref<576x12xf32, #tpu.memory_space<vmem>>, %arg5: memref<1x12xf32, #tpu.memory_space<vmem>>, %arg6: memref<1x64x12xf32, #tpu.memory_space<vmem>>, %arg7: memref<10x10x64xf32, #tpu.memory_space<vmem>>) attributes {dimension_semantics = [#tpu.dimension_semantics<parallel>], iteration_bounds = array<i64: 2>, scalar_prefetch = 0 : i64, scratch_operands = 1 : i64, tpu.core_type = #tpu.core_type<tc>, window_params = [{transform_indices = @transform_0, window_bounds = array<i64: 1, 64, 64>}, {pipeline_mode = #tpu.pipeline_mode<synchronous>, transform_indices = @transform_1, window_bounds = array<i64: 3, 2, 576, 64>}, {pipeline_mode = #tpu.pipeline_mode<synchronous>, transform_indices = @transform_2, window_bounds = array<i64: 3, 2, 1, 64>}, {pipeline_mode = #tpu.pipeline_mode<synchronous>, transform_indices = @transform_3, window_bounds = array<i64: 576, 12>}, {pipeline_mode = #tpu.pipeline_mode<synchronous>, transform_indices = @transform_4, window_bounds = array<i64: 1, 12>}, {transform_indices = @transform_5, window_bounds = array<i64: 1, 64, 12>}]} {
    %cst = arith.constant 0.000000e+00 : f32
    %0 = vector.broadcast %cst : f32 to vector<10x10x64xf32>
    %c0 = arith.constant 0 : index
    %c0_0 = arith.constant 0 : index
    %c0_1 = arith.constant 0 : index
    %1 = vector.load %arg7[%c0, %c0_0, %c0_1] : memref<10x10x64xf32, #tpu.memory_space<vmem>>, vector<10x10x64xf32>
    tpu.vector_store %arg7[%c0, %c0_0, %c0_1], %0 {strides = array<i32>} : memref<10x10x64xf32, #tpu.memory_space<vmem>>, vector<10x10x64xf32>,
    %c0_2 = arith.constant 0 : index
    %c0_3 = arith.constant 0 : index
    %c0_4 = arith.constant 0 : index
    %2 = vector.load %arg1[%c0_2, %c0_3, %c0_4] : memref<1x64x64xf32, #tpu.memory_space<vmem>>, vector<1x64x64xf32>
    %3 = vector.shape_cast %2 : vector<1x64x64xf32> to vector<64x64xf32>
    %c0_5 = arith.constant 0 : index
    %c0_6 = arith.constant 0 : index
    %c0_7 = arith.constant 0 : index
    %c0_8 = arith.constant 0 : index
    %4 = vector.load %arg2[%c0_5, %c0_6, %c0_7, %c0_8] : memref<3x2x576x64xf32, #tpu.memory_space<vmem>>, vector<1x1x576x64xf32>
    %5 = vector.shape_cast %4 : vector<1x1x576x64xf32> to vector<576x64xf32>
    %c0_9 = arith.constant 0 : index
    %c0_10 = arith.constant 0 : index
    %c0_11 = arith.constant 0 : index
    %c0_12 = arith.constant 0 : index
    %6 = vector.load %arg3[%c0_9, %c0_10, %c0_11, %c0_12] : memref<3x2x1x64xf32, #tpu.memory_space<vmem>>, vector<1x1x1x64xf32>
    %7 = vector.shape_cast %6 : vector<1x1x1x64xf32> to vector<1x64xf32>
    %8 = vector.shape_cast %3 : vector<64x64xf32> to vector<8x8x64xf32>
    %c1 = arith.constant 1 : index
    %c1_13 = arith.constant 1 : index
    %c0_14 = arith.constant 0 : index
    %9 = vector.load %arg7[%c1, %c1_13, %c0_14] : memref<10x10x64xf32, #tpu.memory_space<vmem>>, vector<8x8x64xf32>
    tpu.vector_store %arg7[%c1, %c1_13, %c0_14], %8 {strides = array<i32>} : memref<10x10x64xf32, #tpu.memory_space<vmem>>, vector<8x8x64xf32>,
    %c0_15 = arith.constant 0 : index
    %c0_16 = arith.constant 0 : index
    %c0_17 = arith.constant 0 : index
    %10 = vector.load %arg7[%c0_15, %c0_16, %c0_17] : memref<10x10x64xf32, #tpu.memory_space<vmem>>, vector<8x8x64xf32>
    %11 = vector.shape_cast %10 : vector<8x8x64xf32> to vector<64x64xf32>
    %c0_18 = arith.constant 0 : index
    %c1_19 = arith.constant 1 : index
    %c0_20 = arith.constant 0 : index
    %12 = vector.load %arg7[%c0_18, %c1_19, %c0_20] : memref<10x10x64xf32, #tpu.memory_space<vmem>>, vector<8x8x64xf32>
    %13 = vector.shape_cast %12 : vector<8x8x64xf32> to vector<64x64xf32>
    %c0_21 = arith.constant 0 : index
    %c2 = arith.constant 2 : index
    %c0_22 = arith.constant 0 : index
    %14 = vector.load %arg7[%c0_21, %c2, %c0_22] : memref<10x10x64xf32, #tpu.memory_space<vmem>>, vector<8x8x64xf32>
    %15 = vector.shape_cast %14 : vector<8x8x64xf32> to vector<64x64xf32>
    %c1_23 = arith.constant 1 : index
    %c0_24 = arith.constant 0 : index
    %c0_25 = arith.constant 0 : index
    %16 = vector.load %arg7[%c1_23, %c0_24, %c0_25] : memref<10x10x64xf32, #tpu.memory_space<vmem>>, vector<8x8x64xf32>
    %17 = vector.shape_cast %16 : vector<8x8x64xf32> to vector<64x64xf32>
    %c1_26 = arith.constant 1 : index
    %c1_27 = arith.constant 1 : index
    %c0_28 = arith.constant 0 : index
    %18 = vector.load %arg7[%c1_26, %c1_27, %c0_28] : memref<10x10x64xf32, #tpu.memory_space<vmem>>, vector<8x8x64xf32>
    %19 = vector.shape_cast %18 : vector<8x8x64xf32> to vector<64x64xf32>
    %c1_29 = arith.constant 1 : index
    %c2_30 = arith.constant 2 : index
    %c0_31 = arith.constant 0 : index
    %20 = vector.load %arg7[%c1_29, %c2_30, %c0_31] : memref<10x10x64xf32, #tpu.memory_space<vmem>>, vector<8x8x64xf32>
    %21 = vector.shape_cast %20 : vector<8x8x64xf32> to vector<64x64xf32>
    %c2_32 = arith.constant 2 : index
    %c0_33 = arith.constant 0 : index
    %c0_34 = arith.constant 0 : index
    %22 = vector.load %arg7[%c2_32, %c0_33, %c0_34] : memref<10x10x64xf32, #tpu.memory_space<vmem>>, vector<8x8x64xf32>
    %23 = vector.shape_cast %22 : vector<8x8x64xf32> to vector<64x64xf32>
    %c2_35 = arith.constant 2 : index
    %c1_36 = arith.constant 1 : index
    %c0_37 = arith.constant 0 : index
    %24 = vector.load %arg7[%c2_35, %c1_36, %c0_37] : memref<10x10x64xf32, #tpu.memory_space<vmem>>, vector<8x8x64xf32>
    %25 = vector.shape_cast %24 : vector<8x8x64xf32> to vector<64x64xf32>
    %c2_38 = arith.constant 2 : index
    %c2_39 = arith.constant 2 : index
    %c0_40 = arith.constant 0 : index
    %26 = vector.load %arg7[%c2_38, %c2_39, %c0_40] : memref<10x10x64xf32, #tpu.memory_space<vmem>>, vector<8x8x64xf32>
    %27 = vector.shape_cast %26 : vector<8x8x64xf32> to vector<64x64xf32>
    %28 = tpu.concatenate %11, %13, %15, %17, %19, %21, %23, %25, %27 in 1 : vector<64x64xf32>, vector<64x64xf32>, vector<64x64xf32>, vector<64x64xf32>, vector<64x64xf32>, vector<64x64xf32>, vector<64x64xf32>, vector<64x64xf32>, vector<64x64xf32> -> vector<64x576xf32>
    %cst_41 = arith.constant dense<0.000000e+00> : vector<64x64xf32>
    %29 = tpu.matmul %28, %5, %cst_41 {dimension_numbers = #tpu.dot_dimension_numbers<[1], [0], [0], [1], [0, 0, 1, 1], [], []>} : vector<64x576xf32>, vector<576x64xf32>, vector<64x64xf32> -> vector<64x64xf32>
    %30 = vector.broadcast %7 : vector<1x64xf32> to vector<64x64xf32>
    %31 = arith.addf %29, %30 : vector<64x64xf32>
    %cst_42 = arith.constant 0.000000e+00 : f32
    %32 = vector.broadcast %cst_42 : f32 to vector<64x64xf32>
    %33 = arith.maximumf %31, %32 : vector<64x64xf32>
    %c0_43 = arith.constant 0 : index
    %c1_44 = arith.constant 1 : index
    %c0_45 = arith.constant 0 : index
    %c0_46 = arith.constant 0 : index
    %34 = vector.load %arg2[%c0_43, %c1_44, %c0_45, %c0_46] : memref<3x2x576x64xf32, #tpu.memory_space<vmem>>, vector<1x1x576x64xf32>
    %35 = vector.shape_cast %34 : vector<1x1x576x64xf32> to vector<576x64xf32>
    %c0_47 = arith.constant 0 : index
    %c1_48 = arith.constant 1 : index
    %c0_49 = arith.constant 0 : index
    %c0_50 = arith.constant 0 : index
    %36 = vector.load %arg3[%c0_47, %c1_48, %c0_49, %c0_50] : memref<3x2x1x64xf32, #tpu.memory_space<vmem>>, vector<1x1x1x64xf32>
    %37 = vector.shape_cast %36 : vector<1x1x1x64xf32> to vector<1x64xf32>
    %38 = vector.shape_cast %33 : vector<64x64xf32> to vector<8x8x64xf32>
    %c1_51 = arith.constant 1 : index
    %c1_52 = arith.constant 1 : index
    %c0_53 = arith.constant 0 : index
    %39 = vector.load %arg7[%c1_51, %c1_52, %c0_53] : memref<10x10x64xf32, #tpu.memory_space<vmem>>, vector<8x8x64xf32>
    tpu.vector_store %arg7[%c1_51, %c1_52, %c0_53], %38 {strides = array<i32>} : memref<10x10x64xf32, #tpu.memory_space<vmem>>, vector<8x8x64xf32>,
    %c0_54 = arith.constant 0 : index
    %c0_55 = arith.constant 0 : index
    %c0_56 = arith.constant 0 : index
    %40 = vector.load %arg7[%c0_54, %c0_55, %c0_56] : memref<10x10x64xf32, #tpu.memory_space<vmem>>, vector<8x8x64xf32>
    %41 = vector.shape_cast %40 : vector<8x8x64xf32> to vector<64x64xf32>
    %c0_57 = arith.constant 0 : index
    %c1_58 = arith.constant 1 : index
    %c0_59 = arith.constant 0 : index
    %42 = vector.load %arg7[%c0_57, %c1_58, %c0_59] : memref<10x10x64xf32, #tpu.memory_space<vmem>>, vector<8x8x64xf32>
    %43 = vector.shape_cast %42 : vector<8x8x64xf32> to vector<64x64xf32>
    %c0_60 = arith.constant 0 : index
    %c2_61 = arith.constant 2 : index
    %c0_62 = arith.constant 0 : index
    %44 = vector.load %arg7[%c0_60, %c2_61, %c0_62] : memref<10x10x64xf32, #tpu.memory_space<vmem>>, vector<8x8x64xf32>
    %45 = vector.shape_cast %44 : vector<8x8x64xf32> to vector<64x64xf32>
    %c1_63 = arith.constant 1 : index
    %c0_64 = arith.constant 0 : index
    %c0_65 = arith.constant 0 : index
    %46 = vector.load %arg7[%c1_63, %c0_64, %c0_65] : memref<10x10x64xf32, #tpu.memory_space<vmem>>, vector<8x8x64xf32>
    %47 = vector.shape_cast %46 : vector<8x8x64xf32> to vector<64x64xf32>
    %c1_66 = arith.constant 1 : index
    %c1_67 = arith.constant 1 : index
    %c0_68 = arith.constant 0 : index
    %48 = vector.load %arg7[%c1_66, %c1_67, %c0_68] : memref<10x10x64xf32, #tpu.memory_space<vmem>>, vector<8x8x64xf32>
    %49 = vector.shape_cast %48 : vector<8x8x64xf32> to vector<64x64xf32>
    %c1_69 = arith.constant 1 : index
    %c2_70 = arith.constant 2 : index
    %c0_71 = arith.constant 0 : index
    %50 = vector.load %arg7[%c1_69, %c2_70, %c0_71] : memref<10x10x64xf32, #tpu.memory_space<vmem>>, vector<8x8x64xf32>
    %51 = vector.shape_cast %50 : vector<8x8x64xf32> to vector<64x64xf32>
    %c2_72 = arith.constant 2 : index
    %c0_73 = arith.constant 0 : index
    %c0_74 = arith.constant 0 : index
    %52 = vector.load %arg7[%c2_72, %c0_73, %c0_74] : memref<10x10x64xf32, #tpu.memory_space<vmem>>, vector<8x8x64xf32>
    %53 = vector.shape_cast %52 : vector<8x8x64xf32> to vector<64x64xf32>
    %c2_75 = arith.constant 2 : index
    %c1_76 = arith.constant 1 : index
    %c0_77 = arith.constant 0 : index
    %54 = vector.load %arg7[%c2_75, %c1_76, %c0_77] : memref<10x10x64xf32, #tpu.memory_space<vmem>>, vector<8x8x64xf32>
    %55 = vector.shape_cast %54 : vector<8x8x64xf32> to vector<64x64xf32>
    %c2_78 = arith.constant 2 : index
    %c2_79 = arith.constant 2 : index
    %c0_80 = arith.constant 0 : index
    %56 = vector.load %arg7[%c2_78, %c2_79, %c0_80] : memref<10x10x64xf32, #tpu.memory_space<vmem>>, vector<8x8x64xf32>
    %57 = vector.shape_cast %56 : vector<8x8x64xf32> to vector<64x64xf32>
    %58 = tpu.concatenate %41, %43, %45, %47, %49, %51, %53, %55, %57 in 1 : vector<64x64xf32>, vector<64x64xf32>, vector<64x64xf32>, vector<64x64xf32>, vector<64x64xf32>, vector<64x64xf32>, vector<64x64xf32>, vector<64x64xf32>, vector<64x64xf32> -> vector<64x576xf32>
    %cst_81 = arith.constant dense<0.000000e+00> : vector<64x64xf32>
    %59 = tpu.matmul %58, %35, %cst_81 {dimension_numbers = #tpu.dot_dimension_numbers<[1], [0], [0], [1], [0, 0, 1, 1], [], []>} : vector<64x576xf32>, vector<576x64xf32>, vector<64x64xf32> -> vector<64x64xf32>
    %60 = vector.broadcast %37 : vector<1x64xf32> to vector<64x64xf32>
    %61 = arith.addf %59, %60 : vector<64x64xf32>
    %62 = arith.addf %3, %61 : vector<64x64xf32>
    %c1_82 = arith.constant 1 : index
    %c0_83 = arith.constant 0 : index
    %c0_84 = arith.constant 0 : index
    %c0_85 = arith.constant 0 : index
    %63 = vector.load %arg2[%c1_82, %c0_83, %c0_84, %c0_85] : memref<3x2x576x64xf32, #tpu.memory_space<vmem>>, vector<1x1x576x64xf32>
    %64 = vector.shape_cast %63 : vector<1x1x576x64xf32> to vector<576x64xf32>
    %c1_86 = arith.constant 1 : index
    %c0_87 = arith.constant 0 : index
    %c0_88 = arith.constant 0 : index
    %c0_89 = arith.constant 0 : index
    %65 = vector.load %arg3[%c1_86, %c0_87, %c0_88, %c0_89] : memref<3x2x1x64xf32, #tpu.memory_space<vmem>>, vector<1x1x1x64xf32>
    %66 = vector.shape_cast %65 : vector<1x1x1x64xf32> to vector<1x64xf32>
    %67 = vector.shape_cast %62 : vector<64x64xf32> to vector<8x8x64xf32>
    %c1_90 = arith.constant 1 : index
    %c1_91 = arith.constant 1 : index
    %c0_92 = arith.constant 0 : index
    %68 = vector.load %arg7[%c1_90, %c1_91, %c0_92] : memref<10x10x64xf32, #tpu.memory_space<vmem>>, vector<8x8x64xf32>
    tpu.vector_store %arg7[%c1_90, %c1_91, %c0_92], %67 {strides = array<i32>} : memref<10x10x64xf32, #tpu.memory_space<vmem>>, vector<8x8x64xf32>,
    %c0_93 = arith.constant 0 : index
    %c0_94 = arith.constant 0 : index
    %c0_95 = arith.constant 0 : index
    %69 = vector.load %arg7[%c0_93, %c0_94, %c0_95] : memref<10x10x64xf32, #tpu.memory_space<vmem>>, vector<8x8x64xf32>
    %70 = vector.shape_cast %69 : vector<8x8x64xf32> to vector<64x64xf32>
    %c0_96 = arith.constant 0 : index
    %c1_97 = arith.constant 1 : index
    %c0_98 = arith.constant 0 : index
    %71 = vector.load %arg7[%c0_96, %c1_97, %c0_98] : memref<10x10x64xf32, #tpu.memory_space<vmem>>, vector<8x8x64xf32>
    %72 = vector.shape_cast %71 : vector<8x8x64xf32> to vector<64x64xf32>
    %c0_99 = arith.constant 0 : index
    %c2_100 = arith.constant 2 : index
    %c0_101 = arith.constant 0 : index
    %73 = vector.load %arg7[%c0_99, %c2_100, %c0_101] : memref<10x10x64xf32, #tpu.memory_space<vmem>>, vector<8x8x64xf32>
    %74 = vector.shape_cast %73 : vector<8x8x64xf32> to vector<64x64xf32>
    %c1_102 = arith.constant 1 : index
    %c0_103 = arith.constant 0 : index
    %c0_104 = arith.constant 0 : index
    %75 = vector.load %arg7[%c1_102, %c0_103, %c0_104] : memref<10x10x64xf32, #tpu.memory_space<vmem>>, vector<8x8x64xf32>
    %76 = vector.shape_cast %75 : vector<8x8x64xf32> to vector<64x64xf32>
    %c1_105 = arith.constant 1 : index
    %c1_106 = arith.constant 1 : index
    %c0_107 = arith.constant 0 : index
    %77 = vector.load %arg7[%c1_105, %c1_106, %c0_107] : memref<10x10x64xf32, #tpu.memory_space<vmem>>, vector<8x8x64xf32>
    %78 = vector.shape_cast %77 : vector<8x8x64xf32> to vector<64x64xf32>
    %c1_108 = arith.constant 1 : index
    %c2_109 = arith.constant 2 : index
    %c0_110 = arith.constant 0 : index
    %79 = vector.load %arg7[%c1_108, %c2_109, %c0_110] : memref<10x10x64xf32, #tpu.memory_space<vmem>>, vector<8x8x64xf32>
    %80 = vector.shape_cast %79 : vector<8x8x64xf32> to vector<64x64xf32>
    %c2_111 = arith.constant 2 : index
    %c0_112 = arith.constant 0 : index
    %c0_113 = arith.constant 0 : index
    %81 = vector.load %arg7[%c2_111, %c0_112, %c0_113] : memref<10x10x64xf32, #tpu.memory_space<vmem>>, vector<8x8x64xf32>
    %82 = vector.shape_cast %81 : vector<8x8x64xf32> to vector<64x64xf32>
    %c2_114 = arith.constant 2 : index
    %c1_115 = arith.constant 1 : index
    %c0_116 = arith.constant 0 : index
    %83 = vector.load %arg7[%c2_114, %c1_115, %c0_116] : memref<10x10x64xf32, #tpu.memory_space<vmem>>, vector<8x8x64xf32>
    %84 = vector.shape_cast %83 : vector<8x8x64xf32> to vector<64x64xf32>
    %c2_117 = arith.constant 2 : index
    %c2_118 = arith.constant 2 : index
    %c0_119 = arith.constant 0 : index
    %85 = vector.load %arg7[%c2_117, %c2_118, %c0_119] : memref<10x10x64xf32, #tpu.memory_space<vmem>>, vector<8x8x64xf32>
    %86 = vector.shape_cast %85 : vector<8x8x64xf32> to vector<64x64xf32>
    %87 = tpu.concatenate %70, %72, %74, %76, %78, %80, %82, %84, %86 in 1 : vector<64x64xf32>, vector<64x64xf32>, vector<64x64xf32>, vector<64x64xf32>, vector<64x64xf32>, vector<64x64xf32>, vector<64x64xf32>, vector<64x64xf32>, vector<64x64xf32> -> vector<64x576xf32>
    %cst_120 = arith.constant dense<0.000000e+00> : vector<64x64xf32>
    %88 = tpu.matmul %87, %64, %cst_120 {dimension_numbers = #tpu.dot_dimension_numbers<[1], [0], [0], [1], [0, 0, 1, 1], [], []>} : vector<64x576xf32>, vector<576x64xf32>, vector<64x64xf32> -> vector<64x64xf32>
    %89 = vector.broadcast %66 : vector<1x64xf32> to vector<64x64xf32>
    %90 = arith.addf %88, %89 : vector<64x64xf32>
    %cst_121 = arith.constant 0.000000e+00 : f32
    %91 = vector.broadcast %cst_121 : f32 to vector<64x64xf32>
    %92 = arith.maximumf %90, %91 : vector<64x64xf32>
    %c1_122 = arith.constant 1 : index
    %c1_123 = arith.constant 1 : index
    %c0_124 = arith.constant 0 : index
    %c0_125 = arith.constant 0 : index
    %93 = vector.load %arg2[%c1_122, %c1_123, %c0_124, %c0_125] : memref<3x2x576x64xf32, #tpu.memory_space<vmem>>, vector<1x1x576x64xf32>
    %94 = vector.shape_cast %93 : vector<1x1x576x64xf32> to vector<576x64xf32>
    %c1_126 = arith.constant 1 : index
    %c1_127 = arith.constant 1 : index
    %c0_128 = arith.constant 0 : index
    %c0_129 = arith.constant 0 : index
    %95 = vector.load %arg3[%c1_126, %c1_127, %c0_128, %c0_129] : memref<3x2x1x64xf32, #tpu.memory_space<vmem>>, vector<1x1x1x64xf32>
    %96 = vector.shape_cast %95 : vector<1x1x1x64xf32> to vector<1x64xf32>
    %97 = vector.shape_cast %92 : vector<64x64xf32> to vector<8x8x64xf32>
    %c1_130 = arith.constant 1 : index
    %c1_131 = arith.constant 1 : index
    %c0_132 = arith.constant 0 : index
    %98 = vector.load %arg7[%c1_130, %c1_131, %c0_132] : memref<10x10x64xf32, #tpu.memory_space<vmem>>, vector<8x8x64xf32>
    tpu.vector_store %arg7[%c1_130, %c1_131, %c0_132], %97 {strides = array<i32>} : memref<10x10x64xf32, #tpu.memory_space<vmem>>, vector<8x8x64xf32>,
    %c0_133 = arith.constant 0 : index
    %c0_134 = arith.constant 0 : index
    %c0_135 = arith.constant 0 : index
    %99 = vector.load %arg7[%c0_133, %c0_134, %c0_135] : memref<10x10x64xf32, #tpu.memory_space<vmem>>, vector<8x8x64xf32>
    %100 = vector.shape_cast %99 : vector<8x8x64xf32> to vector<64x64xf32>
    %c0_136 = arith.constant 0 : index
    %c1_137 = arith.constant 1 : index
    %c0_138 = arith.constant 0 : index
    %101 = vector.load %arg7[%c0_136, %c1_137, %c0_138] : memref<10x10x64xf32, #tpu.memory_space<vmem>>, vector<8x8x64xf32>
    %102 = vector.shape_cast %101 : vector<8x8x64xf32> to vector<64x64xf32>
    %c0_139 = arith.constant 0 : index
    %c2_140 = arith.constant 2 : index
    %c0_141 = arith.constant 0 : index
    %103 = vector.load %arg7[%c0_139, %c2_140, %c0_141] : memref<10x10x64xf32, #tpu.memory_space<vmem>>, vector<8x8x64xf32>
    %104 = vector.shape_cast %103 : vector<8x8x64xf32> to vector<64x64xf32>
    %c1_142 = arith.constant 1 : index
    %c0_143 = arith.constant 0 : index
    %c0_144 = arith.constant 0 : index
    %105 = vector.load %arg7[%c1_142, %c0_143, %c0_144] : memref<10x10x64xf32, #tpu.memory_space<vmem>>, vector<8x8x64xf32>
    %106 = vector.shape_cast %105 : vector<8x8x64xf32> to vector<64x64xf32>
    %c1_145 = arith.constant 1 : index
    %c1_146 = arith.constant 1 : index
    %c0_147 = arith.constant 0 : index
    %107 = vector.load %arg7[%c1_145, %c1_146, %c0_147] : memref<10x10x64xf32, #tpu.memory_space<vmem>>, vector<8x8x64xf32>
    %108 = vector.shape_cast %107 : vector<8x8x64xf32> to vector<64x64xf32>
    %c1_148 = arith.constant 1 : index
    %c2_149 = arith.constant 2 : index
    %c0_150 = arith.constant 0 : index
    %109 = vector.load %arg7[%c1_148, %c2_149, %c0_150] : memref<10x10x64xf32, #tpu.memory_space<vmem>>, vector<8x8x64xf32>
    %110 = vector.shape_cast %109 : vector<8x8x64xf32> to vector<64x64xf32>
    %c2_151 = arith.constant 2 : index
    %c0_152 = arith.constant 0 : index
    %c0_153 = arith.constant 0 : index
    %111 = vector.load %arg7[%c2_151, %c0_152, %c0_153] : memref<10x10x64xf32, #tpu.memory_space<vmem>>, vector<8x8x64xf32>
    %112 = vector.shape_cast %111 : vector<8x8x64xf32> to vector<64x64xf32>
    %c2_154 = arith.constant 2 : index
    %c1_155 = arith.constant 1 : index
    %c0_156 = arith.constant 0 : index
    %113 = vector.load %arg7[%c2_154, %c1_155, %c0_156] : memref<10x10x64xf32, #tpu.memory_space<vmem>>, vector<8x8x64xf32>
    %114 = vector.shape_cast %113 : vector<8x8x64xf32> to vector<64x64xf32>
    %c2_157 = arith.constant 2 : index
    %c2_158 = arith.constant 2 : index
    %c0_159 = arith.constant 0 : index
    %115 = vector.load %arg7[%c2_157, %c2_158, %c0_159] : memref<10x10x64xf32, #tpu.memory_space<vmem>>, vector<8x8x64xf32>
    %116 = vector.shape_cast %115 : vector<8x8x64xf32> to vector<64x64xf32>
    %117 = tpu.concatenate %100, %102, %104, %106, %108, %110, %112, %114, %116 in 1 : vector<64x64xf32>, vector<64x64xf32>, vector<64x64xf32>, vector<64x64xf32>, vector<64x64xf32>, vector<64x64xf32>, vector<64x64xf32>, vector<64x64xf32>, vector<64x64xf32> -> vector<64x576xf32>
    %cst_160 = arith.constant dense<0.000000e+00> : vector<64x64xf32>
    %118 = tpu.matmul %117, %94, %cst_160 {dimension_numbers = #tpu.dot_dimension_numbers<[1], [0], [0], [1], [0, 0, 1, 1], [], []>} : vector<64x576xf32>, vector<576x64xf32>, vector<64x64xf32> -> vector<64x64xf32>
    %119 = vector.broadcast %96 : vector<1x64xf32> to vector<64x64xf32>
    %120 = arith.addf %118, %119 : vector<64x64xf32>
    %121 = arith.addf %62, %120 : vector<64x64xf32>
    %c2_161 = arith.constant 2 : index
    %c0_162 = arith.constant 0 : index
    %c0_163 = arith.constant 0 : index
    %c0_164 = arith.constant 0 : index
    %122 = vector.load %arg2[%c2_161, %c0_162, %c0_163, %c0_164] : memref<3x2x576x64xf32, #tpu.memory_space<vmem>>, vector<1x1x576x64xf32>
    %123 = vector.shape_cast %122 : vector<1x1x576x64xf32> to vector<576x64xf32>
    %c2_165 = arith.constant 2 : index
    %c0_166 = arith.constant 0 : index
    %c0_167 = arith.constant 0 : index
    %c0_168 = arith.constant 0 : index
    %124 = vector.load %arg3[%c2_165, %c0_166, %c0_167, %c0_168] : memref<3x2x1x64xf32, #tpu.memory_space<vmem>>, vector<1x1x1x64xf32>
    %125 = vector.shape_cast %124 : vector<1x1x1x64xf32> to vector<1x64xf32>
    %126 = vector.shape_cast %121 : vector<64x64xf32> to vector<8x8x64xf32>
    %c1_169 = arith.constant 1 : index
    %c1_170 = arith.constant 1 : index
    %c0_171 = arith.constant 0 : index
    %127 = vector.load %arg7[%c1_169, %c1_170, %c0_171] : memref<10x10x64xf32, #tpu.memory_space<vmem>>, vector<8x8x64xf32>
    tpu.vector_store %arg7[%c1_169, %c1_170, %c0_171], %126 {strides = array<i32>} : memref<10x10x64xf32, #tpu.memory_space<vmem>>, vector<8x8x64xf32>,
    %c0_172 = arith.constant 0 : index
    %c0_173 = arith.constant 0 : index
    %c0_174 = arith.constant 0 : index
    %128 = vector.load %arg7[%c0_172, %c0_173, %c0_174] : memref<10x10x64xf32, #tpu.memory_space<vmem>>, vector<8x8x64xf32>
    %129 = vector.shape_cast %128 : vector<8x8x64xf32> to vector<64x64xf32>
    %c0_175 = arith.constant 0 : index
    %c1_176 = arith.constant 1 : index
    %c0_177 = arith.constant 0 : index
    %130 = vector.load %arg7[%c0_175, %c1_176, %c0_177] : memref<10x10x64xf32, #tpu.memory_space<vmem>>, vector<8x8x64xf32>
    %131 = vector.shape_cast %130 : vector<8x8x64xf32> to vector<64x64xf32>
    %c0_178 = arith.constant 0 : index
    %c2_179 = arith.constant 2 : index
    %c0_180 = arith.constant 0 : index
    %132 = vector.load %arg7[%c0_178, %c2_179, %c0_180] : memref<10x10x64xf32, #tpu.memory_space<vmem>>, vector<8x8x64xf32>
    %133 = vector.shape_cast %132 : vector<8x8x64xf32> to vector<64x64xf32>
    %c1_181 = arith.constant 1 : index
    %c0_182 = arith.constant 0 : index
    %c0_183 = arith.constant 0 : index
    %134 = vector.load %arg7[%c1_181, %c0_182, %c0_183] : memref<10x10x64xf32, #tpu.memory_space<vmem>>, vector<8x8x64xf32>
    %135 = vector.shape_cast %134 : vector<8x8x64xf32> to vector<64x64xf32>
    %c1_184 = arith.constant 1 : index
    %c1_185 = arith.constant 1 : index
    %c0_186 = arith.constant 0 : index
    %136 = vector.load %arg7[%c1_184, %c1_185, %c0_186] : memref<10x10x64xf32, #tpu.memory_space<vmem>>, vector<8x8x64xf32>
    %137 = vector.shape_cast %136 : vector<8x8x64xf32> to vector<64x64xf32>
    %c1_187 = arith.constant 1 : index
    %c2_188 = arith.constant 2 : index
    %c0_189 = arith.constant 0 : index
    %138 = vector.load %arg7[%c1_187, %c2_188, %c0_189] : memref<10x10x64xf32, #tpu.memory_space<vmem>>, vector<8x8x64xf32>
    %139 = vector.shape_cast %138 : vector<8x8x64xf32> to vector<64x64xf32>
    %c2_190 = arith.constant 2 : index
    %c0_191 = arith.constant 0 : index
    %c0_192 = arith.constant 0 : index
    %140 = vector.load %arg7[%c2_190, %c0_191, %c0_192] : memref<10x10x64xf32, #tpu.memory_space<vmem>>, vector<8x8x64xf32>
    %141 = vector.shape_cast %140 : vector<8x8x64xf32> to vector<64x64xf32>
    %c2_193 = arith.constant 2 : index
    %c1_194 = arith.constant 1 : index
    %c0_195 = arith.constant 0 : index
    %142 = vector.load %arg7[%c2_193, %c1_194, %c0_195] : memref<10x10x64xf32, #tpu.memory_space<vmem>>, vector<8x8x64xf32>
    %143 = vector.shape_cast %142 : vector<8x8x64xf32> to vector<64x64xf32>
    %c2_196 = arith.constant 2 : index
    %c2_197 = arith.constant 2 : index
    %c0_198 = arith.constant 0 : index
    %144 = vector.load %arg7[%c2_196, %c2_197, %c0_198] : memref<10x10x64xf32, #tpu.memory_space<vmem>>, vector<8x8x64xf32>
    %145 = vector.shape_cast %144 : vector<8x8x64xf32> to vector<64x64xf32>
    %146 = tpu.concatenate %129, %131, %133, %135, %137, %139, %141, %143, %145 in 1 : vector<64x64xf32>, vector<64x64xf32>, vector<64x64xf32>, vector<64x64xf32>, vector<64x64xf32>, vector<64x64xf32>, vector<64x64xf32>, vector<64x64xf32>, vector<64x64xf32> -> vector<64x576xf32>
    %cst_199 = arith.constant dense<0.000000e+00> : vector<64x64xf32>
    %147 = tpu.matmul %146, %123, %cst_199 {dimension_numbers = #tpu.dot_dimension_numbers<[1], [0], [0], [1], [0, 0, 1, 1], [], []>} : vector<64x576xf32>, vector<576x64xf32>, vector<64x64xf32> -> vector<64x64xf32>
    %148 = vector.broadcast %125 : vector<1x64xf32> to vector<64x64xf32>
    %149 = arith.addf %147, %148 : vector<64x64xf32>
    %cst_200 = arith.constant 0.000000e+00 : f32
    %150 = vector.broadcast %cst_200 : f32 to vector<64x64xf32>
    %151 = arith.maximumf %149, %150 : vector<64x64xf32>
    %c2_201 = arith.constant 2 : index
    %c1_202 = arith.constant 1 : index
    %c0_203 = arith.constant 0 : index
    %c0_204 = arith.constant 0 : index
    %152 = vector.load %arg2[%c2_201, %c1_202, %c0_203, %c0_204] : memref<3x2x576x64xf32, #tpu.memory_space<vmem>>, vector<1x1x576x64xf32>
    %153 = vector.shape_cast %152 : vector<1x1x576x64xf32> to vector<576x64xf32>
    %c2_205 = arith.constant 2 : index
    %c1_206 = arith.constant 1 : index
    %c0_207 = arith.constant 0 : index
    %c0_208 = arith.constant 0 : index
    %154 = vector.load %arg3[%c2_205, %c1_206, %c0_207, %c0_208] : memref<3x2x1x64xf32, #tpu.memory_space<vmem>>, vector<1x1x1x64xf32>
    %155 = vector.shape_cast %154 : vector<1x1x1x64xf32> to vector<1x64xf32>
    %156 = vector.shape_cast %151 : vector<64x64xf32> to vector<8x8x64xf32>
    %c1_209 = arith.constant 1 : index
    %c1_210 = arith.constant 1 : index
    %c0_211 = arith.constant 0 : index
    %157 = vector.load %arg7[%c1_209, %c1_210, %c0_211] : memref<10x10x64xf32, #tpu.memory_space<vmem>>, vector<8x8x64xf32>
    tpu.vector_store %arg7[%c1_209, %c1_210, %c0_211], %156 {strides = array<i32>} : memref<10x10x64xf32, #tpu.memory_space<vmem>>, vector<8x8x64xf32>,
    %c0_212 = arith.constant 0 : index
    %c0_213 = arith.constant 0 : index
    %c0_214 = arith.constant 0 : index
    %158 = vector.load %arg7[%c0_212, %c0_213, %c0_214] : memref<10x10x64xf32, #tpu.memory_space<vmem>>, vector<8x8x64xf32>
    %159 = vector.shape_cast %158 : vector<8x8x64xf32> to vector<64x64xf32>
    %c0_215 = arith.constant 0 : index
    %c1_216 = arith.constant 1 : index
    %c0_217 = arith.constant 0 : index
    %160 = vector.load %arg7[%c0_215, %c1_216, %c0_217] : memref<10x10x64xf32, #tpu.memory_space<vmem>>, vector<8x8x64xf32>
    %161 = vector.shape_cast %160 : vector<8x8x64xf32> to vector<64x64xf32>
    %c0_218 = arith.constant 0 : index
    %c2_219 = arith.constant 2 : index
    %c0_220 = arith.constant 0 : index
    %162 = vector.load %arg7[%c0_218, %c2_219, %c0_220] : memref<10x10x64xf32, #tpu.memory_space<vmem>>, vector<8x8x64xf32>
    %163 = vector.shape_cast %162 : vector<8x8x64xf32> to vector<64x64xf32>
    %c1_221 = arith.constant 1 : index
    %c0_222 = arith.constant 0 : index
    %c0_223 = arith.constant 0 : index
    %164 = vector.load %arg7[%c1_221, %c0_222, %c0_223] : memref<10x10x64xf32, #tpu.memory_space<vmem>>, vector<8x8x64xf32>
    %165 = vector.shape_cast %164 : vector<8x8x64xf32> to vector<64x64xf32>
    %c1_224 = arith.constant 1 : index
    %c1_225 = arith.constant 1 : index
    %c0_226 = arith.constant 0 : index
    %166 = vector.load %arg7[%c1_224, %c1_225, %c0_226] : memref<10x10x64xf32, #tpu.memory_space<vmem>>, vector<8x8x64xf32>
    %167 = vector.shape_cast %166 : vector<8x8x64xf32> to vector<64x64xf32>
    %c1_227 = arith.constant 1 : index
    %c2_228 = arith.constant 2 : index
    %c0_229 = arith.constant 0 : index
    %168 = vector.load %arg7[%c1_227, %c2_228, %c0_229] : memref<10x10x64xf32, #tpu.memory_space<vmem>>, vector<8x8x64xf32>
    %169 = vector.shape_cast %168 : vector<8x8x64xf32> to vector<64x64xf32>
    %c2_230 = arith.constant 2 : index
    %c0_231 = arith.constant 0 : index
    %c0_232 = arith.constant 0 : index
    %170 = vector.load %arg7[%c2_230, %c0_231, %c0_232] : memref<10x10x64xf32, #tpu.memory_space<vmem>>, vector<8x8x64xf32>
    %171 = vector.shape_cast %170 : vector<8x8x64xf32> to vector<64x64xf32>
    %c2_233 = arith.constant 2 : index
    %c1_234 = arith.constant 1 : index
    %c0_235 = arith.constant 0 : index
    %172 = vector.load %arg7[%c2_233, %c1_234, %c0_235] : memref<10x10x64xf32, #tpu.memory_space<vmem>>, vector<8x8x64xf32>
    %173 = vector.shape_cast %172 : vector<8x8x64xf32> to vector<64x64xf32>
    %c2_236 = arith.constant 2 : index
    %c2_237 = arith.constant 2 : index
    %c0_238 = arith.constant 0 : index
    %174 = vector.load %arg7[%c2_236, %c2_237, %c0_238] : memref<10x10x64xf32, #tpu.memory_space<vmem>>, vector<8x8x64xf32>
    %175 = vector.shape_cast %174 : vector<8x8x64xf32> to vector<64x64xf32>
    %176 = tpu.concatenate %159, %161, %163, %165, %167, %169, %171, %173, %175 in 1 : vector<64x64xf32>, vector<64x64xf32>, vector<64x64xf32>, vector<64x64xf32>, vector<64x64xf32>, vector<64x64xf32>, vector<64x64xf32>, vector<64x64xf32>, vector<64x64xf32> -> vector<64x576xf32>
    %cst_239 = arith.constant dense<0.000000e+00> : vector<64x64xf32>
    %177 = tpu.matmul %176, %153, %cst_239 {dimension_numbers = #tpu.dot_dimension_numbers<[1], [0], [0], [1], [0, 0, 1, 1], [], []>} : vector<64x576xf32>, vector<576x64xf32>, vector<64x64xf32> -> vector<64x64xf32>
    %178 = vector.broadcast %155 : vector<1x64xf32> to vector<64x64xf32>
    %179 = arith.addf %177, %178 : vector<64x64xf32>
    %180 = arith.addf %121, %179 : vector<64x64xf32>
    %181 = arith.addf %180, %3 : vector<64x64xf32>
    %182 = vector.shape_cast %181 : vector<64x64xf32> to vector<8x8x64xf32>
    %c1_240 = arith.constant 1 : index
    %c1_241 = arith.constant 1 : index
    %c0_242 = arith.constant 0 : index
    %183 = vector.load %arg7[%c1_240, %c1_241, %c0_242] : memref<10x10x64xf32, #tpu.memory_space<vmem>>, vector<8x8x64xf32>
    tpu.vector_store %arg7[%c1_240, %c1_241, %c0_242], %182 {strides = array<i32>} : memref<10x10x64xf32, #tpu.memory_space<vmem>>, vector<8x8x64xf32>,
    %c0_243 = arith.constant 0 : index
    %c0_244 = arith.constant 0 : index
    %c0_245 = arith.constant 0 : index
    %184 = vector.load %arg7[%c0_243, %c0_244, %c0_245] : memref<10x10x64xf32, #tpu.memory_space<vmem>>, vector<8x8x64xf32>
    %185 = vector.shape_cast %184 : vector<8x8x64xf32> to vector<64x64xf32>
    %c0_246 = arith.constant 0 : index
    %c1_247 = arith.constant 1 : index
    %c0_248 = arith.constant 0 : index
    %186 = vector.load %arg7[%c0_246, %c1_247, %c0_248] : memref<10x10x64xf32, #tpu.memory_space<vmem>>, vector<8x8x64xf32>
    %187 = vector.shape_cast %186 : vector<8x8x64xf32> to vector<64x64xf32>
    %c0_249 = arith.constant 0 : index
    %c2_250 = arith.constant 2 : index
    %c0_251 = arith.constant 0 : index
    %188 = vector.load %arg7[%c0_249, %c2_250, %c0_251] : memref<10x10x64xf32, #tpu.memory_space<vmem>>, vector<8x8x64xf32>
    %189 = vector.shape_cast %188 : vector<8x8x64xf32> to vector<64x64xf32>
    %c1_252 = arith.constant 1 : index
    %c0_253 = arith.constant 0 : index
    %c0_254 = arith.constant 0 : index
    %190 = vector.load %arg7[%c1_252, %c0_253, %c0_254] : memref<10x10x64xf32, #tpu.memory_space<vmem>>, vector<8x8x64xf32>
    %191 = vector.shape_cast %190 : vector<8x8x64xf32> to vector<64x64xf32>
    %c1_255 = arith.constant 1 : index
    %c1_256 = arith.constant 1 : index
    %c0_257 = arith.constant 0 : index
    %192 = vector.load %arg7[%c1_255, %c1_256, %c0_257] : memref<10x10x64xf32, #tpu.memory_space<vmem>>, vector<8x8x64xf32>
    %193 = vector.shape_cast %192 : vector<8x8x64xf32> to vector<64x64xf32>
    %c1_258 = arith.constant 1 : index
    %c2_259 = arith.constant 2 : index
    %c0_260 = arith.constant 0 : index
    %194 = vector.load %arg7[%c1_258, %c2_259, %c0_260] : memref<10x10x64xf32, #tpu.memory_space<vmem>>, vector<8x8x64xf32>
    %195 = vector.shape_cast %194 : vector<8x8x64xf32> to vector<64x64xf32>
    %c2_261 = arith.constant 2 : index
    %c0_262 = arith.constant 0 : index
    %c0_263 = arith.constant 0 : index
    %196 = vector.load %arg7[%c2_261, %c0_262, %c0_263] : memref<10x10x64xf32, #tpu.memory_space<vmem>>, vector<8x8x64xf32>
    %197 = vector.shape_cast %196 : vector<8x8x64xf32> to vector<64x64xf32>
    %c2_264 = arith.constant 2 : index
    %c1_265 = arith.constant 1 : index
    %c0_266 = arith.constant 0 : index
    %198 = vector.load %arg7[%c2_264, %c1_265, %c0_266] : memref<10x10x64xf32, #tpu.memory_space<vmem>>, vector<8x8x64xf32>
    %199 = vector.shape_cast %198 : vector<8x8x64xf32> to vector<64x64xf32>
    %c2_267 = arith.constant 2 : index
    %c2_268 = arith.constant 2 : index
    %c0_269 = arith.constant 0 : index
    %200 = vector.load %arg7[%c2_267, %c2_268, %c0_269] : memref<10x10x64xf32, #tpu.memory_space<vmem>>, vector<8x8x64xf32>
    %201 = vector.shape_cast %200 : vector<8x8x64xf32> to vector<64x64xf32>
    %202 = tpu.concatenate %185, %187, %189, %191, %193, %195, %197, %199, %201 in 1 : vector<64x64xf32>, vector<64x64xf32>, vector<64x64xf32>, vector<64x64xf32>, vector<64x64xf32>, vector<64x64xf32>, vector<64x64xf32>, vector<64x64xf32>, vector<64x64xf32> -> vector<64x576xf32>
    %c0_270 = arith.constant 0 : index
    %c0_271 = arith.constant 0 : index
    %203 = vector.load %arg4[%c0_270, %c0_271] : memref<576x12xf32, #tpu.memory_space<vmem>>, vector<576x12xf32>
    %cst_272 = arith.constant dense<0.000000e+00> : vector<64x12xf32>
    %204 = tpu.matmul %202, %203, %cst_272 {dimension_numbers = #tpu.dot_dimension_numbers<[1], [0], [0], [1], [0, 0, 1, 1], [], []>} : vector<64x576xf32>, vector<576x12xf32>, vector<64x12xf32> -> vector<64x12xf32>
    %c0_273 = arith.constant 0 : index
    %c0_274 = arith.constant 0 : index
    %205 = vector.load %arg5[%c0_273, %c0_274] : memref<1x12xf32, #tpu.memory_space<vmem>>, vector<1x12xf32>
    %206 = vector.broadcast %205 : vector<1x12xf32> to vector<64x12xf32>
    %207 = arith.addf %204, %206 : vector<64x12xf32>
    %c0_275 = arith.constant 0 : index
    %c0_276 = arith.constant 0 : index
    %c0_277 = arith.constant 0 : index
    %208 = vector.load %arg6[%c0_275, %c0_276, %c0_277] : memref<1x64x12xf32, #tpu.memory_space<vmem>>, vector<1x64x12xf32>
    %209 = vector.shape_cast %208 : vector<1x64x12xf32> to vector<64x12xf32>
    %210 = vector.shape_cast %207 : vector<64x12xf32> to vector<1x64x12xf32>
    tpu.vector_store %arg6[%c0_275, %c0_276, %c0_277], %210 {strides = array<i32>} : memref<1x64x12xf32, #tpu.memory_space<vmem>>, vector<1x64x12xf32>,
    return
  }
  func.func @transform_0(%arg0: i32) -> (i32, i32, i32) {
    %c0_i32 = arith.constant 0 : i32
    %c0_i32_0 = arith.constant 0 : i32
    %c0_i32_1 = arith.constant 0 : i32
    return %arg0, %c0_i32, %c0_i32_0 : i32, i32, i32
  }
  func.func @transform_1(%arg0: i32) -> (i32, i32, i32, i32) {
    %c0_i32 = arith.constant 0 : i32
    %c0_i32_0 = arith.constant 0 : i32
    %c0_i32_1 = arith.constant 0 : i32
    %c0_i32_2 = arith.constant 0 : i32
    %c0_i32_3 = arith.constant 0 : i32
    return %c0_i32, %c0_i32_0, %c0_i32_1, %c0_i32_2 : i32, i32, i32, i32
  }
  func.func @transform_2(%arg0: i32) -> (i32, i32, i32, i32) {
    %c0_i32 = arith.constant 0 : i32
    %c0_i32_0 = arith.constant 0 : i32
    %c0_i32_1 = arith.constant 0 : i32
    %c0_i32_2 = arith.constant 0 : i32
    %c0_i32_3 = arith.constant 0 : i32
    return %c0_i32, %c0_i32_0, %c0_i32_1, %c0_i32_2 : i32, i32, i32, i32
  }
  func.func @transform_3(%arg0: i32) -> (i32, i32) {
    %c0_i32 = arith.constant 0 : i32
    %c0_i32_0 = arith.constant 0 : i32
    %c0_i32_1 = arith.constant 0 : i32
    return %c0_i32, %c0_i32_0 : i32, i32
  }
  func.func @transform_4(%arg0: i32) -> (i32, i32) {
    %c0_i32 = arith.constant 0 : i32
    %c0_i32_0 = arith.constant 0 : i32
    %c0_i32_1 = arith.constant 0 : i32
    return %c0_i32, %c0_i32_0 : i32, i32
  }
  func.func @transform_5(%arg0: i32) -> (i32, i32, i32) {
    %c0_i32 = arith.constant 0 : i32
    %c0_i32_0 = arith.constant 0 : i32
    %c0_i32_1 = arith.constant 0 : i32
    return %arg0, %c0_i32, %c0_i32_0 : i32, i32, i32
  }
}

</mosaic_0001>

<llo_original>
// kernel: tile.8
$region0: #{tile.8}
  #allocation0 [shape = 's32[1]{0}', space=sflag, size = 0x4, scoped, tag = 'scoped memory for tile.8']
  %s0 = inlined_call_operand.vmem [shape: f32[3], index: 0, kind: input, shape index: {}]
  %s1 = inlined_call_operand.vmem [shape: f32[4,3], index: 1, kind: output, shape index: {}]
  // Predicated region
  $region2: #{tile.8} parent=0 // pred_check
    _
  $region3: #{tile.8} parent=0 // pred_check_branch
    %3 = sbr.rel (0) target = $region5
  $region4: #{tile.8} parent=0 // pred_region
    _
  $region5: #{tile.8} parent=0 // pred_fallthru
    _
  %v4 = vld [vmem:[%s0] ss:$0 sm:$0xff]
  %5 = vst [vmem:[%s1] sm:$0xf] %v4

// kernel: tile.9
$region0: #{tile.9}
  %s0 = inlined_call_operand.vmem [shape: f32[4,3], index: 0, kind: input, shape index: {}]
  %s1 = inlined_call_operand.vmem [shape: f32[1,12], index: 1, kind: output, shape index: {}]
  $region1: #{tile.9} parent=0
    #allocation0 [shape = 'u8[4096]{0}', space=vmem, size = 0x1000, scoped, tag = 'scoped mem for output reshape']
    #allocation1 [shape = 'u8[4096]{0}', space=vmem, size = 0x1000, scoped, tag = 'scoped mem for input reshape']
    %s3 = sshllo.u32 0, 4
    %v4 = vld [vmem:[%s0] sm:%s3]
    %5 = vst [vmem:[#allocation1] sm:%s3] %v4
    %v6 = vld [vmem:[#allocation1] sm:$0x1]
    %vm7 = vcmask 23552
    %8 = vst.msk [vmem:[#allocation0] sm:$0x1] %vm7, %v6
    %s9 = scalar_lea.vmem [#allocation1], 3
    %v10 = vld [vmem:[%s9] sm:$0x1]
    %11 = vrot.lane.b32.xlu0 %v10, 9
    %v12 = vpop.permute.xlu0 %11
    %vm13 = vcmask 97352
    %14 = vst.msk [vmem:[#allocation0] sm:$0x1] %vm13, %v12
    %s15 = scalar_lea.vmem [#allocation1], 2
    %v16 = vld [vmem:[%s15] sm:$0x1]
    %17 = vrot.lane.b32.xlu0 %v16, 6
    %v18 = vpop.permute.xlu0 %17
    %vm19 = vcmask 72752
    %20 = vst.msk [vmem:[#allocation0] sm:$0x1] %vm19, %v18
    %s21 = scalar_lea.vmem [#allocation1], 1
    %v22 = vld [vmem:[%s21] sm:$0x1]
    %23 = vrot.lane.b32.xlu0 %v22, 3
    %v24 = vpop.permute.xlu0 %23
    %vm25 = vcmask 48152
    %26 = vst.msk [vmem:[#allocation0] sm:$0x1] %vm25, %v24
    %s28 = sshllo.u32 0, 1
    %v30 = vld [vmem:[#allocation0] sm:%s28]
    %s31 = sshllo.u32 0, 1
    %32 = vst [vmem:[%s1] sm:%s31] %v30

// kernel: feature_reconsnet_apply.1
$region0: #{feature_reconsnet_apply.1}
  #allocation0 [shape = 'u32[]', space=smem, size = 0x4, offset = 0x4, fixed_abs, tag = 'smem constant byte address 0x4 - core index']
  #allocation1 [shape = 'u32[144,128]{1,0:T(1,128)}', space=vmem, size = 0x12000, scoped, tag = 'internal scratch']
  #allocation2 [shape = 'f32[10,10,64]{2,1,0:T(8,128)}', space=vmem, size = 0x14000, scoped, tag = 'scratch operand']
  %s0 = inlined_call_operand.vmem [shape: f32[2,64,64], index: 0, kind: input, shape index: {}]
  %s1 = inlined_call_operand.vmem [shape: f32[3,2,576,64], index: 1, kind: input, shape index: {}]
  %s2 = inlined_call_operand.vmem [shape: f32[3,2,1,64], index: 2, kind: input, shape index: {}]
  %s3 = inlined_call_operand.vmem [shape: f32[576,12], index: 3, kind: input, shape index: {}]
  %s4 = inlined_call_operand.vmem [shape: f32[1,12], index: 4, kind: input, shape index: {}]
  %s5 = inlined_call_operand.vmem [shape: f32[2,64,12], index: 5, kind: output, shape index: {}]
  %s6 = sld [smem:[#allocation0]]
  $region53: #{feature_reconsnet_apply.1} parent=0
    _
  %s8 = ssub.s32 1, %s6
  %s9 = scalar_select 0, %s8, %s6
  loop: start=0, step=1, limit=4
  $region2: #{feature_reconsnet_apply.1} parent=0 // loop_pre_header
    _
  $region3: #{feature_reconsnet_apply.1} parent=0 // loop_header
    %s11 = sphi 0, %s15
    %p12 = scmp.ge.s32.totalorder %s11, 4
    %s21 = sphi 0, %s23
    %s24 = sphi 0, %s21
    %s25 = sphi 0, %s24
    %s41 = sphi 0, %s25
    %s45 = sphi 0, %s45
    %s47 = sphi 0, %s45
    %s48 = sphi 0, %s47
    %s62 = sphi 0, %s48
    %s66 = sphi 0, %s66
    %s68 = sphi 0, %s66
    %s69 = sphi 0, %s68
    %s83 = sphi 0, %s69
    %s87 = sphi 0, %s87
    %s89 = sphi 0, %s87
    %s90 = sphi 0, %s89
    %s104 = sphi 0, %s90
    %s108 = sphi 0, %s108
    %s110 = sphi 0, %s108
    %s111 = sphi 0, %s110
    %s125 = sphi 0, %s111
    %s131 = sphi 0, %s133
    %s134 = sphi 0, %s131
    %s135 = sphi 0, %s134
    %s151 = sphi 0, %s135
  $region4: #{feature_reconsnet_apply.1} parent=0 // loop_header_branch
    %14 = sbr.rel (%p12) target = $region8
  $region5: #{feature_reconsnet_apply.1} parent=0 // loop_body
    %s16 = ssub.s32 %s11, 1
    %s17 = ssub.s32 %s11, 2
    %s18 = sadd.s32 %s11, 1
    %s19 = ssub.s32 %s11, %s18
    %p20 = scmp.eq.s32.totalorder %s19, 0
    %s22 = sadd.s32 %s21, 1
    %s23 = scalar_select %p20, %s21, %s22
    %p26 = pneg %p20
    %p27 = scmp.eq.s32.totalorder %s11, 1
    %p28 = por %p26, %p27
    %p29 = scmp.ne.s32.totalorder %s21, %s24
    %p30 = scmp.eq.s32.totalorder %s11, 0
    %p31 = por %p29, %p30
    %p32 = scmp.ne.s32.totalorder %s21, %s24
    %p33 = scmp.eq.s32.totalorder %s16, 1
    %p34 = por %p32, %p33
    %p35 = scmp.ne.s32.totalorder %s24, %s25
    %p36 = scmp.eq.s32.totalorder %s16, 0
    %p37 = por %p35, %p36
    %p38 = scmp.ne.s32.totalorder %s24, %s25
    %p39 = scmp.eq.s32.totalorder %s17, 1
    %p40 = por %p38, %p39
    %p42 = scmp.ne.s32.totalorder %s25, %s41
    %p43 = scmp.eq.s32.totalorder %s17, 0
    %p44 = por %p42, %p43
    %s46 = sadd.s32 %s45, 1
    %p49 = scmp.eq.s32.totalorder %s11, 1
    %p50 = scmp.ne.s32.totalorder %s45, %s47
    %p51 = scmp.eq.s32.totalorder %s11, 0
    %p52 = por %p50, %p51
    %p53 = scmp.ne.s32.totalorder %s45, %s47
    %p54 = scmp.eq.s32.totalorder %s16, 1
    %p55 = por %p53, %p54
    %p56 = scmp.ne.s32.totalorder %s47, %s48
    %p57 = scmp.eq.s32.totalorder %s16, 0
    %p58 = por %p56, %p57
    %p59 = scmp.ne.s32.totalorder %s47, %s48
    %p60 = scmp.eq.s32.totalorder %s17, 1
    %p61 = por %p59, %p60
    %p63 = scmp.ne.s32.totalorder %s48, %s62
    %p64 = scmp.eq.s32.totalorder %s17, 0
    %p65 = por %p63, %p64
    %s67 = sadd.s32 %s66, 1
    %p70 = scmp.eq.s32.totalorder %s11, 1
    %p71 = scmp.ne.s32.totalorder %s66, %s68
    %p72 = scmp.eq.s32.totalorder %s11, 0
    %p73 = por %p71, %p72
    %p74 = scmp.ne.s32.totalorder %s66, %s68
    %p75 = scmp.eq.s32.totalorder %s16, 1
    %p76 = por %p74, %p75
    %p77 = scmp.ne.s32.totalorder %s68, %s69
    %p78 = scmp.eq.s32.totalorder %s16, 0
    %p79 = por %p77, %p78
    %p80 = scmp.ne.s32.totalorder %s68, %s69
    %p81 = scmp.eq.s32.totalorder %s17, 1
    %p82 = por %p80, %p81
    %p84 = scmp.ne.s32.totalorder %s69, %s83
    %p85 = scmp.eq.s32.totalorder %s17, 0
    %p86 = por %p84, %p85
    %s88 = sadd.s32 %s87, 1
    %p91 = scmp.eq.s32.totalorder %s11, 1
    %p92 = scmp.ne.s32.totalorder %s87, %s89
    %p93 = scmp.eq.s32.totalorder %s11, 0
    %p94 = por %p92, %p93
    %p95 = scmp.ne.s32.totalorder %s87, %s89
    %p96 = scmp.eq.s32.totalorder %s16, 1
    %p97 = por %p95, %p96
    %p98 = scmp.ne.s32.totalorder %s89, %s90
    %p99 = scmp.eq.s32.totalorder %s16, 0
    %p100 = por %p98, %p99
    %p101 = scmp.ne.s32.totalorder %s89, %s90
    %p102 = scmp.eq.s32.totalorder %s17, 1
    %p103 = por %p101, %p102
    %p105 = scmp.ne.s32.totalorder %s90, %s104
    %p106 = scmp.eq.s32.totalorder %s17, 0
    %p107 = por %p105, %p106
    %s109 = sadd.s32 %s108, 1
    %p112 = scmp.eq.s32.totalorder %s11, 1
    %p113 = scmp.ne.s32.totalorder %s108, %s110
    %p114 = scmp.eq.s32.totalorder %s11, 0
    %p115 = por %p113, %p114
    %p116 = scmp.ne.s32.totalorder %s108, %s110
    %p117 = scmp.eq.s32.totalorder %s16, 1
    %p118 = por %p116, %p117
    %p119 = scmp.ne.s32.totalorder %s110, %s111
    %p120 = scmp.eq.s32.totalorder %s16, 0
    %p121 = por %p119, %p120
    %p122 = scmp.ne.s32.totalorder %s110, %s111
    %p123 = scmp.eq.s32.totalorder %s17, 1
    %p124 = por %p122, %p123
    %p126 = scmp.ne.s32.totalorder %s111, %s125
    %p127 = scmp.eq.s32.totalorder %s17, 0
    %p128 = por %p126, %p127
    %s129 = ssub.s32 %s11, %s18
    %p130 = scmp.eq.s32.totalorder %s129, 0
    %s132 = sadd.s32 %s131, 1
    %s133 = scalar_select %p130, %s131, %s132
    %p136 = pneg %p130
    %p137 = scmp.eq.s32.totalorder %s11, 1
    %p138 = por %p136, %p137
    %p139 = scmp.ne.s32.totalorder %s131, %s134
    %p140 = scmp.eq.s32.totalorder %s11, 0
    %p141 = por %p139, %p140
    %p142 = scmp.ne.s32.totalorder %s131, %s134
    %p143 = scmp.eq.s32.totalorder %s16, 1
    %p144 = por %p142, %p143
    %p145 = scmp.ne.s32.totalorder %s134, %s135
    %p146 = scmp.eq.s32.totalorder %s16, 0
    %p147 = por %p145, %p146
    %p148 = scmp.ne.s32.totalorder %s134, %s135
    %p149 = scmp.eq.s32.totalorder %s17, 1
    %p150 = por %p148, %p149
    %p152 = scmp.ne.s32.totalorder %s135, %s151
    %p153 = scmp.eq.s32.totalorder %s17, 0
    %p154 = por %p152, %p153
    %p155 = scmp.le.s32.totalorder 1, %s11
    %p156 = scmp.lt.s32.totalorder %s11, 3
    %p157 = pnand %p155, %p156
    %p158 = pneg %p157
    // Predicated region
    $region9: #{feature_reconsnet_apply.1} parent=5 // pred_check
      _
    $region10: #{feature_reconsnet_apply.1} parent=5 // pred_check_branch
      %160 = sbr.rel (%p157) target = $region12
    $region11: #{feature_reconsnet_apply.1} parent=5 // pred_region
      %s161 = ssub.s32 %s11, 1
      // Predicated region
      $region13: #{feature_reconsnet_apply.1} parent=11 // pred_check
        %p162 = pneg %p58
      $region14: #{feature_reconsnet_apply.1} parent=11 // pred_check_branch
        %164 = sbr.rel (%p162) target = $region16
      $region15: #{feature_reconsnet_apply.1} parent=11 // pred_region
        _
      $region16: #{feature_reconsnet_apply.1} parent=11 // pred_fallthru
        _
      // Predicated region
      $region17: #{feature_reconsnet_apply.1} parent=11 // pred_check
        %p165 = pneg %p79
      $region18: #{feature_reconsnet_apply.1} parent=11 // pred_check_branch
        %167 = sbr.rel (%p165) target = $region20
      $region19: #{feature_reconsnet_apply.1} parent=11 // pred_region
        _
      $region20: #{feature_reconsnet_apply.1} parent=11 // pred_fallthru
        _
      // Predicated region
      $region21: #{feature_reconsnet_apply.1} parent=11 // pred_check
        %p168 = pneg %p100
      $region22: #{feature_reconsnet_apply.1} parent=11 // pred_check_branch
        %170 = sbr.rel (%p168) target = $region24
      $region23: #{feature_reconsnet_apply.1} parent=11 // pred_region
        _
      $region24: #{feature_reconsnet_apply.1} parent=11 // pred_fallthru
        _
      // Predicated region
      $region25: #{feature_reconsnet_apply.1} parent=11 // pred_check
        %p171 = pneg %p121
      $region26: #{feature_reconsnet_apply.1} parent=11 // pred_check_branch
        %173 = sbr.rel (%p171) target = $region28
      $region27: #{feature_reconsnet_apply.1} parent=11 // pred_region
        _
      $region28: #{feature_reconsnet_apply.1} parent=11 // pred_fallthru
        _
    $region12: #{feature_reconsnet_apply.1} parent=5 // pred_fallthru
      _
    %p174 = scmp.lt.s32.totalorder %s11, 2
    // Predicated region
    $region29: #{feature_reconsnet_apply.1} parent=5 // pred_check
      %p175 = pneg %p174
    $region30: #{feature_reconsnet_apply.1} parent=5 // pred_check_branch
      %177 = sbr.rel (%p175) target = $region32
    $region31: #{feature_reconsnet_apply.1} parent=5 // pred_region
      // Predicated region
      $region33: #{feature_reconsnet_apply.1} parent=31 // pred_check
        %p178 = pneg %p31
      $region34: #{feature_reconsnet_apply.1} parent=31 // pred_check_branch
        %180 = sbr.rel (%p178) target = $region36
      $region35: #{feature_reconsnet_apply.1} parent=31 // pred_region
        %p181 = scmp.lt.s32.totalorder %s11, 1
        %s182 = scalar_select %p181, %s11, 1
        %s183 = smul.addr %s182, 8
        %s184 = smul.addr %s183, 8
        %s185 = scalar_lea.vmem %s0, %s184
      $region36: #{feature_reconsnet_apply.1} parent=31 // pred_fallthru
        _
    $region32: #{feature_reconsnet_apply.1} parent=5 // pred_fallthru
      _
    %p186 = scmp.le.s32.totalorder 1, %s11
    %p187 = scmp.lt.s32.totalorder %s11, 3
    %p188 = pnand %p186, %p187
    %p189 = pneg %p188
    // Predicated region
    $region37: #{feature_reconsnet_apply.1} parent=5 // pred_check
      _
    $region38: #{feature_reconsnet_apply.1} parent=5 // pred_check_branch
      %191 = sbr.rel (%p188) target = $region40
    $region39: #{feature_reconsnet_apply.1} parent=5 // pred_region
      %s192 = ssub.s32 %s11, 1
      %p193 = scmp.lt.s32.totalorder %s16, 1
      %s194 = scalar_select %p193, %s16, 1
      %s195 = smul.addr %s194, 8
      %s196 = smul.addr %s195, 8
      %s197 = scalar_lea.vmem %s0, %s196
      %p198 = pneg %p37
      %p199 = pneg %p34
      %p200 = pneg %p58
      %p201 = pneg %p55
      %p202 = pneg %p79
      %p203 = pneg %p76
      %p204 = pneg %p100
      %p205 = pneg %p97
      %p206 = pneg %p121
      %p207 = pneg %p118
      %p208 = pneg %p147
      %p209 = pneg %p144
      %p210 = scmp.lt.s32.totalorder %s16, 1
      %s211 = scalar_select %p210, %s16, 1
      %s212 = smul.addr %s211, 8
      %s213 = smul.addr %s212, 8
      %s214 = scalar_lea.vmem %s5, %s213
      %p215 = scmp.lt.s32.totalorder %s16, 1
      %s216 = scalar_select %p215, %s16, 1
      %s217 = smul.addr %s216, 8
      %s218 = smul.addr %s217, 8
      %s219 = scalar_lea.vmem %s0, %s218
      %p220 = scmp.lt.s32.totalorder %s16, 1
      %s221 = scalar_select %p220, %s16, 1
      %s222 = smul.addr %s221, 8
      %s223 = smul.addr %s222, 8
      %s224 = scalar_lea.vmem %s5, %s223
      %vm225 = vcmask 523264
      %226 = vst.msk [vmem:[#allocation2] sm:$0xff] %vm225, 0.0
      %vm227 = vcmask 517120
      %228 = vst.msk [vmem:[#allocation2 + $0x8] sm:$0x3] %vm227, 0.0
      %229 = vst.msk [vmem:[#allocation2 + $0x10] sm:$0xff] %vm225, 0.0
      %230 = vst.msk [vmem:[#allocation2 + $0x18] sm:$0x3] %vm227, 0.0
      %231 = vst.msk [vmem:[#allocation2 + $0x20] sm:$0xff] %vm225, 0.0
      %232 = vst.msk [vmem:[#allocation2 + $0x28] sm:$0x3] %vm227, 0.0
      %233 = vst.msk [vmem:[#allocation2 + $0x30] sm:$0xff] %vm225, 0.0
      %234 = vst.msk [vmem:[#allocation2 + $0x38] sm:$0x3] %vm227, 0.0
      %235 = vst.msk [vmem:[#allocation2 + $0x40] sm:$0xff] %vm225, 0.0
      %236 = vst.msk [vmem:[#allocation2 + $0x48] sm:$0x3] %vm227, 0.0
      %237 = vst.msk [vmem:[#allocation2 + $0x50] sm:$0xff] %vm225, 0.0
      %238 = vst.msk [vmem:[#allocation2 + $0x58] sm:$0x3] %vm227, 0.0
      %239 = vst.msk [vmem:[#allocation2 + $0x60] sm:$0xff] %vm225, 0.0
      %240 = vst.msk [vmem:[#allocation2 + $0x68] sm:$0x3] %vm227, 0.0
      %241 = vst.msk [vmem:[#allocation2 + $0x70] sm:$0xff] %vm225, 0.0
      %242 = vst.msk [vmem:[#allocation2 + $0x78] sm:$0x3] %vm227, 0.0
      %243 = vst.msk [vmem:[#allocation2 + $0x80] sm:$0xff] %vm225, 0.0
      %244 = vst.msk [vmem:[#allocation2 + $0x88] sm:$0x3] %vm227, 0.0
      %245 = vst.msk [vmem:[#allocation2 + $0x90] sm:$0xff] %vm225, 0.0
      %246 = vst.msk [vmem:[#allocation2 + $0x98] sm:$0x3] %vm227, 0.0
      %v247 = vld [vmem:[%s219] sm:$0xff]
      %v248 = vld [vmem:[%s219 + $0x8] sm:$0xff]
      %v249 = vld [vmem:[%s219 + $0x10] sm:$0xff]
      %v250 = vld [vmem:[%s219 + $0x18] sm:$0xff]
      %v251 = vld [vmem:[%s219 + $0x20] sm:$0xff]
      %v252 = vld [vmem:[%s219 + $0x28] sm:$0xff]
      %v253 = vld [vmem:[%s219 + $0x30] sm:$0xff]
      %v254 = vld [vmem:[%s219 + $0x38] sm:$0xff]
      %v255 = vld [vmem:[%s1] sm:$0xff]
      %v256 = vld [vmem:[%s1 + $0x8] sm:$0xff]
      %v257 = vld [vmem:[%s1 + $0x10] sm:$0xff]
      %v258 = vld [vmem:[%s1 + $0x18] sm:$0xff]
      %v259 = vld [vmem:[%s1 + $0x20] sm:$0xff]
      %v260 = vld [vmem:[%s1 + $0x28] sm:$0xff]
      %v261 = vld [vmem:[%s1 + $0x30] sm:$0xff]
      %v262 = vld [vmem:[%s1 + $0x38] sm:$0xff]
      %v263 = vld [vmem:[%s1 + $0x40] sm:$0xff]
      %v264 = vld [vmem:[%s1 + $0x48] sm:$0xff]
      %v265 = vld [vmem:[%s1 + $0x50] sm:$0xff]
      %v266 = vld [vmem:[%s1 + $0x58] sm:$0xff]
      %v267 = vld [vmem:[%s1 + $0x60] sm:$0xff]
      %v268 = vld [vmem:[%s1 + $0x68] sm:$0xff]
      %v269 = vld [vmem:[%s1 + $0x70] sm:$0xff]
      %v270 = vld [vmem:[%s1 + $0x78] sm:$0xff]
      %v271 = vld [vmem:[%s1 + $0x80] sm:$0xff]
      %v272 = vld [vmem:[%s1 + $0x88] sm:$0xff]
      %v273 = vld [vmem:[%s1 + $0x90] sm:$0xff]
      %v274 = vld [vmem:[%s1 + $0x98] sm:$0xff]
      %v275 = vld [vmem:[%s1 + $0xa0] sm:$0xff]
      %v276 = vld [vmem:[%s1 + $0xa8] sm:$0xff]
      %v277 = vld [vmem:[%s1 + $0xb0] sm:$0xff]
      %v278 = vld [vmem:[%s1 + $0xb8] sm:$0xff]
      %v279 = vld [vmem:[%s1 + $0xc0] sm:$0xff]
      %v280 = vld [vmem:[%s1 + $0xc8] sm:$0xff]
      %v281 = vld [vmem:[%s1 + $0xd0] sm:$0xff]
      %v282 = vld [vmem:[%s1 + $0xd8] sm:$0xff]
      %v283 = vld [vmem:[%s1 + $0xe0] sm:$0xff]
      %v284 = vld [vmem:[%s1 + $0xe8] sm:$0xff]
      %v285 = vld [vmem:[%s1 + $0xf0] sm:$0xff]
      %v286 = vld [vmem:[%s1 + $0xf8] sm:$0xff]
      %v287 = vld [vmem:[%s1 + $0x100] sm:$0xff]
      %v288 = vld [vmem:[%s1 + $0x108] sm:$0xff]
      %v289 = vld [vmem:[%s1 + $0x110] sm:$0xff]
      %v290 = vld [vmem:[%s1 + $0x118] sm:$0xff]
      %v291 = vld [vmem:[%s1 + $0x120] sm:$0xff]
      %v292 = vld [vmem:[%s1 + $0x128] sm:$0xff]
      %v293 = vld [vmem:[%s1 + $0x130] sm:$0xff]
      %v294 = vld [vmem:[%s1 + $0x138] sm:$0xff]
      %v295 = vld [vmem:[%s1 + $0x140] sm:$0xff]
      %v296 = vld [vmem:[%s1 + $0x148] sm:$0xff]
      %v297 = vld [vmem:[%s1 + $0x150] sm:$0xff]
      %v298 = vld [vmem:[%s1 + $0x158] sm:$0xff]
      %v299 = vld [vmem:[%s1 + $0x160] sm:$0xff]
      %v300 = vld [vmem:[%s1 + $0x168] sm:$0xff]
      %v301 = vld [vmem:[%s1 + $0x170] sm:$0xff]
      %v302 = vld [vmem:[%s1 + $0x178] sm:$0xff]
      %v303 = vld [vmem:[%s1 + $0x180] sm:$0xff]
      %v304 = vld [vmem:[%s1 + $0x188] sm:$0xff]
      %v305 = vld [vmem:[%s1 + $0x190] sm:$0xff]
      %v306 = vld [vmem:[%s1 + $0x198] sm:$0xff]
      %v307 = vld [vmem:[%s1 + $0x1a0] sm:$0xff]
      %v308 = vld [vmem:[%s1 + $0x1a8] sm:$0xff]
      %v309 = vld [vmem:[%s1 + $0x1b0] sm:$0xff]
      %v310 = vld [vmem:[%s1 + $0x1b8] sm:$0xff]
      %v311 = vld [vmem:[%s1 + $0x1c0] sm:$0xff]
      %v312 = vld [vmem:[%s1 + $0x1c8] sm:$0xff]
      %v313 = vld [vmem:[%s1 + $0x1d0] sm:$0xff]
      %v314 = vld [vmem:[%s1 + $0x1d8] sm:$0xff]
      %v315 = vld [vmem:[%s1 + $0x1e0] sm:$0xff]
      %v316 = vld [vmem:[%s1 + $0x1e8] sm:$0xff]
      %v317 = vld [vmem:[%s1 + $0x1f0] sm:$0xff]
      %v318 = vld [vmem:[%s1 + $0x1f8] sm:$0xff]
      %v319 = vld [vmem:[%s1 + $0x200] sm:$0xff]
      %v320 = vld [vmem:[%s1 + $0x208] sm:$0xff]
      %v321 = vld [vmem:[%s1 + $0x210] sm:$0xff]
      %v322 = vld [vmem:[%s1 + $0x218] sm:$0xff]
      %v323 = vld [vmem:[%s1 + $0x220] sm:$0xff]
      %v324 = vld [vmem:[%s1 + $0x228] sm:$0xff]
      %v325 = vld [vmem:[%s1 + $0x230] sm:$0xff]
      %v326 = vld [vmem:[%s1 + $0x238] sm:$0xff]
      %v327 = vld [vmem:[%s2] sm:$0x1]
      %s328 = scalar_lea.vmem [#allocation2], 16
      %329 = vst.msk [vmem:[%s328 + $0x1] sm:$0xff] %vm225, %v247
      %330 = vst.msk [vmem:[%s328 + $0x11] sm:$0xff] %vm225, %v248
      %331 = vst.msk [vmem:[%s328 + $0x21] sm:$0xff] %vm225, %v249
      %332 = vst.msk [vmem:[%s328 + $0x31] sm:$0xff] %vm225, %v250
      %333 = vst.msk [vmem:[%s328 + $0x41] sm:$0xff] %vm225, %v251
      %334 = vst.msk [vmem:[%s328 + $0x51] sm:$0xff] %vm225, %v252
      %335 = vst.msk [vmem:[%s328 + $0x61] sm:$0xff] %vm225, %v253
      %336 = vst.msk [vmem:[%s328 + $0x71] sm:$0xff] %vm225, %v254
      %v337 = vld [vmem:[#allocation2] sm:$0xff]
      %v338 = vld [vmem:[#allocation2 + $0x10] sm:$0xff]
      %v339 = vld [vmem:[#allocation2 + $0x20] sm:$0xff]
      %v340 = vld [vmem:[#allocation2 + $0x30] sm:$0xff]
      %v341 = vld [vmem:[#allocation2 + $0x40] sm:$0xff]
      %v342 = vld [vmem:[#allocation2 + $0x50] sm:$0xff]
      %v343 = vld [vmem:[#allocation2 + $0x60] sm:$0xff]
      %v344 = vld [vmem:[#allocation2 + $0x70] sm:$0xff]
      %v345 = vld [vmem:[#allocation2 + $0x1] sm:$0xff]
      %v346 = vld [vmem:[#allocation2 + $0x11] sm:$0xff]
      %v347 = vld [vmem:[#allocation2 + $0x21] sm:$0xff]
      %v348 = vld [vmem:[#allocation2 + $0x31] sm:$0xff]
      %v349 = vld [vmem:[#allocation2 + $0x41] sm:$0xff]
      %v350 = vld [vmem:[#allocation2 + $0x51] sm:$0xff]
      %v351 = vld [vmem:[#allocation2 + $0x61] sm:$0xff]
      %v352 = vld [vmem:[#allocation2 + $0x71] sm:$0xff]
      %v353 = vld [vmem:[#allocation2 + $0x2] sm:$0xff]
      %v354 = vld [vmem:[#allocation2 + $0x12] sm:$0xff]
      %v355 = vld [vmem:[#allocation2 + $0x22] sm:$0xff]
      %v356 = vld [vmem:[#allocation2 + $0x32] sm:$0xff]
      %v357 = vld [vmem:[#allocation2 + $0x42] sm:$0xff]
      %v358 = vld [vmem:[#allocation2 + $0x52] sm:$0xff]
      %v359 = vld [vmem:[#allocation2 + $0x62] sm:$0xff]
      %v360 = vld [vmem:[#allocation2 + $0x72] sm:$0xff]
      %v361 = vld [vmem:[%s328] sm:$0xff]
      %v362 = vld [vmem:[%s328 + $0x10] sm:$0xff]
      %v363 = vld [vmem:[%s328 + $0x20] sm:$0xff]
      %v364 = vld [vmem:[%s328 + $0x30] sm:$0xff]
      %v365 = vld [vmem:[%s328 + $0x40] sm:$0xff]
      %v366 = vld [vmem:[%s328 + $0x50] sm:$0xff]
      %v367 = vld [vmem:[%s328 + $0x60] sm:$0xff]
      %v368 = vld [vmem:[%s328 + $0x70] sm:$0xff]
      %v369 = vld [vmem:[%s328 + $0x1] sm:$0xff]
      %v370 = vld [vmem:[%s328 + $0x11] sm:$0xff]
      %v371 = vld [vmem:[%s328 + $0x21] sm:$0xff]
      %v372 = vld [vmem:[%s328 + $0x31] sm:$0xff]
      %v373 = vld [vmem:[%s328 + $0x41] sm:$0xff]
      %v374 = vld [vmem:[%s328 + $0x51] sm:$0xff]
      %v375 = vld [vmem:[%s328 + $0x61] sm:$0xff]
      %v376 = vld [vmem:[%s328 + $0x71] sm:$0xff]
      %v377 = vld [vmem:[%s328 + $0x2] sm:$0xff]
      %v378 = vld [vmem:[%s328 + $0x12] sm:$0xff]
      %v379 = vld [vmem:[%s328 + $0x22] sm:$0xff]
      %v380 = vld [vmem:[%s328 + $0x32] sm:$0xff]
      %v381 = vld [vmem:[%s328 + $0x42] sm:$0xff]
      %v382 = vld [vmem:[%s328 + $0x52] sm:$0xff]
      %v383 = vld [vmem:[%s328 + $0x62] sm:$0xff]
      %v384 = vld [vmem:[%s328 + $0x72] sm:$0xff]
      %s385 = scalar_lea.vmem [#allocation2], 32
      %v386 = vld [vmem:[%s385] sm:$0xff]
      %v387 = vld [vmem:[%s385 + $0x10] sm:$0xff]
      %v388 = vld [vmem:[%s385 + $0x20] sm:$0xff]
      %v389 = vld [vmem:[%s385 + $0x30] sm:$0xff]
      %v390 = vld [vmem:[%s385 + $0x40] sm:$0xff]
      %v391 = vld [vmem:[%s385 + $0x50] sm:$0xff]
      %v392 = vld [vmem:[%s385 + $0x60] sm:$0xff]
      %v393 = vld [vmem:[%s385 + $0x70] sm:$0xff]
      %v394 = vld [vmem:[%s385 + $0x1] sm:$0xff]
      %v395 = vld [vmem:[%s385 + $0x11] sm:$0xff]
      %v396 = vld [vmem:[%s385 + $0x21] sm:$0xff]
      %v397 = vld [vmem:[%s385 + $0x31] sm:$0xff]
      %v398 = vld [vmem:[%s385 + $0x41] sm:$0xff]
      %v399 = vld [vmem:[%s385 + $0x51] sm:$0xff]
      %v400 = vld [vmem:[%s385 + $0x61] sm:$0xff]
      %v401 = vld [vmem:[%s385 + $0x71] sm:$0xff]
      %v402 = vld [vmem:[%s385 + $0x2] sm:$0xff]
      %v403 = vld [vmem:[%s385 + $0x12] sm:$0xff]
      %v404 = vld [vmem:[%s385 + $0x22] sm:$0xff]
      %v405 = vld [vmem:[%s385 + $0x32] sm:$0xff]
      %v406 = vld [vmem:[%s385 + $0x42] sm:$0xff]
      %v407 = vld [vmem:[%s385 + $0x52] sm:$0xff]
      %v408 = vld [vmem:[%s385 + $0x62] sm:$0xff]
      %v409 = vld [vmem:[%s385 + $0x72] sm:$0xff]
      %418 = vrot.lane.b32.xlu0 %v345, 64
      %v419 = vpop.permute.xlu0 %418
      %420 = vrot.lane.b32.xlu0 %v346, 64
      %v421 = vpop.permute.xlu0 %420
      %422 = vrot.lane.b32.xlu0 %v347, 64
      %v423 = vpop.permute.xlu0 %422
      %424 = vrot.lane.b32.xlu0 %v348, 64
      %v425 = vpop.permute.xlu0 %424
      %426 = vrot.lane.b32.xlu0 %v349, 64
      %v427 = vpop.permute.xlu0 %426
      %428 = vrot.lane.b32.xlu0 %v350, 64
      %v429 = vpop.permute.xlu0 %428
      %430 = vrot.lane.b32.xlu0 %v351, 64
      %v431 = vpop.permute.xlu0 %430
      %432 = vrot.lane.b32.xlu0 %v352, 64
      %v433 = vpop.permute.xlu0 %432
      %450 = vrot.lane.b32.xlu0 %v361, 64
      %v451 = vpop.permute.xlu0 %450
      %452 = vrot.lane.b32.xlu0 %v362, 64
      %v453 = vpop.permute.xlu0 %452
      %454 = vrot.lane.b32.xlu0 %v363, 64
      %v455 = vpop.permute.xlu0 %454
      %456 = vrot.lane.b32.xlu0 %v364, 64
      %v457 = vpop.permute.xlu0 %456
      %458 = vrot.lane.b32.xlu0 %v365, 64
      %v459 = vpop.permute.xlu0 %458
      %460 = vrot.lane.b32.xlu0 %v366, 64
      %v461 = vpop.permute.xlu0 %460
      %462 = vrot.lane.b32.xlu0 %v367, 64
      %v463 = vpop.permute.xlu0 %462
      %464 = vrot.lane.b32.xlu0 %v368, 64
      %v465 = vpop.permute.xlu0 %464
      %482 = vrot.lane.b32.xlu0 %v377, 64
      %v483 = vpop.permute.xlu0 %482
      %484 = vrot.lane.b32.xlu0 %v378, 64
      %v485 = vpop.permute.xlu0 %484
      %486 = vrot.lane.b32.xlu0 %v379, 64
      %v487 = vpop.permute.xlu0 %486
      %488 = vrot.lane.b32.xlu0 %v380, 64
      %v489 = vpop.permute.xlu0 %488
      %490 = vrot.lane.b32.xlu0 %v381, 64
      %v491 = vpop.permute.xlu0 %490
      %492 = vrot.lane.b32.xlu0 %v382, 64
      %v493 = vpop.permute.xlu0 %492
      %494 = vrot.lane.b32.xlu0 %v383, 64
      %v495 = vpop.permute.xlu0 %494
      %496 = vrot.lane.b32.xlu0 %v384, 64
      %v497 = vpop.permute.xlu0 %496
      %514 = vrot.lane.b32.xlu0 %v394, 64
      %v515 = vpop.permute.xlu0 %514
      %516 = vrot.lane.b32.xlu0 %v395, 64
      %v517 = vpop.permute.xlu0 %516
      %518 = vrot.lane.b32.xlu0 %v396, 64
      %v519 = vpop.permute.xlu0 %518
      %520 = vrot.lane.b32.xlu0 %v397, 64
      %v521 = vpop.permute.xlu0 %520
      %522 = vrot.lane.b32.xlu0 %v398, 64
      %v523 = vpop.permute.xlu0 %522
      %524 = vrot.lane.b32.xlu0 %v399, 64
      %v525 = vpop.permute.xlu0 %524
      %526 = vrot.lane.b32.xlu0 %v400, 64
      %v527 = vpop.permute.xlu0 %526
      %528 = vrot.lane.b32.xlu0 %v401, 64
      %v529 = vpop.permute.xlu0 %528
      %v538 = vsel %vm225, %v337, %v419
      %v539 = vsel %vm225, %v338, %v421
      %v540 = vsel %vm225, %v339, %v423
      %v541 = vsel %vm225, %v340, %v425
      %v542 = vsel %vm225, %v341, %v427
      %v543 = vsel %vm225, %v342, %v429
      %v544 = vsel %vm225, %v343, %v431
      %v545 = vsel %vm225, %v344, %v433
      %v546 = vsel %vm225, %v353, %v451
      %v547 = vsel %vm225, %v354, %v453
      %v548 = vsel %vm225, %v355, %v455
      %v549 = vsel %vm225, %v356, %v457
      %v550 = vsel %vm225, %v357, %v459
      %v551 = vsel %vm225, %v358, %v461
      %v552 = vsel %vm225, %v359, %v463
      %v553 = vsel %vm225, %v360, %v465
      %v554 = vsel %vm225, %v369, %v483
      %v555 = vsel %vm225, %v370, %v485
      %v556 = vsel %vm225, %v371, %v487
      %v557 = vsel %vm225, %v372, %v489
      %v558 = vsel %vm225, %v373, %v491
      %v559 = vsel %vm225, %v374, %v493
      %v560 = vsel %vm225, %v375, %v495
      %v561 = vsel %vm225, %v376, %v497
      %v562 = vsel %vm225, %v386, %v515
      %v563 = vsel %vm225, %v387, %v517
      %v564 = vsel %vm225, %v388, %v519
      %v565 = vsel %vm225, %v389, %v521
      %v566 = vsel %vm225, %v390, %v523
      %v567 = vsel %vm225, %v391, %v525
      %v568 = vsel %vm225, %v392, %v527
      %v569 = vsel %vm225, %v393, %v529
      %v571 = vlaneseq
      %v572 = vshrl.u32 %v571, 7
      %v573 = vsub.s32 0, %v572
      %v574 = vrot.slane %v327, %v573
      %v577 = vsel %vm225, %v402, 0
      %v580 = vsel %vm225, %v403, 0
      %v583 = vsel %vm225, %v404, 0
      %v586 = vsel %vm225, %v405, 0
      %v589 = vsel %vm225, %v406, 0
      %v592 = vsel %vm225, %v407, 0
      %v595 = vsel %vm225, %v408, 0
      %v598 = vsel %vm225, %v409, 0
      %600 = vmatprep.subr.mxu0 0.0
      %601 = vmatpush1.msra.mxu0 %v255
      %602 = vmatprep.subr.mxu0 0.0
      %603 = vmatpush1.msra.mxu0 %v256
      %604 = vmatprep.subr.mxu0 0.0
      %605 = vmatpush1.msra.mxu0 %v257
      %606 = vmatprep.subr.mxu0 0.0
      %607 = vmatpush1.msra.mxu0 %v258
      %608 = vmatprep.subr.mxu0 0.0
      %609 = vmatpush1.msra.mxu0 %v259
      %610 = vmatprep.subr.mxu0 0.0
      %611 = vmatpush1.msra.mxu0 %v260
      %612 = vmatprep.subr.mxu0 0.0
      %613 = vmatpush1.msra.mxu0 %v261
      %614 = vmatprep.subr.mxu0 0.0
      %615 = vmatpush1.msra.mxu0 %v262
      %616 = vmatprep.subr.mxu0 0.0
      %617 = vmatpush1.msra.mxu0 %v263
      %618 = vmatprep.subr.mxu0 0.0
      %619 = vmatpush1.msra.mxu0 %v264
      %620 = vmatprep.subr.mxu0 0.0
      %621 = vmatpush1.msra.mxu0 %v265
      %622 = vmatprep.subr.mxu0 0.0
      %623 = vmatpush1.msra.mxu0 %v266
      %624 = vmatprep.subr.mxu0 0.0
      %625 = vmatpush1.msra.mxu0 %v267
      %626 = vmatprep.subr.mxu0 0.0
      %627 = vmatpush1.msra.mxu0 %v268
      %628 = vmatprep.subr.mxu0 0.0
      %629 = vmatpush1.msra.mxu0 %v269
      %630 = vmatprep.subr.mxu0 0.0
      %631 = vmatpush1.msra.mxu0 %v270
      %632 = vmatprep.subr.mxu0 0.0
      %633 = vmatpush1.msra.mxu0 %v271
      %634 = vmatprep.subr.mxu0 0.0
      %635 = vmatpush1.msra.mxu0 %v272
      %636 = vmatprep.subr.mxu0 0.0
      %637 = vmatpush1.msra.mxu0 %v273
      %638 = vmatprep.subr.mxu0 0.0
      %639 = vmatpush1.msra.mxu0 %v274
      %640 = vmatprep.subr.mxu0 0.0
      %641 = vmatpush1.msra.mxu0 %v275
      %642 = vmatprep.subr.mxu0 0.0
      %643 = vmatpush1.msra.mxu0 %v276
      %644 = vmatprep.subr.mxu0 0.0
      %645 = vmatpush1.msra.mxu0 %v277
      %646 = vmatprep.subr.mxu0 0.0
      %647 = vmatpush1.msra.mxu0 %v278
      %648 = vmatprep.subr.mxu0 0.0
      %649 = vmatpush1.msra.mxu0 %v279
      %650 = vmatprep.subr.mxu0 0.0
      %651 = vmatpush1.msra.mxu0 %v280
      %652 = vmatprep.subr.mxu0 0.0
      %653 = vmatpush1.msra.mxu0 %v281
      %654 = vmatprep.subr.mxu0 0.0
      %655 = vmatpush1.msra.mxu0 %v282
      %656 = vmatprep.subr.mxu0 0.0
      %657 = vmatpush1.msra.mxu0 %v283
      %658 = vmatprep.subr.mxu0 0.0
      %659 = vmatpush1.msra.mxu0 %v284
      %660 = vmatprep.subr.mxu0 0.0
      %661 = vmatpush1.msra.mxu0 %v285
      %662 = vmatprep.subr.mxu0 0.0
      %663 = vmatpush1.msra.mxu0 %v286
      %664 = vmatprep.mubr.f32.mxu0 %v546
      %665 = vmatmul.mubr.f32.gmra.mrb[0].mxu0 %v538
      %v666 = vpop.f32.mrb[0].mxu0
      %v667 = vadd.f32 %v574, %v666
      %v668 = vpop.f32.mrb[0].mxu0
      %669 = vmatprep.mubr.f32.mxu0 %v547
      %670 = vmatmul.mubr.f32.gmra.mrb[0].mxu0 %v539
      %v671 = vpop.f32.mrb[0].mxu0
      %v672 = vadd.f32 %v574, %v671
      %v673 = vpop.f32.mrb[0].mxu0
      %674 = vmatprep.mubr.f32.mxu0 %v548
      %675 = vmatmul.mubr.f32.gmra.mrb[0].mxu0 %v540
      %v676 = vpop.f32.mrb[0].mxu0
      %v677 = vadd.f32 %v574, %v676
      %v678 = vpop.f32.mrb[0].mxu0
      %679 = vmatprep.mubr.f32.mxu0 %v549
      %680 = vmatmul.mubr.f32.gmra.mrb[0].mxu0 %v541
      %v681 = vpop.f32.mrb[0].mxu0
      %v682 = vadd.f32 %v574, %v681
      %v683 = vpop.f32.mrb[0].mxu0
      %684 = vmatprep.mubr.f32.mxu0 %v550
      %685 = vmatmul.mubr.f32.gmra.mrb[0].mxu0 %v542
      %v686 = vpop.f32.mrb[0].mxu0
      %v687 = vadd.f32 %v574, %v686
      %v688 = vpop.f32.mrb[0].mxu0
      %689 = vmatprep.mubr.f32.mxu0 %v551
      %690 = vmatmul.mubr.f32.gmra.mrb[0].mxu0 %v543
      %v691 = vpop.f32.mrb[0].mxu0
      %v692 = vadd.f32 %v574, %v691
      %v693 = vpop.f32.mrb[0].mxu0
      %694 = vmatprep.mubr.f32.mxu0 %v552
      %695 = vmatmul.mubr.f32.gmra.mrb[0].mxu0 %v544
      %v696 = vpop.f32.mrb[0].mxu0
      %v697 = vadd.f32 %v574, %v696
      %v698 = vpop.f32.mrb[0].mxu0
      %699 = vmatprep.mubr.f32.mxu0 %v553
      %700 = vmatmul.mubr.f32.gmra.mrb[0].mxu0 %v545
      %v701 = vpop.f32.mrb[0].mxu0
      %v702 = vadd.f32 %v574, %v701
      %v703 = vpop.f32.mrb[0].mxu0
      %704 = vdwg.mxu0
      %705 = vmatprep.subr.mxu0 0.0
      %706 = vmatpush1.msra.mxu0 %v287
      %707 = vmatprep.subr.mxu0 0.0
      %708 = vmatpush1.msra.mxu0 %v288
      %709 = vmatprep.subr.mxu0 0.0
      %710 = vmatpush1.msra.mxu0 %v289
      %711 = vmatprep.subr.mxu0 0.0
      %712 = vmatpush1.msra.mxu0 %v290
      %713 = vmatprep.subr.mxu0 0.0
      %714 = vmatpush1.msra.mxu0 %v291
      %715 = vmatprep.subr.mxu0 0.0
      %716 = vmatpush1.msra.mxu0 %v292
      %717 = vmatprep.subr.mxu0 0.0
      %718 = vmatpush1.msra.mxu0 %v293
      %719 = vmatprep.subr.mxu0 0.0
      %720 = vmatpush1.msra.mxu0 %v294
      %721 = vmatprep.subr.mxu0 0.0
      %722 = vmatpush1.msra.mxu0 %v295
      %723 = vmatprep.subr.mxu0 0.0
      %724 = vmatpush1.msra.mxu0 %v296
      %725 = vmatprep.subr.mxu0 0.0
      %726 = vmatpush1.msra.mxu0 %v297
      %727 = vmatprep.subr.mxu0 0.0
      %728 = vmatpush1.msra.mxu0 %v298
      %729 = vmatprep.subr.mxu0 0.0
      %730 = vmatpush1.msra.mxu0 %v299
      %731 = vmatprep.subr.mxu0 0.0
      %732 = vmatpush1.msra.mxu0 %v300
      %733 = vmatprep.subr.mxu0 0.0
      %734 = vmatpush1.msra.mxu0 %v301
      %735 = vmatprep.subr.mxu0 0.0
      %736 = vmatpush1.msra.mxu0 %v302
      %737 = vmatprep.subr.mxu0 0.0
      %738 = vmatpush1.msra.mxu0 %v303
      %739 = vmatprep.subr.mxu0 0.0
      %740 = vmatpush1.msra.mxu0 %v304
      %741 = vmatprep.subr.mxu0 0.0
      %742 = vmatpush1.msra.mxu0 %v305
      %743 = vmatprep.subr.mxu0 0.0
      %744 = vmatpush1.msra.mxu0 %v306
      %745 = vmatprep.subr.mxu0 0.0
      %746 = vmatpush1.msra.mxu0 %v307
      %747 = vmatprep.subr.mxu0 0.0
      %748 = vmatpush1.msra.mxu0 %v308
      %749 = vmatprep.subr.mxu0 0.0
      %750 = vmatpush1.msra.mxu0 %v309
      %751 = vmatprep.subr.mxu0 0.0
      %752 = vmatpush1.msra.mxu0 %v310
      %753 = vmatprep.subr.mxu0 0.0
      %754 = vmatpush1.msra.mxu0 %v311
      %755 = vmatprep.subr.mxu0 0.0
      %756 = vmatpush1.msra.mxu0 %v312
      %757 = vmatprep.subr.mxu0 0.0
      %758 = vmatpush1.msra.mxu0 %v313
      %759 = vmatprep.subr.mxu0 0.0
      %760 = vmatpush1.msra.mxu0 %v314
      %761 = vmatprep.subr.mxu0 0.0
      %762 = vmatpush1.msra.mxu0 %v315
      %763 = vmatprep.subr.mxu0 0.0
      %764 = vmatpush1.msra.mxu0 %v316
      %765 = vmatprep.subr.mxu0 0.0
      %766 = vmatpush1.msra.mxu0 %v317
      %767 = vmatprep.subr.mxu0 0.0
      %768 = vmatpush1.msra.mxu0 %v318
      %769 = vmatprep.mubr.f32.mxu0 %v562
      %770 = vmatmul.mubr.f32.gmra.mrb[0].mxu0 %v554
      %v771 = vpop.f32.mrb[0].mxu0
      %v772 = vadd.f32 %v667, %v771
      %v773 = vpop.f32.mrb[0].mxu0
      %774 = vmatprep.mubr.f32.mxu0 %v563
      %775 = vmatmul.mubr.f32.gmra.mrb[0].mxu0 %v555
      %v776 = vpop.f32.mrb[0].mxu0
      %v777 = vadd.f32 %v672, %v776
      %v778 = vpop.f32.mrb[0].mxu0
      %779 = vmatprep.mubr.f32.mxu0 %v564
      %780 = vmatmul.mubr.f32.gmra.mrb[0].mxu0 %v556
      %v781 = vpop.f32.mrb[0].mxu0
      %v782 = vadd.f32 %v677, %v781
      %v783 = vpop.f32.mrb[0].mxu0
      %784 = vmatprep.mubr.f32.mxu0 %v565
      %785 = vmatmul.mubr.f32.gmra.mrb[0].mxu0 %v557
      %v786 = vpop.f32.mrb[0].mxu0
      %v787 = vadd.f32 %v682, %v786
      %v788 = vpop.f32.mrb[0].mxu0
      %789 = vmatprep.mubr.f32.mxu0 %v566
      %790 = vmatmul.mubr.f32.gmra.mrb[0].mxu0 %v558
      %v791 = vpop.f32.mrb[0].mxu0
      %v792 = vadd.f32 %v687, %v791
      %v793 = vpop.f32.mrb[0].mxu0
      %794 = vmatprep.mubr.f32.mxu0 %v567
      %795 = vmatmul.mubr.f32.gmra.mrb[0].mxu0 %v559
      %v796 = vpop.f32.mrb[0].mxu0
      %v797 = vadd.f32 %v692, %v796
      %v798 = vpop.f32.mrb[0].mxu0
      %799 = vmatprep.mubr.f32.mxu0 %v568
      %800 = vmatmul.mubr.f32.gmra.mrb[0].mxu0 %v560
      %v801 = vpop.f32.mrb[0].mxu0
      %v802 = vadd.f32 %v697, %v801
      %v803 = vpop.f32.mrb[0].mxu0
      %804 = vmatprep.mubr.f32.mxu0 %v569
      %805 = vmatmul.mubr.f32.gmra.mrb[0].mxu0 %v561
      %v806 = vpop.f32.mrb[0].mxu0
      %v807 = vadd.f32 %v702, %v806
      %v808 = vpop.f32.mrb[0].mxu0
      %809 = vdwg.mxu0
      %810 = vmatprep.subr.mxu0 0.0
      %811 = vmatpush1.msra.mxu0 %v319
      %812 = vmatprep.subr.mxu0 0.0
      %813 = vmatpush1.msra.mxu0 %v320
      %814 = vmatprep.subr.mxu0 0.0
      %815 = vmatpush1.msra.mxu0 %v321
      %816 = vmatprep.subr.mxu0 0.0
      %817 = vmatpush1.msra.mxu0 %v322
      %818 = vmatprep.subr.mxu0 0.0
      %819 = vmatpush1.msra.mxu0 %v323
      %820 = vmatprep.subr.mxu0 0.0
      %821 = vmatpush1.msra.mxu0 %v324
      %822 = vmatprep.subr.mxu0 0.0
      %823 = vmatpush1.msra.mxu0 %v325
      %824 = vmatprep.subr.mxu0 0.0
      %825 = vmatpush1.msra.mxu0 %v326
      %826 = vmatprep.subr.mxu0 0.0
      %827 = vmatpush1.msra.mxu0 0.0
      %828 = vmatprep.subr.mxu0 0.0
      %829 = vmatpush1.msra.mxu0 0.0
      %830 = vmatprep.subr.mxu0 0.0
      %831 = vmatpush1.msra.mxu0 0.0
      %832 = vmatprep.subr.mxu0 0.0
      %833 = vmatpush1.msra.mxu0 0.0
      %834 = vmatprep.subr.mxu0 0.0
      %835 = vmatpush1.msra.mxu0 0.0
      %836 = vmatprep.subr.mxu0 0.0
      %837 = vmatpush1.msra.mxu0 0.0
      %838 = vmatprep.subr.mxu0 0.0
      %839 = vmatpush1.msra.mxu0 0.0
      %840 = vmatprep.subr.mxu0 0.0
      %841 = vmatpush1.msra.mxu0 0.0
      %842 = vmatprep.subr.mxu0 0.0
      %843 = vmatpush1.msra.mxu0 0.0
      %844 = vmatprep.subr.mxu0 0.0
      %845 = vmatpush1.msra.mxu0 0.0
      %846 = vmatprep.subr.mxu0 0.0
      %847 = vmatpush1.msra.mxu0 0.0
      %848 = vmatprep.subr.mxu0 0.0
      %849 = vmatpush1.msra.mxu0 0.0
      %850 = vmatprep.subr.mxu0 0.0
      %851 = vmatpush1.msra.mxu0 0.0
      %852 = vmatprep.subr.mxu0 0.0
      %853 = vmatpush1.msra.mxu0 0.0
      %854 = vmatprep.subr.mxu0 0.0
      %855 = vmatpush1.msra.mxu0 0.0
      %856 = vmatprep.subr.mxu0 0.0
      %857 = vmatpush1.msra.mxu0 0.0
      %858 = vmatprep.subr.mxu0 0.0
      %859 = vmatpush1.msra.mxu0 0.0
      %860 = vmatprep.subr.mxu0 0.0
      %861 = vmatpush1.msra.mxu0 0.0
      %862 = vmatprep.subr.mxu0 0.0
      %863 = vmatpush1.msra.mxu0 0.0
      %864 = vmatprep.subr.mxu0 0.0
      %865 = vmatpush1.msra.mxu0 0.0
      %866 = vmatprep.subr.mxu0 0.0
      %867 = vmatpush1.msra.mxu0 0.0
      %868 = vmatprep.subr.mxu0 0.0
      %869 = vmatpush1.msra.mxu0 0.0
      %870 = vmatprep.subr.mxu0 0.0
      %871 = vmatpush1.msra.mxu0 0.0
      %872 = vmatprep.subr.mxu0 0.0
      %873 = vmatpush1.msra.mxu0 0.0
      %874 = vmatprep.mubr.f32.mxu0 0.0
      %875 = vmatmul.mubr.f32.gmra.mrb[0].mxu0 %v577
      %v876 = vpop.f32.mrb[0].mxu0
      %v877 = vadd.f32 %v772, %v876
      %v878 = vpop.f32.mrb[0].mxu0
      %879 = vmatprep.mubr.f32.mxu0 0.0
      %880 = vmatmul.mubr.f32.gmra.mrb[0].mxu0 %v580
      %v881 = vpop.f32.mrb[0].mxu0
      %v882 = vadd.f32 %v777, %v881
      %v883 = vpop.f32.mrb[0].mxu0
      %884 = vmatprep.mubr.f32.mxu0 0.0
      %885 = vmatmul.mubr.f32.gmra.mrb[0].mxu0 %v583
      %v886 = vpop.f32.mrb[0].mxu0
      %v887 = vadd.f32 %v782, %v886
      %v888 = vpop.f32.mrb[0].mxu0
      %889 = vmatprep.mubr.f32.mxu0 0.0
      %890 = vmatmul.mubr.f32.gmra.mrb[0].mxu0 %v586
      %v891 = vpop.f32.mrb[0].mxu0
      %v892 = vadd.f32 %v787, %v891
      %v893 = vpop.f32.mrb[0].mxu0
      %894 = vmatprep.mubr.f32.mxu0 0.0
      %895 = vmatmul.mubr.f32.gmra.mrb[0].mxu0 %v589
      %v896 = vpop.f32.mrb[0].mxu0
      %v897 = vadd.f32 %v792, %v896
      %v898 = vpop.f32.mrb[0].mxu0
      %899 = vmatprep.mubr.f32.mxu0 0.0
      %900 = vmatmul.mubr.f32.gmra.mrb[0].mxu0 %v592
      %v901 = vpop.f32.mrb[0].mxu0
      %v902 = vadd.f32 %v797, %v901
      %v903 = vpop.f32.mrb[0].mxu0
      %904 = vmatprep.mubr.f32.mxu0 0.0
      %905 = vmatmul.mubr.f32.gmra.mrb[0].mxu0 %v595
      %v906 = vpop.f32.mrb[0].mxu0
      %v907 = vadd.f32 %v802, %v906
      %v908 = vpop.f32.mrb[0].mxu0
      %909 = vmatprep.mubr.f32.mxu0 0.0
      %910 = vmatmul.mubr.f32.gmra.mrb[0].mxu0 %v598
      %v911 = vpop.f32.mrb[0].mxu0
      %v912 = vadd.f32 %v807, %v911
      %v913 = vpop.f32.mrb[0].mxu0
      %914 = vdwg.mxu0
      %v915 = vmax.f32 %v877, 0.0
      %v916 = vmax.f32 %v882, 0.0
      %v917 = vmax.f32 %v887, 0.0
      %v918 = vmax.f32 %v892, 0.0
      %v919 = vmax.f32 %v897, 0.0
      %v920 = vmax.f32 %v902, 0.0
      %v921 = vmax.f32 %v907, 0.0
      %v922 = vmax.f32 %v912, 0.0
      %s923 = scalar_lea.vmem %s1, 576
      %v924 = vld [vmem:[%s923] sm:$0xff]
      %v925 = vld [vmem:[%s923 + $0x8] sm:$0xff]
      %v926 = vld [vmem:[%s923 + $0x10] sm:$0xff]
      %v927 = vld [vmem:[%s923 + $0x18] sm:$0xff]
      %v928 = vld [vmem:[%s923 + $0x20] sm:$0xff]
      %v929 = vld [vmem:[%s923 + $0x28] sm:$0xff]
      %v930 = vld [vmem:[%s923 + $0x30] sm:$0xff]
      %v931 = vld [vmem:[%s923 + $0x38] sm:$0xff]
      %v932 = vld [vmem:[%s923 + $0x40] sm:$0xff]
      %v933 = vld [vmem:[%s923 + $0x48] sm:$0xff]
      %v934 = vld [vmem:[%s923 + $0x50] sm:$0xff]
      %v935 = vld [vmem:[%s923 + $0x58] sm:$0xff]
      %v936 = vld [vmem:[%s923 + $0x60] sm:$0xff]
      %v937 = vld [vmem:[%s923 + $0x68] sm:$0xff]
      %v938 = vld [vmem:[%s923 + $0x70] sm:$0xff]
      %v939 = vld [vmem:[%s923 + $0x78] sm:$0xff]
      %v940 = vld [vmem:[%s923 + $0x80] sm:$0xff]
      %v941 = vld [vmem:[%s923 + $0x88] sm:$0xff]
      %v942 = vld [vmem:[%s923 + $0x90] sm:$0xff]
      %v943 = vld [vmem:[%s923 + $0x98] sm:$0xff]
      %v944 = vld [vmem:[%s923 + $0xa0] sm:$0xff]
      %v945 = vld [vmem:[%s923 + $0xa8] sm:$0xff]
      %v946 = vld [vmem:[%s923 + $0xb0] sm:$0xff]
      %v947 = vld [vmem:[%s923 + $0xb8] sm:$0xff]
      %v948 = vld [vmem:[%s923 + $0xc0] sm:$0xff]
      %v949 = vld [vmem:[%s923 + $0xc8] sm:$0xff]
      %v950 = vld [vmem:[%s923 + $0xd0] sm:$0xff]
      %v951 = vld [vmem:[%s923 + $0xd8] sm:$0xff]
      %v952 = vld [vmem:[%s923 + $0xe0] sm:$0xff]
      %v953 = vld [vmem:[%s923 + $0xe8] sm:$0xff]
      %v954 = vld [vmem:[%s923 + $0xf0] sm:$0xff]
      %v955 = vld [vmem:[%s923 + $0xf8] sm:$0xff]
      %v956 = vld [vmem:[%s923 + $0x100] sm:$0xff]
      %v957 = vld [vmem:[%s923 + $0x108] sm:$0xff]
      %v958 = vld [vmem:[%s923 + $0x110] sm:$0xff]
      %v959 = vld [vmem:[%s923 + $0x118] sm:$0xff]
      %v960 = vld [vmem:[%s923 + $0x120] sm:$0xff]
      %v961 = vld [vmem:[%s923 + $0x128] sm:$0xff]
      %v962 = vld [vmem:[%s923 + $0x130] sm:$0xff]
      %v963 = vld [vmem:[%s923 + $0x138] sm:$0xff]
      %v964 = vld [vmem:[%s923 + $0x140] sm:$0xff]
      %v965 = vld [vmem:[%s923 + $0x148] sm:$0xff]
      %v966 = vld [vmem:[%s923 + $0x150] sm:$0xff]
      %v967 = vld [vmem:[%s923 + $0x158] sm:$0xff]
      %v968 = vld [vmem:[%s923 + $0x160] sm:$0xff]
      %v969 = vld [vmem:[%s923 + $0x168] sm:$0xff]
      %v970 = vld [vmem:[%s923 + $0x170] sm:$0xff]
      %v971 = vld [vmem:[%s923 + $0x178] sm:$0xff]
      %v972 = vld [vmem:[%s923 + $0x180] sm:$0xff]
      %v973 = vld [vmem:[%s923 + $0x188] sm:$0xff]
      %v974 = vld [vmem:[%s923 + $0x190] sm:$0xff]
      %v975 = vld [vmem:[%s923 + $0x198] sm:$0xff]
      %v976 = vld [vmem:[%s923 + $0x1a0] sm:$0xff]
      %v977 = vld [vmem:[%s923 + $0x1a8] sm:$0xff]
      %v978 = vld [vmem:[%s923 + $0x1b0] sm:$0xff]
      %v979 = vld [vmem:[%s923 + $0x1b8] sm:$0xff]
      %v980 = vld [vmem:[%s923 + $0x1c0] sm:$0xff]
      %v981 = vld [vmem:[%s923 + $0x1c8] sm:$0xff]
      %v982 = vld [vmem:[%s923 + $0x1d0] sm:$0xff]
      %v983 = vld [vmem:[%s923 + $0x1d8] sm:$0xff]
      %v984 = vld [vmem:[%s923 + $0x1e0] sm:$0xff]
      %v985 = vld [vmem:[%s923 + $0x1e8] sm:$0xff]
      %v986 = vld [vmem:[%s923 + $0x1f0] sm:$0xff]
      %v987 = vld [vmem:[%s923 + $0x1f8] sm:$0xff]
      %v988 = vld [vmem:[%s923 + $0x200] sm:$0xff]
      %v989 = vld [vmem:[%s923 + $0x208] sm:$0xff]
      %v990 = vld [vmem:[%s923 + $0x210] sm:$0xff]
      %v991 = vld [vmem:[%s923 + $0x218] sm:$0xff]
      %v992 = vld [vmem:[%s923 + $0x220] sm:$0xff]
      %v993 = vld [vmem:[%s923 + $0x228] sm:$0xff]
      %v994 = vld [vmem:[%s923 + $0x230] sm:$0xff]
      %v995 = vld [vmem:[%s923 + $0x238] sm:$0xff]
      %s996 = scalar_lea.vmem %s2, 1
      %v997 = vld [vmem:[%s996] sm:$0x1]
      %998 = vst.msk [vmem:[%s328 + $0x1] sm:$0xff] %vm225, %v915
      %999 = vst.msk [vmem:[%s328 + $0x11] sm:$0xff] %vm225, %v916
      %1000 = vst.msk [vmem:[%s328 + $0x21] sm:$0xff] %vm225, %v917
      %1001 = vst.msk [vmem:[%s328 + $0x31] sm:$0xff] %vm225, %v918
      %1002 = vst.msk [vmem:[%s328 + $0x41] sm:$0xff] %vm225, %v919
      %1003 = vst.msk [vmem:[%s328 + $0x51] sm:$0xff] %vm225, %v920
      %1004 = vst.msk [vmem:[%s328 + $0x61] sm:$0xff] %vm225, %v921
      %1005 = vst.msk [vmem:[%s328 + $0x71] sm:$0xff] %vm225, %v922
      %v1006 = vld [vmem:[#allocation2] sm:$0xff]
      %v1007 = vld [vmem:[#allocation2 + $0x10] sm:$0xff]
      %v1008 = vld [vmem:[#allocation2 + $0x20] sm:$0xff]
      %v1009 = vld [vmem:[#allocation2 + $0x30] sm:$0xff]
      %v1010 = vld [vmem:[#allocation2 + $0x40] sm:$0xff]
      %v1011 = vld [vmem:[#allocation2 + $0x50] sm:$0xff]
      %v1012 = vld [vmem:[#allocation2 + $0x60] sm:$0xff]
      %v1013 = vld [vmem:[#allocation2 + $0x70] sm:$0xff]
      %v1014 = vld [vmem:[#allocation2 + $0x1] sm:$0xff]
      %v1015 = vld [vmem:[#allocation2 + $0x11] sm:$0xff]
      %v1016 = vld [vmem:[#allocation2 + $0x21] sm:$0xff]
      %v1017 = vld [vmem:[#allocation2 + $0x31] sm:$0xff]
      %v1018 = vld [vmem:[#allocation2 + $0x41] sm:$0xff]
      %v1019 = vld [vmem:[#allocation2 + $0x51] sm:$0xff]
      %v1020 = vld [vmem:[#allocation2 + $0x61] sm:$0xff]
      %v1021 = vld [vmem:[#allocation2 + $0x71] sm:$0xff]
      %v1022 = vld [vmem:[#allocation2 + $0x2] sm:$0xff]
      %v1023 = vld [vmem:[#allocation2 + $0x12] sm:$0xff]
      %v1024 = vld [vmem:[#allocation2 + $0x22] sm:$0xff]
      %v1025 = vld [vmem:[#allocation2 + $0x32] sm:$0xff]
      %v1026 = vld [vmem:[#allocation2 + $0x42] sm:$0xff]
      %v1027 = vld [vmem:[#allocation2 + $0x52] sm:$0xff]
      %v1028 = vld [vmem:[#allocation2 + $0x62] sm:$0xff]
      %v1029 = vld [vmem:[#allocation2 + $0x72] sm:$0xff]
      %v1030 = vld [vmem:[%s328] sm:$0xff]
      %v1031 = vld [vmem:[%s328 + $0x10] sm:$0xff]
      %v1032 = vld [vmem:[%s328 + $0x20] sm:$0xff]
      %v1033 = vld [vmem:[%s328 + $0x30] sm:$0xff]
      %v1034 = vld [vmem:[%s328 + $0x40] sm:$0xff]
      %v1035 = vld [vmem:[%s328 + $0x50] sm:$0xff]
      %v1036 = vld [vmem:[%s328 + $0x60] sm:$0xff]
      %v1037 = vld [vmem:[%s328 + $0x70] sm:$0xff]
      %v1038 = vld [vmem:[%s328 + $0x1] sm:$0xff]
      %v1039 = vld [vmem:[%s328 + $0x11] sm:$0xff]
      %v1040 = vld [vmem:[%s328 + $0x21] sm:$0xff]
      %v1041 = vld [vmem:[%s328 + $0x31] sm:$0xff]
      %v1042 = vld [vmem:[%s328 + $0x41] sm:$0xff]
      %v1043 = vld [vmem:[%s328 + $0x51] sm:$0xff]
      %v1044 = vld [vmem:[%s328 + $0x61] sm:$0xff]
      %v1045 = vld [vmem:[%s328 + $0x71] sm:$0xff]
      %v1046 = vld [vmem:[%s328 + $0x2] sm:$0xff]
      %v1047 = vld [vmem:[%s328 + $0x12] sm:$0xff]
      %v1048 = vld [vmem:[%s328 + $0x22] sm:$0xff]
      %v1049 = vld [vmem:[%s328 + $0x32] sm:$0xff]
      %v1050 = vld [vmem:[%s328 + $0x42] sm:$0xff]
      %v1051 = vld [vmem:[%s328 + $0x52] sm:$0xff]
      %v1052 = vld [vmem:[%s328 + $0x62] sm:$0xff]
      %v1053 = vld [vmem:[%s328 + $0x72] sm:$0xff]
      %v1054 = vld [vmem:[%s385] sm:$0xff]
      %v1055 = vld [vmem:[%s385 + $0x10] sm:$0xff]
      %v1056 = vld [vmem:[%s385 + $0x20] sm:$0xff]
      %v1057 = vld [vmem:[%s385 + $0x30] sm:$0xff]
      %v1058 = vld [vmem:[%s385 + $0x40] sm:$0xff]
      %v1059 = vld [vmem:[%s385 + $0x50] sm:$0xff]
      %v1060 = vld [vmem:[%s385 + $0x60] sm:$0xff]
      %v1061 = vld [vmem:[%s385 + $0x70] sm:$0xff]
      %v1062 = vld [vmem:[%s385 + $0x1] sm:$0xff]
      %v1063 = vld [vmem:[%s385 + $0x11] sm:$0xff]
      %v1064 = vld [vmem:[%s385 + $0x21] sm:$0xff]
      %v1065 = vld [vmem:[%s385 + $0x31] sm:$0xff]
      %v1066 = vld [vmem:[%s385 + $0x41] sm:$0xff]
      %v1067 = vld [vmem:[%s385 + $0x51] sm:$0xff]
      %v1068 = vld [vmem:[%s385 + $0x61] sm:$0xff]
      %v1069 = vld [vmem:[%s385 + $0x71] sm:$0xff]
      %v1070 = vld [vmem:[%s385 + $0x2] sm:$0xff]
      %v1071 = vld [vmem:[%s385 + $0x12] sm:$0xff]
      %v1072 = vld [vmem:[%s385 + $0x22] sm:$0xff]
      %v1073 = vld [vmem:[%s385 + $0x32] sm:$0xff]
      %v1074 = vld [vmem:[%s385 + $0x42] sm:$0xff]
      %v1075 = vld [vmem:[%s385 + $0x52] sm:$0xff]
      %v1076 = vld [vmem:[%s385 + $0x62] sm:$0xff]
      %v1077 = vld [vmem:[%s385 + $0x72] sm:$0xff]
      %1086 = vrot.lane.b32.xlu0 %v1014, 64
      %v1087 = vpop.permute.xlu0 %1086
      %1088 = vrot.lane.b32.xlu0 %v1015, 64
      %v1089 = vpop.permute.xlu0 %1088
      %1090 = vrot.lane.b32.xlu0 %v1016, 64
      %v1091 = vpop.permute.xlu0 %1090
      %1092 = vrot.lane.b32.xlu0 %v1017, 64
      %v1093 = vpop.permute.xlu0 %1092
      %1094 = vrot.lane.b32.xlu0 %v1018, 64
      %v1095 = vpop.permute.xlu0 %1094
      %1096 = vrot.lane.b32.xlu0 %v1019, 64
      %v1097 = vpop.permute.xlu0 %1096
      %1098 = vrot.lane.b32.xlu0 %v1020, 64
      %v1099 = vpop.permute.xlu0 %1098
      %1100 = vrot.lane.b32.xlu0 %v1021, 64
      %v1101 = vpop.permute.xlu0 %1100
      %1118 = vrot.lane.b32.xlu0 %v1030, 64
      %v1119 = vpop.permute.xlu0 %1118
      %1120 = vrot.lane.b32.xlu0 %v1031, 64
      %v1121 = vpop.permute.xlu0 %1120
      %1122 = vrot.lane.b32.xlu0 %v1032, 64
      %v1123 = vpop.permute.xlu0 %1122
      %1124 = vrot.lane.b32.xlu0 %v1033, 64
      %v1125 = vpop.permute.xlu0 %1124
      %1126 = vrot.lane.b32.xlu0 %v1034, 64
      %v1127 = vpop.permute.xlu0 %1126
      %1128 = vrot.lane.b32.xlu0 %v1035, 64
      %v1129 = vpop.permute.xlu0 %1128
      %1130 = vrot.lane.b32.xlu0 %v1036, 64
      %v1131 = vpop.permute.xlu0 %1130
      %1132 = vrot.lane.b32.xlu0 %v1037, 64
      %v1133 = vpop.permute.xlu0 %1132
      %1150 = vrot.lane.b32.xlu0 %v1046, 64
      %v1151 = vpop.permute.xlu0 %1150
      %1152 = vrot.lane.b32.xlu0 %v1047, 64
      %v1153 = vpop.permute.xlu0 %1152
      %1154 = vrot.lane.b32.xlu0 %v1048, 64
      %v1155 = vpop.permute.xlu0 %1154
      %1156 = vrot.lane.b32.xlu0 %v1049, 64
      %v1157 = vpop.permute.xlu0 %1156
      %1158 = vrot.lane.b32.xlu0 %v1050, 64
      %v1159 = vpop.permute.xlu0 %1158
      %1160 = vrot.lane.b32.xlu0 %v1051, 64
      %v1161 = vpop.permute.xlu0 %1160
      %1162 = vrot.lane.b32.xlu0 %v1052, 64
      %v1163 = vpop.permute.xlu0 %1162
      %1164 = vrot.lane.b32.xlu0 %v1053, 64
      %v1165 = vpop.permute.xlu0 %1164
      %1182 = vrot.lane.b32.xlu0 %v1062, 64
      %v1183 = vpop.permute.xlu0 %1182
      %1184 = vrot.lane.b32.xlu0 %v1063, 64
      %v1185 = vpop.permute.xlu0 %1184
      %1186 = vrot.lane.b32.xlu0 %v1064, 64
      %v1187 = vpop.permute.xlu0 %1186
      %1188 = vrot.lane.b32.xlu0 %v1065, 64
      %v1189 = vpop.permute.xlu0 %1188
      %1190 = vrot.lane.b32.xlu0 %v1066, 64
      %v1191 = vpop.permute.xlu0 %1190
      %1192 = vrot.lane.b32.xlu0 %v1067, 64
      %v1193 = vpop.permute.xlu0 %1192
      %1194 = vrot.lane.b32.xlu0 %v1068, 64
      %v1195 = vpop.permute.xlu0 %1194
      %1196 = vrot.lane.b32.xlu0 %v1069, 64
      %v1197 = vpop.permute.xlu0 %1196
      %v1206 = vsel %vm225, %v1006, %v1087
      %v1207 = vsel %vm225, %v1007, %v1089
      %v1208 = vsel %vm225, %v1008, %v1091
      %v1209 = vsel %vm225, %v1009, %v1093
      %v1210 = vsel %vm225, %v1010, %v1095
      %v1211 = vsel %vm225, %v1011, %v1097
      %v1212 = vsel %vm225, %v1012, %v1099
      %v1213 = vsel %vm225, %v1013, %v1101
      %v1214 = vsel %vm225, %v1022, %v1119
      %v1215 = vsel %vm225, %v1023, %v1121
      %v1216 = vsel %vm225, %v1024, %v1123
      %v1217 = vsel %vm225, %v1025, %v1125
      %v1218 = vsel %vm225, %v1026, %v1127
      %v1219 = vsel %vm225, %v1027, %v1129
      %v1220 = vsel %vm225, %v1028, %v1131
      %v1221 = vsel %vm225, %v1029, %v1133
      %v1222 = vsel %vm225, %v1038, %v1151
      %v1223 = vsel %vm225, %v1039, %v1153
      %v1224 = vsel %vm225, %v1040, %v1155
      %v1225 = vsel %vm225, %v1041, %v1157
      %v1226 = vsel %vm225, %v1042, %v1159
      %v1227 = vsel %vm225, %v1043, %v1161
      %v1228 = vsel %vm225, %v1044, %v1163
      %v1229 = vsel %vm225, %v1045, %v1165
      %v1230 = vsel %vm225, %v1054, %v1183
      %v1231 = vsel %vm225, %v1055, %v1185
      %v1232 = vsel %vm225, %v1056, %v1187
      %v1233 = vsel %vm225, %v1057, %v1189
      %v1234 = vsel %vm225, %v1058, %v1191
      %v1235 = vsel %vm225, %v1059, %v1193
      %v1236 = vsel %vm225, %v1060, %v1195
      %v1237 = vsel %vm225, %v1061, %v1197
      %v1239 = vlaneseq
      %v1240 = vshrl.u32 %v1239, 7
      %v1241 = vsub.s32 0, %v1240
      %v1242 = vrot.slane %v997, %v1241
      %v1245 = vsel %vm225, %v1070, 0
      %v1248 = vsel %vm225, %v1071, 0
      %v1251 = vsel %vm225, %v1072, 0
      %v1254 = vsel %vm225, %v1073, 0
      %v1257 = vsel %vm225, %v1074, 0
      %v1260 = vsel %vm225, %v1075, 0
      %v1263 = vsel %vm225, %v1076, 0
      %v1266 = vsel %vm225, %v1077, 0
      %1268 = vmatprep.subr.mxu0 0.0
      %1269 = vmatpush1.msra.mxu0 %v924
      %1270 = vmatprep.subr.mxu0 0.0
      %1271 = vmatpush1.msra.mxu0 %v925
      %1272 = vmatprep.subr.mxu0 0.0
      %1273 = vmatpush1.msra.mxu0 %v926
      %1274 = vmatprep.subr.mxu0 0.0
      %1275 = vmatpush1.msra.mxu0 %v927
      %1276 = vmatprep.subr.mxu0 0.0
      %1277 = vmatpush1.msra.mxu0 %v928
      %1278 = vmatprep.subr.mxu0 0.0
      %1279 = vmatpush1.msra.mxu0 %v929
      %1280 = vmatprep.subr.mxu0 0.0
      %1281 = vmatpush1.msra.mxu0 %v930
      %1282 = vmatprep.subr.mxu0 0.0
      %1283 = vmatpush1.msra.mxu0 %v931
      %1284 = vmatprep.subr.mxu0 0.0
      %1285 = vmatpush1.msra.mxu0 %v932
      %1286 = vmatprep.subr.mxu0 0.0
      %1287 = vmatpush1.msra.mxu0 %v933
      %1288 = vmatprep.subr.mxu0 0.0
      %1289 = vmatpush1.msra.mxu0 %v934
      %1290 = vmatprep.subr.mxu0 0.0
      %1291 = vmatpush1.msra.mxu0 %v935
      %1292 = vmatprep.subr.mxu0 0.0
      %1293 = vmatpush1.msra.mxu0 %v936
      %1294 = vmatprep.subr.mxu0 0.0
      %1295 = vmatpush1.msra.mxu0 %v937
      %1296 = vmatprep.subr.mxu0 0.0
      %1297 = vmatpush1.msra.mxu0 %v938
      %1298 = vmatprep.subr.mxu0 0.0
      %1299 = vmatpush1.msra.mxu0 %v939
      %1300 = vmatprep.subr.mxu0 0.0
      %1301 = vmatpush1.msra.mxu0 %v940
      %1302 = vmatprep.subr.mxu0 0.0
      %1303 = vmatpush1.msra.mxu0 %v941
      %1304 = vmatprep.subr.mxu0 0.0
      %1305 = vmatpush1.msra.mxu0 %v942
      %1306 = vmatprep.subr.mxu0 0.0
      %1307 = vmatpush1.msra.mxu0 %v943
      %1308 = vmatprep.subr.mxu0 0.0
      %1309 = vmatpush1.msra.mxu0 %v944
      %1310 = vmatprep.subr.mxu0 0.0
      %1311 = vmatpush1.msra.mxu0 %v945
      %1312 = vmatprep.subr.mxu0 0.0
      %1313 = vmatpush1.msra.mxu0 %v946
      %1314 = vmatprep.subr.mxu0 0.0
      %1315 = vmatpush1.msra.mxu0 %v947
      %1316 = vmatprep.subr.mxu0 0.0
      %1317 = vmatpush1.msra.mxu0 %v948
      %1318 = vmatprep.subr.mxu0 0.0
      %1319 = vmatpush1.msra.mxu0 %v949
      %1320 = vmatprep.subr.mxu0 0.0
      %1321 = vmatpush1.msra.mxu0 %v950
      %1322 = vmatprep.subr.mxu0 0.0
      %1323 = vmatpush1.msra.mxu0 %v951
      %1324 = vmatprep.subr.mxu0 0.0
      %1325 = vmatpush1.msra.mxu0 %v952
      %1326 = vmatprep.subr.mxu0 0.0
      %1327 = vmatpush1.msra.mxu0 %v953
      %1328 = vmatprep.subr.mxu0 0.0
      %1329 = vmatpush1.msra.mxu0 %v954
      %1330 = vmatprep.subr.mxu0 0.0
      %1331 = vmatpush1.msra.mxu0 %v955
      %1332 = vmatprep.mubr.f32.mxu0 %v1214
      %1333 = vmatmul.mubr.f32.gmra.mrb[0].mxu0 %v1206
      %v1334 = vpop.f32.mrb[0].mxu0
      %v1335 = vadd.f32 %v1242, %v1334
      %v1336 = vpop.f32.mrb[0].mxu0
      %1337 = vmatprep.mubr.f32.mxu0 %v1215
      %1338 = vmatmul.mubr.f32.gmra.mrb[0].mxu0 %v1207
      %v1339 = vpop.f32.mrb[0].mxu0
      %v1340 = vadd.f32 %v1242, %v1339
      %v1341 = vpop.f32.mrb[0].mxu0
      %1342 = vmatprep.mubr.f32.mxu0 %v1216
      %1343 = vmatmul.mubr.f32.gmra.mrb[0].mxu0 %v1208
      %v1344 = vpop.f32.mrb[0].mxu0
      %v1345 = vadd.f32 %v1242, %v1344
      %v1346 = vpop.f32.mrb[0].mxu0
      %1347 = vmatprep.mubr.f32.mxu0 %v1217
      %1348 = vmatmul.mubr.f32.gmra.mrb[0].mxu0 %v1209
      %v1349 = vpop.f32.mrb[0].mxu0
      %v1350 = vadd.f32 %v1242, %v1349
      %v1351 = vpop.f32.mrb[0].mxu0
      %1352 = vmatprep.mubr.f32.mxu0 %v1218
      %1353 = vmatmul.mubr.f32.gmra.mrb[0].mxu0 %v1210
      %v1354 = vpop.f32.mrb[0].mxu0
      %v1355 = vadd.f32 %v1242, %v1354
      %v1356 = vpop.f32.mrb[0].mxu0
      %1357 = vmatprep.mubr.f32.mxu0 %v1219
      %1358 = vmatmul.mubr.f32.gmra.mrb[0].mxu0 %v1211
      %v1359 = vpop.f32.mrb[0].mxu0
      %v1360 = vadd.f32 %v1242, %v1359
      %v1361 = vpop.f32.mrb[0].mxu0
      %1362 = vmatprep.mubr.f32.mxu0 %v1220
      %1363 = vmatmul.mubr.f32.gmra.mrb[0].mxu0 %v1212
      %v1364 = vpop.f32.mrb[0].mxu0
      %v1365 = vadd.f32 %v1242, %v1364
      %v1366 = vpop.f32.mrb[0].mxu0
      %1367 = vmatprep.mubr.f32.mxu0 %v1221
      %1368 = vmatmul.mubr.f32.gmra.mrb[0].mxu0 %v1213
      %v1369 = vpop.f32.mrb[0].mxu0
      %v1370 = vadd.f32 %v1242, %v1369
      %v1371 = vpop.f32.mrb[0].mxu0
      %1372 = vdwg.mxu0
      %1373 = vmatprep.subr.mxu0 0.0
      %1374 = vmatpush1.msra.mxu0 %v956
      %1375 = vmatprep.subr.mxu0 0.0
      %1376 = vmatpush1.msra.mxu0 %v957
      %1377 = vmatprep.subr.mxu0 0.0
      %1378 = vmatpush1.msra.mxu0 %v958
      %1379 = vmatprep.subr.mxu0 0.0
      %1380 = vmatpush1.msra.mxu0 %v959
      %1381 = vmatprep.subr.mxu0 0.0
      %1382 = vmatpush1.msra.mxu0 %v960
      %1383 = vmatprep.subr.mxu0 0.0
      %1384 = vmatpush1.msra.mxu0 %v961
      %1385 = vmatprep.subr.mxu0 0.0
      %1386 = vmatpush1.msra.mxu0 %v962
      %1387 = vmatprep.subr.mxu0 0.0
      %1388 = vmatpush1.msra.mxu0 %v963
      %1389 = vmatprep.subr.mxu0 0.0
      %1390 = vmatpush1.msra.mxu0 %v964
      %1391 = vmatprep.subr.mxu0 0.0
      %1392 = vmatpush1.msra.mxu0 %v965
      %1393 = vmatprep.subr.mxu0 0.0
      %1394 = vmatpush1.msra.mxu0 %v966
      %1395 = vmatprep.subr.mxu0 0.0
      %1396 = vmatpush1.msra.mxu0 %v967
      %1397 = vmatprep.subr.mxu0 0.0
      %1398 = vmatpush1.msra.mxu0 %v968
      %1399 = vmatprep.subr.mxu0 0.0
      %1400 = vmatpush1.msra.mxu0 %v969
      %1401 = vmatprep.subr.mxu0 0.0
      %1402 = vmatpush1.msra.mxu0 %v970
      %1403 = vmatprep.subr.mxu0 0.0
      %1404 = vmatpush1.msra.mxu0 %v971
      %1405 = vmatprep.subr.mxu0 0.0
      %1406 = vmatpush1.msra.mxu0 %v972
      %1407 = vmatprep.subr.mxu0 0.0
      %1408 = vmatpush1.msra.mxu0 %v973
      %1409 = vmatprep.subr.mxu0 0.0
      %1410 = vmatpush1.msra.mxu0 %v974
      %1411 = vmatprep.subr.mxu0 0.0
      %1412 = vmatpush1.msra.mxu0 %v975
      %1413 = vmatprep.subr.mxu0 0.0
      %1414 = vmatpush1.msra.mxu0 %v976
      %1415 = vmatprep.subr.mxu0 0.0
      %1416 = vmatpush1.msra.mxu0 %v977
      %1417 = vmatprep.subr.mxu0 0.0
      %1418 = vmatpush1.msra.mxu0 %v978
      %1419 = vmatprep.subr.mxu0 0.0
      %1420 = vmatpush1.msra.mxu0 %v979
      %1421 = vmatprep.subr.mxu0 0.0
      %1422 = vmatpush1.msra.mxu0 %v980
      %1423 = vmatprep.subr.mxu0 0.0
      %1424 = vmatpush1.msra.mxu0 %v981
      %1425 = vmatprep.subr.mxu0 0.0
      %1426 = vmatpush1.msra.mxu0 %v982
      %1427 = vmatprep.subr.mxu0 0.0
      %1428 = vmatpush1.msra.mxu0 %v983
      %1429 = vmatprep.subr.mxu0 0.0
      %1430 = vmatpush1.msra.mxu0 %v984
      %1431 = vmatprep.subr.mxu0 0.0
      %1432 = vmatpush1.msra.mxu0 %v985
      %1433 = vmatprep.subr.mxu0 0.0
      %1434 = vmatpush1.msra.mxu0 %v986
      %1435 = vmatprep.subr.mxu0 0.0
      %1436 = vmatpush1.msra.mxu0 %v987
      %1437 = vmatprep.mubr.f32.mxu0 %v1230
      %1438 = vmatmul.mubr.f32.gmra.mrb[0].mxu0 %v1222
      %v1439 = vpop.f32.mrb[0].mxu0
      %v1440 = vadd.f32 %v1335, %v1439
      %v1441 = vpop.f32.mrb[0].mxu0
      %1442 = vmatprep.mubr.f32.mxu0 %v1231
      %1443 = vmatmul.mubr.f32.gmra.mrb[0].mxu0 %v1223
      %v1444 = vpop.f32.mrb[0].mxu0
      %v1445 = vadd.f32 %v1340, %v1444
      %v1446 = vpop.f32.mrb[0].mxu0
      %1447 = vmatprep.mubr.f32.mxu0 %v1232
      %1448 = vmatmul.mubr.f32.gmra.mrb[0].mxu0 %v1224
      %v1449 = vpop.f32.mrb[0].mxu0
      %v1450 = vadd.f32 %v1345, %v1449
      %v1451 = vpop.f32.mrb[0].mxu0
      %1452 = vmatprep.mubr.f32.mxu0 %v1233
      %1453 = vmatmul.mubr.f32.gmra.mrb[0].mxu0 %v1225
      %v1454 = vpop.f32.mrb[0].mxu0
      %v1455 = vadd.f32 %v1350, %v1454
      %v1456 = vpop.f32.mrb[0].mxu0
      %1457 = vmatprep.mubr.f32.mxu0 %v1234
      %1458 = vmatmul.mubr.f32.gmra.mrb[0].mxu0 %v1226
      %v1459 = vpop.f32.mrb[0].mxu0
      %v1460 = vadd.f32 %v1355, %v1459
      %v1461 = vpop.f32.mrb[0].mxu0
      %1462 = vmatprep.mubr.f32.mxu0 %v1235
      %1463 = vmatmul.mubr.f32.gmra.mrb[0].mxu0 %v1227
      %v1464 = vpop.f32.mrb[0].mxu0
      %v1465 = vadd.f32 %v1360, %v1464
      %v1466 = vpop.f32.mrb[0].mxu0
      %1467 = vmatprep.mubr.f32.mxu0 %v1236
      %1468 = vmatmul.mubr.f32.gmra.mrb[0].mxu0 %v1228
      %v1469 = vpop.f32.mrb[0].mxu0
      %v1470 = vadd.f32 %v1365, %v1469
      %v1471 = vpop.f32.mrb[0].mxu0
      %1472 = vmatprep.mubr.f32.mxu0 %v1237
      %1473 = vmatmul.mubr.f32.gmra.mrb[0].mxu0 %v1229
      %v1474 = vpop.f32.mrb[0].mxu0
      %v1475 = vadd.f32 %v1370, %v1474
      %v1476 = vpop.f32.mrb[0].mxu0
      %1477 = vdwg.mxu0
      %1478 = vmatprep.subr.mxu0 0.0
      %1479 = vmatpush1.msra.mxu0 %v988
      %1480 = vmatprep.subr.mxu0 0.0
      %1481 = vmatpush1.msra.mxu0 %v989
      %1482 = vmatprep.subr.mxu0 0.0
      %1483 = vmatpush1.msra.mxu0 %v990
      %1484 = vmatprep.subr.mxu0 0.0
      %1485 = vmatpush1.msra.mxu0 %v991
      %1486 = vmatprep.subr.mxu0 0.0
      %1487 = vmatpush1.msra.mxu0 %v992
      %1488 = vmatprep.subr.mxu0 0.0
      %1489 = vmatpush1.msra.mxu0 %v993
      %1490 = vmatprep.subr.mxu0 0.0
      %1491 = vmatpush1.msra.mxu0 %v994
      %1492 = vmatprep.subr.mxu0 0.0
      %1493 = vmatpush1.msra.mxu0 %v995
      %1494 = vmatprep.subr.mxu0 0.0
      %1495 = vmatpush1.msra.mxu0 0.0
      %1496 = vmatprep.subr.mxu0 0.0
      %1497 = vmatpush1.msra.mxu0 0.0
      %1498 = vmatprep.subr.mxu0 0.0
      %1499 = vmatpush1.msra.mxu0 0.0
      %1500 = vmatprep.subr.mxu0 0.0
      %1501 = vmatpush1.msra.mxu0 0.0
      %1502 = vmatprep.subr.mxu0 0.0
      %1503 = vmatpush1.msra.mxu0 0.0
      %1504 = vmatprep.subr.mxu0 0.0
      %1505 = vmatpush1.msra.mxu0 0.0
      %1506 = vmatprep.subr.mxu0 0.0
      %1507 = vmatpush1.msra.mxu0 0.0
      %1508 = vmatprep.subr.mxu0 0.0
      %1509 = vmatpush1.msra.mxu0 0.0
      %1510 = vmatprep.subr.mxu0 0.0
      %1511 = vmatpush1.msra.mxu0 0.0
      %1512 = vmatprep.subr.mxu0 0.0
      %1513 = vmatpush1.msra.mxu0 0.0
      %1514 = vmatprep.subr.mxu0 0.0
      %1515 = vmatpush1.msra.mxu0 0.0
      %1516 = vmatprep.subr.mxu0 0.0
      %1517 = vmatpush1.msra.mxu0 0.0
      %1518 = vmatprep.subr.mxu0 0.0
      %1519 = vmatpush1.msra.mxu0 0.0
      %1520 = vmatprep.subr.mxu0 0.0
      %1521 = vmatpush1.msra.mxu0 0.0
      %1522 = vmatprep.subr.mxu0 0.0
      %1523 = vmatpush1.msra.mxu0 0.0
      %1524 = vmatprep.subr.mxu0 0.0
      %1525 = vmatpush1.msra.mxu0 0.0
      %1526 = vmatprep.subr.mxu0 0.0
      %1527 = vmatpush1.msra.mxu0 0.0
      %1528 = vmatprep.subr.mxu0 0.0
      %1529 = vmatpush1.msra.mxu0 0.0
      %1530 = vmatprep.subr.mxu0 0.0
      %1531 = vmatpush1.msra.mxu0 0.0
      %1532 = vmatprep.subr.mxu0 0.0
      %1533 = vmatpush1.msra.mxu0 0.0
      %1534 = vmatprep.subr.mxu0 0.0
      %1535 = vmatpush1.msra.mxu0 0.0
      %1536 = vmatprep.subr.mxu0 0.0
      %1537 = vmatpush1.msra.mxu0 0.0
      %1538 = vmatprep.subr.mxu0 0.0
      %1539 = vmatpush1.msra.mxu0 0.0
      %1540 = vmatprep.subr.mxu0 0.0
      %1541 = vmatpush1.msra.mxu0 0.0
      %1542 = vmatprep.mubr.f32.mxu0 0.0
      %1543 = vmatmul.mubr.f32.gmra.mrb[0].mxu0 %v1245
      %v1544 = vpop.f32.mrb[0].mxu0
      %v1545 = vadd.f32 %v1440, %v1544
      %v1546 = vpop.f32.mrb[0].mxu0
      %1547 = vmatprep.mubr.f32.mxu0 0.0
      %1548 = vmatmul.mubr.f32.gmra.mrb[0].mxu0 %v1248
      %v1549 = vpop.f32.mrb[0].mxu0
      %v1550 = vadd.f32 %v1445, %v1549
      %v1551 = vpop.f32.mrb[0].mxu0
      %1552 = vmatprep.mubr.f32.mxu0 0.0
      %1553 = vmatmul.mubr.f32.gmra.mrb[0].mxu0 %v1251
      %v1554 = vpop.f32.mrb[0].mxu0
      %v1555 = vadd.f32 %v1450, %v1554
      %v1556 = vpop.f32.mrb[0].mxu0
      %1557 = vmatprep.mubr.f32.mxu0 0.0
      %1558 = vmatmul.mubr.f32.gmra.mrb[0].mxu0 %v1254
      %v1559 = vpop.f32.mrb[0].mxu0
      %v1560 = vadd.f32 %v1455, %v1559
      %v1561 = vpop.f32.mrb[0].mxu0
      %1562 = vmatprep.mubr.f32.mxu0 0.0
      %1563 = vmatmul.mubr.f32.gmra.mrb[0].mxu0 %v1257
      %v1564 = vpop.f32.mrb[0].mxu0
      %v1565 = vadd.f32 %v1460, %v1564
      %v1566 = vpop.f32.mrb[0].mxu0
      %1567 = vmatprep.mubr.f32.mxu0 0.0
      %1568 = vmatmul.mubr.f32.gmra.mrb[0].mxu0 %v1260
      %v1569 = vpop.f32.mrb[0].mxu0
      %v1570 = vadd.f32 %v1465, %v1569
      %v1571 = vpop.f32.mrb[0].mxu0
      %1572 = vmatprep.mubr.f32.mxu0 0.0
      %1573 = vmatmul.mubr.f32.gmra.mrb[0].mxu0 %v1263
      %v1574 = vpop.f32.mrb[0].mxu0
      %v1575 = vadd.f32 %v1470, %v1574
      %v1576 = vpop.f32.mrb[0].mxu0
      %1577 = vmatprep.mubr.f32.mxu0 0.0
      %1578 = vmatmul.mubr.f32.gmra.mrb[0].mxu0 %v1266
      %v1579 = vpop.f32.mrb[0].mxu0
      %v1580 = vadd.f32 %v1475, %v1579
      %v1581 = vpop.f32.mrb[0].mxu0
      %1582 = vdwg.mxu0
      %v1583 = vadd.f32 %v247, %v1545
      %v1584 = vadd.f32 %v248, %v1550
      %v1585 = vadd.f32 %v249, %v1555
      %v1586 = vadd.f32 %v250, %v1560
      %v1587 = vadd.f32 %v251, %v1565
      %v1588 = vadd.f32 %v252, %v1570
      %v1589 = vadd.f32 %v253, %v1575
      %v1590 = vadd.f32 %v254, %v1580
      %s1591 = scalar_lea.vmem %s1, 1152
      %v1592 = vld [vmem:[%s1591] sm:$0xff]
      %v1593 = vld [vmem:[%s1591 + $0x8] sm:$0xff]
      %v1594 = vld [vmem:[%s1591 + $0x10] sm:$0xff]
      %v1595 = vld [vmem:[%s1591 + $0x18] sm:$0xff]
      %v1596 = vld [vmem:[%s1591 + $0x20] sm:$0xff]
      %v1597 = vld [vmem:[%s1591 + $0x28] sm:$0xff]
      %v1598 = vld [vmem:[%s1591 + $0x30] sm:$0xff]
      %v1599 = vld [vmem:[%s1591 + $0x38] sm:$0xff]
      %v1600 = vld [vmem:[%s1591 + $0x40] sm:$0xff]
      %v1601 = vld [vmem:[%s1591 + $0x48] sm:$0xff]
      %v1602 = vld [vmem:[%s1591 + $0x50] sm:$0xff]
      %v1603 = vld [vmem:[%s1591 + $0x58] sm:$0xff]
      %v1604 = vld [vmem:[%s1591 + $0x60] sm:$0xff]
      %v1605 = vld [vmem:[%s1591 + $0x68] sm:$0xff]
      %v1606 = vld [vmem:[%s1591 + $0x70] sm:$0xff]
      %v1607 = vld [vmem:[%s1591 + $0x78] sm:$0xff]
      %v1608 = vld [vmem:[%s1591 + $0x80] sm:$0xff]
      %v1609 = vld [vmem:[%s1591 + $0x88] sm:$0xff]
      %v1610 = vld [vmem:[%s1591 + $0x90] sm:$0xff]
      %v1611 = vld [vmem:[%s1591 + $0x98] sm:$0xff]
      %v1612 = vld [vmem:[%s1591 + $0xa0] sm:$0xff]
      %v1613 = vld [vmem:[%s1591 + $0xa8] sm:$0xff]
      %v1614 = vld [vmem:[%s1591 + $0xb0] sm:$0xff]
      %v1615 = vld [vmem:[%s1591 + $0xb8] sm:$0xff]
      %v1616 = vld [vmem:[%s1591 + $0xc0] sm:$0xff]
      %v1617 = vld [vmem:[%s1591 + $0xc8] sm:$0xff]
      %v1618 = vld [vmem:[%s1591 + $0xd0] sm:$0xff]
      %v1619 = vld [vmem:[%s1591 + $0xd8] sm:$0xff]
      %v1620 = vld [vmem:[%s1591 + $0xe0] sm:$0xff]
      %v1621 = vld [vmem:[%s1591 + $0xe8] sm:$0xff]
      %v1622 = vld [vmem:[%s1591 + $0xf0] sm:$0xff]
      %v1623 = vld [vmem:[%s1591 + $0xf8] sm:$0xff]
      %v1624 = vld [vmem:[%s1591 + $0x100] sm:$0xff]
      %v1625 = vld [vmem:[%s1591 + $0x108] sm:$0xff]
      %v1626 = vld [vmem:[%s1591 + $0x110] sm:$0xff]
      %v1627 = vld [vmem:[%s1591 + $0x118] sm:$0xff]
      %v1628 = vld [vmem:[%s1591 + $0x120] sm:$0xff]
      %v1629 = vld [vmem:[%s1591 + $0x128] sm:$0xff]
      %v1630 = vld [vmem:[%s1591 + $0x130] sm:$0xff]
      %v1631 = vld [vmem:[%s1591 + $0x138] sm:$0xff]
      %v1632 = vld [vmem:[%s1591 + $0x140] sm:$0xff]
      %v1633 = vld [vmem:[%s1591 + $0x148] sm:$0xff]
      %v1634 = vld [vmem:[%s1591 + $0x150] sm:$0xff]
      %v1635 = vld [vmem:[%s1591 + $0x158] sm:$0xff]
      %v1636 = vld [vmem:[%s1591 + $0x160] sm:$0xff]
      %v1637 = vld [vmem:[%s1591 + $0x168] sm:$0xff]
      %v1638 = vld [vmem:[%s1591 + $0x170] sm:$0xff]
      %v1639 = vld [vmem:[%s1591 + $0x178] sm:$0xff]
      %v1640 = vld [vmem:[%s1591 + $0x180] sm:$0xff]
      %v1641 = vld [vmem:[%s1591 + $0x188] sm:$0xff]
      %v1642 = vld [vmem:[%s1591 + $0x190] sm:$0xff]
      %v1643 = vld [vmem:[%s1591 + $0x198] sm:$0xff]
      %v1644 = vld [vmem:[%s1591 + $0x1a0] sm:$0xff]
      %v1645 = vld [vmem:[%s1591 + $0x1a8] sm:$0xff]
      %v1646 = vld [vmem:[%s1591 + $0x1b0] sm:$0xff]
      %v1647 = vld [vmem:[%s1591 + $0x1b8] sm:$0xff]
      %v1648 = vld [vmem:[%s1591 + $0x1c0] sm:$0xff]
      %v1649 = vld [vmem:[%s1591 + $0x1c8] sm:$0xff]
      %v1650 = vld [vmem:[%s1591 + $0x1d0] sm:$0xff]
      %v1651 = vld [vmem:[%s1591 + $0x1d8] sm:$0xff]
      %v1652 = vld [vmem:[%s1591 + $0x1e0] sm:$0xff]
      %v1653 = vld [vmem:[%s1591 + $0x1e8] sm:$0xff]
      %v1654 = vld [vmem:[%s1591 + $0x1f0] sm:$0xff]
      %v1655 = vld [vmem:[%s1591 + $0x1f8] sm:$0xff]
      %v1656 = vld [vmem:[%s1591 + $0x200] sm:$0xff]
      %v1657 = vld [vmem:[%s1591 + $0x208] sm:$0xff]
      %v1658 = vld [vmem:[%s1591 + $0x210] sm:$0xff]
      %v1659 = vld [vmem:[%s1591 + $0x218] sm:$0xff]
      %v1660 = vld [vmem:[%s1591 + $0x220] sm:$0xff]
      %v1661 = vld [vmem:[%s1591 + $0x228] sm:$0xff]
      %v1662 = vld [vmem:[%s1591 + $0x230] sm:$0xff]
      %v1663 = vld [vmem:[%s1591 + $0x238] sm:$0xff]
      %s1664 = scalar_lea.vmem %s2, 2
      %v1665 = vld [vmem:[%s1664] sm:$0x1]
      %1666 = vst.msk [vmem:[%s328 + $0x1] sm:$0xff] %vm225, %v1583
      %1667 = vst.msk [vmem:[%s328 + $0x11] sm:$0xff] %vm225, %v1584
      %1668 = vst.msk [vmem:[%s328 + $0x21] sm:$0xff] %vm225, %v1585
      %1669 = vst.msk [vmem:[%s328 + $0x31] sm:$0xff] %vm225, %v1586
      %1670 = vst.msk [vmem:[%s328 + $0x41] sm:$0xff] %vm225, %v1587
      %1671 = vst.msk [vmem:[%s328 + $0x51] sm:$0xff] %vm225, %v1588
      %1672 = vst.msk [vmem:[%s328 + $0x61] sm:$0xff] %vm225, %v1589
      %1673 = vst.msk [vmem:[%s328 + $0x71] sm:$0xff] %vm225, %v1590
      %v1674 = vld [vmem:[#allocation2] sm:$0xff]
      %v1675 = vld [vmem:[#allocation2 + $0x10] sm:$0xff]
      %v1676 = vld [vmem:[#allocation2 + $0x20] sm:$0xff]
      %v1677 = vld [vmem:[#allocation2 + $0x30] sm:$0xff]
      %v1678 = vld [vmem:[#allocation2 + $0x40] sm:$0xff]
      %v1679 = vld [vmem:[#allocation2 + $0x50] sm:$0xff]
      %v1680 = vld [vmem:[#allocation2 + $0x60] sm:$0xff]
      %v1681 = vld [vmem:[#allocation2 + $0x70] sm:$0xff]
      %v1682 = vld [vmem:[#allocation2 + $0x1] sm:$0xff]
      %v1683 = vld [vmem:[#allocation2 + $0x11] sm:$0xff]
      %v1684 = vld [vmem:[#allocation2 + $0x21] sm:$0xff]
      %v1685 = vld [vmem:[#allocation2 + $0x31] sm:$0xff]
      %v1686 = vld [vmem:[#allocation2 + $0x41] sm:$0xff]
      %v1687 = vld [vmem:[#allocation2 + $0x51] sm:$0xff]
      %v1688 = vld [vmem:[#allocation2 + $0x61] sm:$0xff]
      %v1689 = vld [vmem:[#allocation2 + $0x71] sm:$0xff]
      %v1690 = vld [vmem:[#allocation2 + $0x2] sm:$0xff]
      %v1691 = vld [vmem:[#allocation2 + $0x12] sm:$0xff]
      %v1692 = vld [vmem:[#allocation2 + $0x22] sm:$0xff]
      %v1693 = vld [vmem:[#allocation2 + $0x32] sm:$0xff]
      %v1694 = vld [vmem:[#allocation2 + $0x42] sm:$0xff]
      %v1695 = vld [vmem:[#allocation2 + $0x52] sm:$0xff]
      %v1696 = vld [vmem:[#allocation2 + $0x62] sm:$0xff]
      %v1697 = vld [vmem:[#allocation2 + $0x72] sm:$0xff]
      %v1698 = vld [vmem:[%s328] sm:$0xff]
      %v1699 = vld [vmem:[%s328 + $0x10] sm:$0xff]
      %v1700 = vld [vmem:[%s328 + $0x20] sm:$0xff]
      %v1701 = vld [vmem:[%s328 + $0x30] sm:$0xff]
      %v1702 = vld [vmem:[%s328 + $0x40] sm:$0xff]
      %v1703 = vld [vmem:[%s328 + $0x50] sm:$0xff]
      %v1704 = vld [vmem:[%s328 + $0x60] sm:$0xff]
      %v1705 = vld [vmem:[%s328 + $0x70] sm:$0xff]
      %v1706 = vld [vmem:[%s328 + $0x1] sm:$0xff]
      %v1707 = vld [vmem:[%s328 + $0x11] sm:$0xff]
      %v1708 = vld [vmem:[%s328 + $0x21] sm:$0xff]
      %v1709 = vld [vmem:[%s328 + $0x31] sm:$0xff]
      %v1710 = vld [vmem:[%s328 + $0x41] sm:$0xff]
      %v1711 = vld [vmem:[%s328 + $0x51] sm:$0xff]
      %v1712 = vld [vmem:[%s328 + $0x61] sm:$0xff]
      %v1713 = vld [vmem:[%s328 + $0x71] sm:$0xff]
      %v1714 = vld [vmem:[%s328 + $0x2] sm:$0xff]
      %v1715 = vld [vmem:[%s328 + $0x12] sm:$0xff]
      %v1716 = vld [vmem:[%s328 + $0x22] sm:$0xff]
      %v1717 = vld [vmem:[%s328 + $0x32] sm:$0xff]
      %v1718 = vld [vmem:[%s328 + $0x42] sm:$0xff]
      %v1719 = vld [vmem:[%s328 + $0x52] sm:$0xff]
      %v1720 = vld [vmem:[%s328 + $0x62] sm:$0xff]
      %v1721 = vld [vmem:[%s328 + $0x72] sm:$0xff]
      %v1722 = vld [vmem:[%s385] sm:$0xff]
      %v1723 = vld [vmem:[%s385 + $0x10] sm:$0xff]
      %v1724 = vld [vmem:[%s385 + $0x20] sm:$0xff]
      %v1725 = vld [vmem:[%s385 + $0x30] sm:$0xff]
      %v1726 = vld [vmem:[%s385 + $0x40] sm:$0xff]
      %v1727 = vld [vmem:[%s385 + $0x50] sm:$0xff]
      %v1728 = vld [vmem:[%s385 + $0x60] sm:$0xff]
      %v1729 = vld [vmem:[%s385 + $0x70] sm:$0xff]
      %v1730 = vld [vmem:[%s385 + $0x1] sm:$0xff]
      %v1731 = vld [vmem:[%s385 + $0x11] sm:$0xff]
      %v1732 = vld [vmem:[%s385 + $0x21] sm:$0xff]
      %v1733 = vld [vmem:[%s385 + $0x31] sm:$0xff]
      %v1734 = vld [vmem:[%s385 + $0x41] sm:$0xff]
      %v1735 = vld [vmem:[%s385 + $0x51] sm:$0xff]
      %v1736 = vld [vmem:[%s385 + $0x61] sm:$0xff]
      %v1737 = vld [vmem:[%s385 + $0x71] sm:$0xff]
      %v1738 = vld [vmem:[%s385 + $0x2] sm:$0xff]
      %v1739 = vld [vmem:[%s385 + $0x12] sm:$0xff]
      %v1740 = vld [vmem:[%s385 + $0x22] sm:$0xff]
      %v1741 = vld [vmem:[%s385 + $0x32] sm:$0xff]
      %v1742 = vld [vmem:[%s385 + $0x42] sm:$0xff]
      %v1743 = vld [vmem:[%s385 + $0x52] sm:$0xff]
      %v1744 = vld [vmem:[%s385 + $0x62] sm:$0xff]
      %v1745 = vld [vmem:[%s385 + $0x72] sm:$0xff]
      %1754 = vrot.lane.b32.xlu0 %v1682, 64
      %v1755 = vpop.permute.xlu0 %1754
      %1756 = vrot.lane.b32.xlu0 %v1683, 64
      %v1757 = vpop.permute.xlu0 %1756
      %1758 = vrot.lane.b32.xlu0 %v1684, 64
      %v1759 = vpop.permute.xlu0 %1758
      %1760 = vrot.lane.b32.xlu0 %v1685, 64
      %v1761 = vpop.permute.xlu0 %1760
      %1762 = vrot.lane.b32.xlu0 %v1686, 64
      %v1763 = vpop.permute.xlu0 %1762
      %1764 = vrot.lane.b32.xlu0 %v1687, 64
      %v1765 = vpop.permute.xlu0 %1764
      %1766 = vrot.lane.b32.xlu0 %v1688, 64
      %v1767 = vpop.permute.xlu0 %1766
      %1768 = vrot.lane.b32.xlu0 %v1689, 64
      %v1769 = vpop.permute.xlu0 %1768
      %1786 = vrot.lane.b32.xlu0 %v1698, 64
      %v1787 = vpop.permute.xlu0 %1786
      %1788 = vrot.lane.b32.xlu0 %v1699, 64
      %v1789 = vpop.permute.xlu0 %1788
      %1790 = vrot.lane.b32.xlu0 %v1700, 64
      %v1791 = vpop.permute.xlu0 %1790
      %1792 = vrot.lane.b32.xlu0 %v1701, 64
      %v1793 = vpop.permute.xlu0 %1792
      %1794 = vrot.lane.b32.xlu0 %v1702, 64
      %v1795 = vpop.permute.xlu0 %1794
      %1796 = vrot.lane.b32.xlu0 %v1703, 64
      %v1797 = vpop.permute.xlu0 %1796
      %1798 = vrot.lane.b32.xlu0 %v1704, 64
      %v1799 = vpop.permute.xlu0 %1798
      %1800 = vrot.lane.b32.xlu0 %v1705, 64
      %v1801 = vpop.permute.xlu0 %1800
      %1818 = vrot.lane.b32.xlu0 %v1714, 64
      %v1819 = vpop.permute.xlu0 %1818
      %1820 = vrot.lane.b32.xlu0 %v1715, 64
      %v1821 = vpop.permute.xlu0 %1820
      %1822 = vrot.lane.b32.xlu0 %v1716, 64
      %v1823 = vpop.permute.xlu0 %1822
      %1824 = vrot.lane.b32.xlu0 %v1717, 64
      %v1825 = vpop.permute.xlu0 %1824
      %1826 = vrot.lane.b32.xlu0 %v1718, 64
      %v1827 = vpop.permute.xlu0 %1826
      %1828 = vrot.lane.b32.xlu0 %v1719, 64
      %v1829 = vpop.permute.xlu0 %1828
      %1830 = vrot.lane.b32.xlu0 %v1720, 64
      %v1831 = vpop.permute.xlu0 %1830
      %1832 = vrot.lane.b32.xlu0 %v1721, 64
      %v1833 = vpop.permute.xlu0 %1832
      %1850 = vrot.lane.b32.xlu0 %v1730, 64
      %v1851 = vpop.permute.xlu0 %1850
      %1852 = vrot.lane.b32.xlu0 %v1731, 64
      %v1853 = vpop.permute.xlu0 %1852
      %1854 = vrot.lane.b32.xlu0 %v1732, 64
      %v1855 = vpop.permute.xlu0 %1854
      %1856 = vrot.lane.b32.xlu0 %v1733, 64
      %v1857 = vpop.permute.xlu0 %1856
      %1858 = vrot.lane.b32.xlu0 %v1734, 64
      %v1859 = vpop.permute.xlu0 %1858
      %1860 = vrot.lane.b32.xlu0 %v1735, 64
      %v1861 = vpop.permute.xlu0 %1860
      %1862 = vrot.lane.b32.xlu0 %v1736, 64
      %v1863 = vpop.permute.xlu0 %1862
      %1864 = vrot.lane.b32.xlu0 %v1737, 64
      %v1865 = vpop.permute.xlu0 %1864
      %v1874 = vsel %vm225, %v1674, %v1755
      %v1875 = vsel %vm225, %v1675, %v1757
      %v1876 = vsel %vm225, %v1676, %v1759
      %v1877 = vsel %vm225, %v1677, %v1761
      %v1878 = vsel %vm225, %v1678, %v1763
      %v1879 = vsel %vm225, %v1679, %v1765
      %v1880 = vsel %vm225, %v1680, %v1767
      %v1881 = vsel %vm225, %v1681, %v1769
      %v1882 = vsel %vm225, %v1690, %v1787
      %v1883 = vsel %vm225, %v1691, %v1789
      %v1884 = vsel %vm225, %v1692, %v1791
      %v1885 = vsel %vm225, %v1693, %v1793
      %v1886 = vsel %vm225, %v1694, %v1795
      %v1887 = vsel %vm225, %v1695, %v1797
      %v1888 = vsel %vm225, %v1696, %v1799
      %v1889 = vsel %vm225, %v1697, %v1801
      %v1890 = vsel %vm225, %v1706, %v1819
      %v1891 = vsel %vm225, %v1707, %v1821
      %v1892 = vsel %vm225, %v1708, %v1823
      %v1893 = vsel %vm225, %v1709, %v1825
      %v1894 = vsel %vm225, %v1710, %v1827
      %v1895 = vsel %vm225, %v1711, %v1829
      %v1896 = vsel %vm225, %v1712, %v1831
      %v1897 = vsel %vm225, %v1713, %v1833
      %v1898 = vsel %vm225, %v1722, %v1851
      %v1899 = vsel %vm225, %v1723, %v1853
      %v1900 = vsel %vm225, %v1724, %v1855
      %v1901 = vsel %vm225, %v1725, %v1857
      %v1902 = vsel %vm225, %v1726, %v1859
      %v1903 = vsel %vm225, %v1727, %v1861
      %v1904 = vsel %vm225, %v1728, %v1863
      %v1905 = vsel %vm225, %v1729, %v1865
      %v1907 = vlaneseq
      %v1908 = vshrl.u32 %v1907, 7
      %v1909 = vsub.s32 0, %v1908
      %v1910 = vrot.slane %v1665, %v1909
      %v1913 = vsel %vm225, %v1738, 0
      %v1916 = vsel %vm225, %v1739, 0
      %v1919 = vsel %vm225, %v1740, 0
      %v1922 = vsel %vm225, %v1741, 0
      %v1925 = vsel %vm225, %v1742, 0
      %v1928 = vsel %vm225, %v1743, 0
      %v1931 = vsel %vm225, %v1744, 0
      %v1934 = vsel %vm225, %v1745, 0
      %1936 = vmatprep.subr.mxu0 0.0
      %1937 = vmatpush1.msra.mxu0 %v1592
      %1938 = vmatprep.subr.mxu0 0.0
      %1939 = vmatpush1.msra.mxu0 %v1593
      %1940 = vmatprep.subr.mxu0 0.0
      %1941 = vmatpush1.msra.mxu0 %v1594
      %1942 = vmatprep.subr.mxu0 0.0
      %1943 = vmatpush1.msra.mxu0 %v1595
      %1944 = vmatprep.subr.mxu0 0.0
      %1945 = vmatpush1.msra.mxu0 %v1596
      %1946 = vmatprep.subr.mxu0 0.0
      %1947 = vmatpush1.msra.mxu0 %v1597
      %1948 = vmatprep.subr.mxu0 0.0
      %1949 = vmatpush1.msra.mxu0 %v1598
      %1950 = vmatprep.subr.mxu0 0.0
      %1951 = vmatpush1.msra.mxu0 %v1599
      %1952 = vmatprep.subr.mxu0 0.0
      %1953 = vmatpush1.msra.mxu0 %v1600
      %1954 = vmatprep.subr.mxu0 0.0
      %1955 = vmatpush1.msra.mxu0 %v1601
      %1956 = vmatprep.subr.mxu0 0.0
      %1957 = vmatpush1.msra.mxu0 %v1602
      %1958 = vmatprep.subr.mxu0 0.0
      %1959 = vmatpush1.msra.mxu0 %v1603
      %1960 = vmatprep.subr.mxu0 0.0
      %1961 = vmatpush1.msra.mxu0 %v1604
      %1962 = vmatprep.subr.mxu0 0.0
      %1963 = vmatpush1.msra.mxu0 %v1605
      %1964 = vmatprep.subr.mxu0 0.0
      %1965 = vmatpush1.msra.mxu0 %v1606
      %1966 = vmatprep.subr.mxu0 0.0
      %1967 = vmatpush1.msra.mxu0 %v1607
      %1968 = vmatprep.subr.mxu0 0.0
      %1969 = vmatpush1.msra.mxu0 %v1608
      %1970 = vmatprep.subr.mxu0 0.0
      %1971 = vmatpush1.msra.mxu0 %v1609
      %1972 = vmatprep.subr.mxu0 0.0
      %1973 = vmatpush1.msra.mxu0 %v1610
      %1974 = vmatprep.subr.mxu0 0.0
      %1975 = vmatpush1.msra.mxu0 %v1611
      %1976 = vmatprep.subr.mxu0 0.0
      %1977 = vmatpush1.msra.mxu0 %v1612
      %1978 = vmatprep.subr.mxu0 0.0
      %1979 = vmatpush1.msra.mxu0 %v1613
      %1980 = vmatprep.subr.mxu0 0.0
      %1981 = vmatpush1.msra.mxu0 %v1614
      %1982 = vmatprep.subr.mxu0 0.0
      %1983 = vmatpush1.msra.mxu0 %v1615
      %1984 = vmatprep.subr.mxu0 0.0
      %1985 = vmatpush1.msra.mxu0 %v1616
      %1986 = vmatprep.subr.mxu0 0.0
      %1987 = vmatpush1.msra.mxu0 %v1617
      %1988 = vmatprep.subr.mxu0 0.0
      %1989 = vmatpush1.msra.mxu0 %v1618
      %1990 = vmatprep.subr.mxu0 0.0
      %1991 = vmatpush1.msra.mxu0 %v1619
      %1992 = vmatprep.subr.mxu0 0.0
      %1993 = vmatpush1.msra.mxu0 %v1620
      %1994 = vmatprep.subr.mxu0 0.0
      %1995 = vmatpush1.msra.mxu0 %v1621
      %1996 = vmatprep.subr.mxu0 0.0
      %1997 = vmatpush1.msra.mxu0 %v1622
      %1998 = vmatprep.subr.mxu0 0.0
      %1999 = vmatpush1.msra.mxu0 %v1623
      %2000 = vmatprep.mubr.f32.mxu0 %v1882
      %2001 = vmatmul.mubr.f32.gmra.mrb[0].mxu0 %v1874
      %v2002 = vpop.f32.mrb[0].mxu0
      %v2003 = vadd.f32 %v1910, %v2002
      %v2004 = vpop.f32.mrb[0].mxu0
      %2005 = vmatprep.mubr.f32.mxu0 %v1883
      %2006 = vmatmul.mubr.f32.gmra.mrb[0].mxu0 %v1875
      %v2007 = vpop.f32.mrb[0].mxu0
      %v2008 = vadd.f32 %v1910, %v2007
      %v2009 = vpop.f32.mrb[0].mxu0
      %2010 = vmatprep.mubr.f32.mxu0 %v1884
      %2011 = vmatmul.mubr.f32.gmra.mrb[0].mxu0 %v1876
      %v2012 = vpop.f32.mrb[0].mxu0
      %v2013 = vadd.f32 %v1910, %v2012
      %v2014 = vpop.f32.mrb[0].mxu0
      %2015 = vmatprep.mubr.f32.mxu0 %v1885
      %2016 = vmatmul.mubr.f32.gmra.mrb[0].mxu0 %v1877
      %v2017 = vpop.f32.mrb[0].mxu0
      %v2018 = vadd.f32 %v1910, %v2017
      %v2019 = vpop.f32.mrb[0].mxu0
      %2020 = vmatprep.mubr.f32.mxu0 %v1886
      %2021 = vmatmul.mubr.f32.gmra.mrb[0].mxu0 %v1878
      %v2022 = vpop.f32.mrb[0].mxu0
      %v2023 = vadd.f32 %v1910, %v2022
      %v2024 = vpop.f32.mrb[0].mxu0
      %2025 = vmatprep.mubr.f32.mxu0 %v1887
      %2026 = vmatmul.mubr.f32.gmra.mrb[0].mxu0 %v1879
      %v2027 = vpop.f32.mrb[0].mxu0
      %v2028 = vadd.f32 %v1910, %v2027
      %v2029 = vpop.f32.mrb[0].mxu0
      %2030 = vmatprep.mubr.f32.mxu0 %v1888
      %2031 = vmatmul.mubr.f32.gmra.mrb[0].mxu0 %v1880
      %v2032 = vpop.f32.mrb[0].mxu0
      %v2033 = vadd.f32 %v1910, %v2032
      %v2034 = vpop.f32.mrb[0].mxu0
      %2035 = vmatprep.mubr.f32.mxu0 %v1889
      %2036 = vmatmul.mubr.f32.gmra.mrb[0].mxu0 %v1881
      %v2037 = vpop.f32.mrb[0].mxu0
      %v2038 = vadd.f32 %v1910, %v2037
      %v2039 = vpop.f32.mrb[0].mxu0
      %2040 = vdwg.mxu0
      %2041 = vmatprep.subr.mxu0 0.0
      %2042 = vmatpush1.msra.mxu0 %v1624
      %2043 = vmatprep.subr.mxu0 0.0
      %2044 = vmatpush1.msra.mxu0 %v1625
      %2045 = vmatprep.subr.mxu0 0.0
      %2046 = vmatpush1.msra.mxu0 %v1626
      %2047 = vmatprep.subr.mxu0 0.0
      %2048 = vmatpush1.msra.mxu0 %v1627
      %2049 = vmatprep.subr.mxu0 0.0
      %2050 = vmatpush1.msra.mxu0 %v1628
      %2051 = vmatprep.subr.mxu0 0.0
      %2052 = vmatpush1.msra.mxu0 %v1629
      %2053 = vmatprep.subr.mxu0 0.0
      %2054 = vmatpush1.msra.mxu0 %v1630
      %2055 = vmatprep.subr.mxu0 0.0
      %2056 = vmatpush1.msra.mxu0 %v1631
      %2057 = vmatprep.subr.mxu0 0.0
      %2058 = vmatpush1.msra.mxu0 %v1632
      %2059 = vmatprep.subr.mxu0 0.0
      %2060 = vmatpush1.msra.mxu0 %v1633
      %2061 = vmatprep.subr.mxu0 0.0
      %2062 = vmatpush1.msra.mxu0 %v1634
      %2063 = vmatprep.subr.mxu0 0.0
      %2064 = vmatpush1.msra.mxu0 %v1635
      %2065 = vmatprep.subr.mxu0 0.0
      %2066 = vmatpush1.msra.mxu0 %v1636
      %2067 = vmatprep.subr.mxu0 0.0
      %2068 = vmatpush1.msra.mxu0 %v1637
      %2069 = vmatprep.subr.mxu0 0.0
      %2070 = vmatpush1.msra.mxu0 %v1638
      %2071 = vmatprep.subr.mxu0 0.0
      %2072 = vmatpush1.msra.mxu0 %v1639
      %2073 = vmatprep.subr.mxu0 0.0
      %2074 = vmatpush1.msra.mxu0 %v1640
      %2075 = vmatprep.subr.mxu0 0.0
      %2076 = vmatpush1.msra.mxu0 %v1641
      %2077 = vmatprep.subr.mxu0 0.0
      %2078 = vmatpush1.msra.mxu0 %v1642
      %2079 = vmatprep.subr.mxu0 0.0
      %2080 = vmatpush1.msra.mxu0 %v1643
      %2081 = vmatprep.subr.mxu0 0.0
      %2082 = vmatpush1.msra.mxu0 %v1644
      %2083 = vmatprep.subr.mxu0 0.0
      %2084 = vmatpush1.msra.mxu0 %v1645
      %2085 = vmatprep.subr.mxu0 0.0
      %2086 = vmatpush1.msra.mxu0 %v1646
      %2087 = vmatprep.subr.mxu0 0.0
      %2088 = vmatpush1.msra.mxu0 %v1647
      %2089 = vmatprep.subr.mxu0 0.0
      %2090 = vmatpush1.msra.mxu0 %v1648
      %2091 = vmatprep.subr.mxu0 0.0
      %2092 = vmatpush1.msra.mxu0 %v1649
      %2093 = vmatprep.subr.mxu0 0.0
      %2094 = vmatpush1.msra.mxu0 %v1650
      %2095 = vmatprep.subr.mxu0 0.0
      %2096 = vmatpush1.msra.mxu0 %v1651
      %2097 = vmatprep.subr.mxu0 0.0
      %2098 = vmatpush1.msra.mxu0 %v1652
      %2099 = vmatprep.subr.mxu0 0.0
      %2100 = vmatpush1.msra.mxu0 %v1653
      %2101 = vmatprep.subr.mxu0 0.0
      %2102 = vmatpush1.msra.mxu0 %v1654
      %2103 = vmatprep.subr.mxu0 0.0
      %2104 = vmatpush1.msra.mxu0 %v1655
      %2105 = vmatprep.mubr.f32.mxu0 %v1898
      %2106 = vmatmul.mubr.f32.gmra.mrb[0].mxu0 %v1890
      %v2107 = vpop.f32.mrb[0].mxu0
      %v2108 = vadd.f32 %v2003, %v2107
      %v2109 = vpop.f32.mrb[0].mxu0
      %2110 = vmatprep.mubr.f32.mxu0 %v1899
      %2111 = vmatmul.mubr.f32.gmra.mrb[0].mxu0 %v1891
      %v2112 = vpop.f32.mrb[0].mxu0
      %v2113 = vadd.f32 %v2008, %v2112
      %v2114 = vpop.f32.mrb[0].mxu0
      %2115 = vmatprep.mubr.f32.mxu0 %v1900
      %2116 = vmatmul.mubr.f32.gmra.mrb[0].mxu0 %v1892
      %v2117 = vpop.f32.mrb[0].mxu0
      %v2118 = vadd.f32 %v2013, %v2117
      %v2119 = vpop.f32.mrb[0].mxu0
      %2120 = vmatprep.mubr.f32.mxu0 %v1901
      %2121 = vmatmul.mubr.f32.gmra.mrb[0].mxu0 %v1893
      %v2122 = vpop.f32.mrb[0].mxu0
      %v2123 = vadd.f32 %v2018, %v2122
      %v2124 = vpop.f32.mrb[0].mxu0
      %2125 = vmatprep.mubr.f32.mxu0 %v1902
      %2126 = vmatmul.mubr.f32.gmra.mrb[0].mxu0 %v1894
      %v2127 = vpop.f32.mrb[0].mxu0
      %v2128 = vadd.f32 %v2023, %v2127
      %v2129 = vpop.f32.mrb[0].mxu0
      %2130 = vmatprep.mubr.f32.mxu0 %v1903
      %2131 = vmatmul.mubr.f32.gmra.mrb[0].mxu0 %v1895
      %v2132 = vpop.f32.mrb[0].mxu0
      %v2133 = vadd.f32 %v2028, %v2132
      %v2134 = vpop.f32.mrb[0].mxu0
      %2135 = vmatprep.mubr.f32.mxu0 %v1904
      %2136 = vmatmul.mubr.f32.gmra.mrb[0].mxu0 %v1896
      %v2137 = vpop.f32.mrb[0].mxu0
      %v2138 = vadd.f32 %v2033, %v2137
      %v2139 = vpop.f32.mrb[0].mxu0
      %2140 = vmatprep.mubr.f32.mxu0 %v1905
      %2141 = vmatmul.mubr.f32.gmra.mrb[0].mxu0 %v1897
      %v2142 = vpop.f32.mrb[0].mxu0
      %v2143 = vadd.f32 %v2038, %v2142
      %v2144 = vpop.f32.mrb[0].mxu0
      %2145 = vdwg.mxu0
      %2146 = vmatprep.subr.mxu0 0.0
      %2147 = vmatpush1.msra.mxu0 %v1656
      %2148 = vmatprep.subr.mxu0 0.0
      %2149 = vmatpush1.msra.mxu0 %v1657
      %2150 = vmatprep.subr.mxu0 0.0
      %2151 = vmatpush1.msra.mxu0 %v1658
      %2152 = vmatprep.subr.mxu0 0.0
      %2153 = vmatpush1.msra.mxu0 %v1659
      %2154 = vmatprep.subr.mxu0 0.0
      %2155 = vmatpush1.msra.mxu0 %v1660
      %2156 = vmatprep.subr.mxu0 0.0
      %2157 = vmatpush1.msra.mxu0 %v1661
      %2158 = vmatprep.subr.mxu0 0.0
      %2159 = vmatpush1.msra.mxu0 %v1662
      %2160 = vmatprep.subr.mxu0 0.0
      %2161 = vmatpush1.msra.mxu0 %v1663
      %2162 = vmatprep.subr.mxu0 0.0
      %2163 = vmatpush1.msra.mxu0 0.0
      %2164 = vmatprep.subr.mxu0 0.0
      %2165 = vmatpush1.msra.mxu0 0.0
      %2166 = vmatprep.subr.mxu0 0.0
      %2167 = vmatpush1.msra.mxu0 0.0
      %2168 = vmatprep.subr.mxu0 0.0
      %2169 = vmatpush1.msra.mxu0 0.0
      %2170 = vmatprep.subr.mxu0 0.0
      %2171 = vmatpush1.msra.mxu0 0.0
      %2172 = vmatprep.subr.mxu0 0.0
      %2173 = vmatpush1.msra.mxu0 0.0
      %2174 = vmatprep.subr.mxu0 0.0
      %2175 = vmatpush1.msra.mxu0 0.0
      %2176 = vmatprep.subr.mxu0 0.0
      %2177 = vmatpush1.msra.mxu0 0.0
      %2178 = vmatprep.subr.mxu0 0.0
      %2179 = vmatpush1.msra.mxu0 0.0
      %2180 = vmatprep.subr.mxu0 0.0
      %2181 = vmatpush1.msra.mxu0 0.0
      %2182 = vmatprep.subr.mxu0 0.0
      %2183 = vmatpush1.msra.mxu0 0.0
      %2184 = vmatprep.subr.mxu0 0.0
      %2185 = vmatpush1.msra.mxu0 0.0
      %2186 = vmatprep.subr.mxu0 0.0
      %2187 = vmatpush1.msra.mxu0 0.0
      %2188 = vmatprep.subr.mxu0 0.0
      %2189 = vmatpush1.msra.mxu0 0.0
      %2190 = vmatprep.subr.mxu0 0.0
      %2191 = vmatpush1.msra.mxu0 0.0
      %2192 = vmatprep.subr.mxu0 0.0
      %2193 = vmatpush1.msra.mxu0 0.0
      %2194 = vmatprep.subr.mxu0 0.0
      %2195 = vmatpush1.msra.mxu0 0.0
      %2196 = vmatprep.subr.mxu0 0.0
      %2197 = vmatpush1.msra.mxu0 0.0
      %2198 = vmatprep.subr.mxu0 0.0
      %2199 = vmatpush1.msra.mxu0 0.0
      %2200 = vmatprep.subr.mxu0 0.0
      %2201 = vmatpush1.msra.mxu0 0.0
      %2202 = vmatprep.subr.mxu0 0.0
      %2203 = vmatpush1.msra.mxu0 0.0
      %2204 = vmatprep.subr.mxu0 0.0
      %2205 = vmatpush1.msra.mxu0 0.0
      %2206 = vmatprep.subr.mxu0 0.0
      %2207 = vmatpush1.msra.mxu0 0.0
      %2208 = vmatprep.subr.mxu0 0.0
      %2209 = vmatpush1.msra.mxu0 0.0
      %2210 = vmatprep.mubr.f32.mxu0 0.0
      %2211 = vmatmul.mubr.f32.gmra.mrb[0].mxu0 %v1913
      %v2212 = vpop.f32.mrb[0].mxu0
      %v2213 = vadd.f32 %v2108, %v2212
      %v2214 = vpop.f32.mrb[0].mxu0
      %2215 = vmatprep.mubr.f32.mxu0 0.0
      %2216 = vmatmul.mubr.f32.gmra.mrb[0].mxu0 %v1916
      %v2217 = vpop.f32.mrb[0].mxu0
      %v2218 = vadd.f32 %v2113, %v2217
      %v2219 = vpop.f32.mrb[0].mxu0
      %2220 = vmatprep.mubr.f32.mxu0 0.0
      %2221 = vmatmul.mubr.f32.gmra.mrb[0].mxu0 %v1919
      %v2222 = vpop.f32.mrb[0].mxu0
      %v2223 = vadd.f32 %v2118, %v2222
      %v2224 = vpop.f32.mrb[0].mxu0
      %2225 = vmatprep.mubr.f32.mxu0 0.0
      %2226 = vmatmul.mubr.f32.gmra.mrb[0].mxu0 %v1922
      %v2227 = vpop.f32.mrb[0].mxu0
      %v2228 = vadd.f32 %v2123, %v2227
      %v2229 = vpop.f32.mrb[0].mxu0
      %2230 = vmatprep.mubr.f32.mxu0 0.0
      %2231 = vmatmul.mubr.f32.gmra.mrb[0].mxu0 %v1925
      %v2232 = vpop.f32.mrb[0].mxu0
      %v2233 = vadd.f32 %v2128, %v2232
      %v2234 = vpop.f32.mrb[0].mxu0
      %2235 = vmatprep.mubr.f32.mxu0 0.0
      %2236 = vmatmul.mubr.f32.gmra.mrb[0].mxu0 %v1928
      %v2237 = vpop.f32.mrb[0].mxu0
      %v2238 = vadd.f32 %v2133, %v2237
      %v2239 = vpop.f32.mrb[0].mxu0
      %2240 = vmatprep.mubr.f32.mxu0 0.0
      %2241 = vmatmul.mubr.f32.gmra.mrb[0].mxu0 %v1931
      %v2242 = vpop.f32.mrb[0].mxu0
      %v2243 = vadd.f32 %v2138, %v2242
      %v2244 = vpop.f32.mrb[0].mxu0
      %2245 = vmatprep.mubr.f32.mxu0 0.0
      %2246 = vmatmul.mubr.f32.gmra.mrb[0].mxu0 %v1934
      %v2247 = vpop.f32.mrb[0].mxu0
      %v2248 = vadd.f32 %v2143, %v2247
      %v2249 = vpop.f32.mrb[0].mxu0
      %2250 = vdwg.mxu0
      %v2251 = vmax.f32 %v2213, 0.0
      %v2252 = vmax.f32 %v2218, 0.0
      %v2253 = vmax.f32 %v2223, 0.0
      %v2254 = vmax.f32 %v2228, 0.0
      %v2255 = vmax.f32 %v2233, 0.0
      %v2256 = vmax.f32 %v2238, 0.0
      %v2257 = vmax.f32 %v2243, 0.0
      %v2258 = vmax.f32 %v2248, 0.0
      %s2259 = scalar_lea.vmem %s1, 1728
      %v2260 = vld [vmem:[%s2259] sm:$0xff]
      %v2261 = vld [vmem:[%s2259 + $0x8] sm:$0xff]
      %v2262 = vld [vmem:[%s2259 + $0x10] sm:$0xff]
      %v2263 = vld [vmem:[%s2259 + $0x18] sm:$0xff]
      %v2264 = vld [vmem:[%s2259 + $0x20] sm:$0xff]
      %v2265 = vld [vmem:[%s2259 + $0x28] sm:$0xff]
      %v2266 = vld [vmem:[%s2259 + $0x30] sm:$0xff]
      %v2267 = vld [vmem:[%s2259 + $0x38] sm:$0xff]
      %v2268 = vld [vmem:[%s2259 + $0x40] sm:$0xff]
      %v2269 = vld [vmem:[%s2259 + $0x48] sm:$0xff]
      %v2270 = vld [vmem:[%s2259 + $0x50] sm:$0xff]
      %v2271 = vld [vmem:[%s2259 + $0x58] sm:$0xff]
      %v2272 = vld [vmem:[%s2259 + $0x60] sm:$0xff]
      %v2273 = vld [vmem:[%s2259 + $0x68] sm:$0xff]
      %v2274 = vld [vmem:[%s2259 + $0x70] sm:$0xff]
      %v2275 = vld [vmem:[%s2259 + $0x78] sm:$0xff]
      %v2276 = vld [vmem:[%s2259 + $0x80] sm:$0xff]
      %v2277 = vld [vmem:[%s2259 + $0x88] sm:$0xff]
      %v2278 = vld [vmem:[%s2259 + $0x90] sm:$0xff]
      %v2279 = vld [vmem:[%s2259 + $0x98] sm:$0xff]
      %v2280 = vld [vmem:[%s2259 + $0xa0] sm:$0xff]
      %v2281 = vld [vmem:[%s2259 + $0xa8] sm:$0xff]
      %v2282 = vld [vmem:[%s2259 + $0xb0] sm:$0xff]
      %v2283 = vld [vmem:[%s2259 + $0xb8] sm:$0xff]
      %v2284 = vld [vmem:[%s2259 + $0xc0] sm:$0xff]
      %v2285 = vld [vmem:[%s2259 + $0xc8] sm:$0xff]
      %v2286 = vld [vmem:[%s2259 + $0xd0] sm:$0xff]
      %v2287 = vld [vmem:[%s2259 + $0xd8] sm:$0xff]
      %v2288 = vld [vmem:[%s2259 + $0xe0] sm:$0xff]
      %v2289 = vld [vmem:[%s2259 + $0xe8] sm:$0xff]
      %v2290 = vld [vmem:[%s2259 + $0xf0] sm:$0xff]
      %v2291 = vld [vmem:[%s2259 + $0xf8] sm:$0xff]
      %v2292 = vld [vmem:[%s2259 + $0x100] sm:$0xff]
      %v2293 = vld [vmem:[%s2259 + $0x108] sm:$0xff]
      %v2294 = vld [vmem:[%s2259 + $0x110] sm:$0xff]
      %v2295 = vld [vmem:[%s2259 + $0x118] sm:$0xff]
      %v2296 = vld [vmem:[%s2259 + $0x120] sm:$0xff]
      %v2297 = vld [vmem:[%s2259 + $0x128] sm:$0xff]
      %v2298 = vld [vmem:[%s2259 + $0x130] sm:$0xff]
      %v2299 = vld [vmem:[%s2259 + $0x138] sm:$0xff]
      %v2300 = vld [vmem:[%s2259 + $0x140] sm:$0xff]
      %v2301 = vld [vmem:[%s2259 + $0x148] sm:$0xff]
      %v2302 = vld [vmem:[%s2259 + $0x150] sm:$0xff]
      %v2303 = vld [vmem:[%s2259 + $0x158] sm:$0xff]
      %v2304 = vld [vmem:[%s2259 + $0x160] sm:$0xff]
      %v2305 = vld [vmem:[%s2259 + $0x168] sm:$0xff]
      %v2306 = vld [vmem:[%s2259 + $0x170] sm:$0xff]
      %v2307 = vld [vmem:[%s2259 + $0x178] sm:$0xff]
      %v2308 = vld [vmem:[%s2259 + $0x180] sm:$0xff]
      %v2309 = vld [vmem:[%s2259 + $0x188] sm:$0xff]
      %v2310 = vld [vmem:[%s2259 + $0x190] sm:$0xff]
      %v2311 = vld [vmem:[%s2259 + $0x198] sm:$0xff]
      %v2312 = vld [vmem:[%s2259 + $0x1a0] sm:$0xff]
      %v2313 = vld [vmem:[%s2259 + $0x1a8] sm:$0xff]
      %v2314 = vld [vmem:[%s2259 + $0x1b0] sm:$0xff]
      %v2315 = vld [vmem:[%s2259 + $0x1b8] sm:$0xff]
      %v2316 = vld [vmem:[%s2259 + $0x1c0] sm:$0xff]
      %v2317 = vld [vmem:[%s2259 + $0x1c8] sm:$0xff]
      %v2318 = vld [vmem:[%s2259 + $0x1d0] sm:$0xff]
      %v2319 = vld [vmem:[%s2259 + $0x1d8] sm:$0xff]
      %v2320 = vld [vmem:[%s2259 + $0x1e0] sm:$0xff]
      %v2321 = vld [vmem:[%s2259 + $0x1e8] sm:$0xff]
      %v2322 = vld [vmem:[%s2259 + $0x1f0] sm:$0xff]
      %v2323 = vld [vmem:[%s2259 + $0x1f8] sm:$0xff]
      %v2324 = vld [vmem:[%s2259 + $0x200] sm:$0xff]
      %v2325 = vld [vmem:[%s2259 + $0x208] sm:$0xff]
      %v2326 = vld [vmem:[%s2259 + $0x210] sm:$0xff]
      %v2327 = vld [vmem:[%s2259 + $0x218] sm:$0xff]
      %v2328 = vld [vmem:[%s2259 + $0x220] sm:$0xff]
      %v2329 = vld [vmem:[%s2259 + $0x228] sm:$0xff]
      %v2330 = vld [vmem:[%s2259 + $0x230] sm:$0xff]
      %v2331 = vld [vmem:[%s2259 + $0x238] sm:$0xff]
      %s2332 = scalar_lea.vmem %s2, 3
      %v2333 = vld [vmem:[%s2332] sm:$0x1]
      %2334 = vst.msk [vmem:[%s328 + $0x1] sm:$0xff] %vm225, %v2251
      %2335 = vst.msk [vmem:[%s328 + $0x11] sm:$0xff] %vm225, %v2252
      %2336 = vst.msk [vmem:[%s328 + $0x21] sm:$0xff] %vm225, %v2253
      %2337 = vst.msk [vmem:[%s328 + $0x31] sm:$0xff] %vm225, %v2254
      %2338 = vst.msk [vmem:[%s328 + $0x41] sm:$0xff] %vm225, %v2255
      %2339 = vst.msk [vmem:[%s328 + $0x51] sm:$0xff] %vm225, %v2256
      %2340 = vst.msk [vmem:[%s328 + $0x61] sm:$0xff] %vm225, %v2257
      %2341 = vst.msk [vmem:[%s328 + $0x71] sm:$0xff] %vm225, %v2258
      %v2342 = vld [vmem:[#allocation2] sm:$0xff]
      %v2343 = vld [vmem:[#allocation2 + $0x10] sm:$0xff]
      %v2344 = vld [vmem:[#allocation2 + $0x20] sm:$0xff]
      %v2345 = vld [vmem:[#allocation2 + $0x30] sm:$0xff]
      %v2346 = vld [vmem:[#allocation2 + $0x40] sm:$0xff]
      %v2347 = vld [vmem:[#allocation2 + $0x50] sm:$0xff]
      %v2348 = vld [vmem:[#allocation2 + $0x60] sm:$0xff]
      %v2349 = vld [vmem:[#allocation2 + $0x70] sm:$0xff]
      %v2350 = vld [vmem:[#allocation2 + $0x1] sm:$0xff]
      %v2351 = vld [vmem:[#allocation2 + $0x11] sm:$0xff]
      %v2352 = vld [vmem:[#allocation2 + $0x21] sm:$0xff]
      %v2353 = vld [vmem:[#allocation2 + $0x31] sm:$0xff]
      %v2354 = vld [vmem:[#allocation2 + $0x41] sm:$0xff]
      %v2355 = vld [vmem:[#allocation2 + $0x51] sm:$0xff]
      %v2356 = vld [vmem:[#allocation2 + $0x61] sm:$0xff]
      %v2357 = vld [vmem:[#allocation2 + $0x71] sm:$0xff]
      %v2358 = vld [vmem:[#allocation2 + $0x2] sm:$0xff]
      %v2359 = vld [vmem:[#allocation2 + $0x12] sm:$0xff]
      %v2360 = vld [vmem:[#allocation2 + $0x22] sm:$0xff]
      %v2361 = vld [vmem:[#allocation2 + $0x32] sm:$0xff]
      %v2362 = vld [vmem:[#allocation2 + $0x42] sm:$0xff]
      %v2363 = vld [vmem:[#allocation2 + $0x52] sm:$0xff]
      %v2364 = vld [vmem:[#allocation2 + $0x62] sm:$0xff]
      %v2365 = vld [vmem:[#allocation2 + $0x72] sm:$0xff]
      %v2366 = vld [vmem:[%s328] sm:$0xff]
      %v2367 = vld [vmem:[%s328 + $0x10] sm:$0xff]
      %v2368 = vld [vmem:[%s328 + $0x20] sm:$0xff]
      %v2369 = vld [vmem:[%s328 + $0x30] sm:$0xff]
      %v2370 = vld [vmem:[%s328 + $0x40] sm:$0xff]
      %v2371 = vld [vmem:[%s328 + $0x50] sm:$0xff]
      %v2372 = vld [vmem:[%s328 + $0x60] sm:$0xff]
      %v2373 = vld [vmem:[%s328 + $0x70] sm:$0xff]
      %v2374 = vld [vmem:[%s328 + $0x1] sm:$0xff]
      %v2375 = vld [vmem:[%s328 + $0x11] sm:$0xff]
      %v2376 = vld [vmem:[%s328 + $0x21] sm:$0xff]
      %v2377 = vld [vmem:[%s328 + $0x31] sm:$0xff]
      %v2378 = vld [vmem:[%s328 + $0x41] sm:$0xff]
      %v2379 = vld [vmem:[%s328 + $0x51] sm:$0xff]
      %v2380 = vld [vmem:[%s328 + $0x61] sm:$0xff]
      %v2381 = vld [vmem:[%s328 + $0x71] sm:$0xff]
      %v2382 = vld [vmem:[%s328 + $0x2] sm:$0xff]
      %v2383 = vld [vmem:[%s328 + $0x12] sm:$0xff]
      %v2384 = vld [vmem:[%s328 + $0x22] sm:$0xff]
      %v2385 = vld [vmem:[%s328 + $0x32] sm:$0xff]
      %v2386 = vld [vmem:[%s328 + $0x42] sm:$0xff]
      %v2387 = vld [vmem:[%s328 + $0x52] sm:$0xff]
      %v2388 = vld [vmem:[%s328 + $0x62] sm:$0xff]
      %v2389 = vld [vmem:[%s328 + $0x72] sm:$0xff]
      %v2390 = vld [vmem:[%s385] sm:$0xff]
      %v2391 = vld [vmem:[%s385 + $0x10] sm:$0xff]
      %v2392 = vld [vmem:[%s385 + $0x20] sm:$0xff]
      %v2393 = vld [vmem:[%s385 + $0x30] sm:$0xff]
      %v2394 = vld [vmem:[%s385 + $0x40] sm:$0xff]
      %v2395 = vld [vmem:[%s385 + $0x50] sm:$0xff]
      %v2396 = vld [vmem:[%s385 + $0x60] sm:$0xff]
      %v2397 = vld [vmem:[%s385 + $0x70] sm:$0xff]
      %v2398 = vld [vmem:[%s385 + $0x1] sm:$0xff]
      %v2399 = vld [vmem:[%s385 + $0x11] sm:$0xff]
      %v2400 = vld [vmem:[%s385 + $0x21] sm:$0xff]
      %v2401 = vld [vmem:[%s385 + $0x31] sm:$0xff]
      %v2402 = vld [vmem:[%s385 + $0x41] sm:$0xff]
      %v2403 = vld [vmem:[%s385 + $0x51] sm:$0xff]
      %v2404 = vld [vmem:[%s385 + $0x61] sm:$0xff]
      %v2405 = vld [vmem:[%s385 + $0x71] sm:$0xff]
      %v2406 = vld [vmem:[%s385 + $0x2] sm:$0xff]
      %v2407 = vld [vmem:[%s385 + $0x12] sm:$0xff]
      %v2408 = vld [vmem:[%s385 + $0x22] sm:$0xff]
      %v2409 = vld [vmem:[%s385 + $0x32] sm:$0xff]
      %v2410 = vld [vmem:[%s385 + $0x42] sm:$0xff]
      %v2411 = vld [vmem:[%s385 + $0x52] sm:$0xff]
      %v2412 = vld [vmem:[%s385 + $0x62] sm:$0xff]
      %v2413 = vld [vmem:[%s385 + $0x72] sm:$0xff]
      %2422 = vrot.lane.b32.xlu0 %v2350, 64
      %v2423 = vpop.permute.xlu0 %2422
      %2424 = vrot.lane.b32.xlu0 %v2351, 64
      %v2425 = vpop.permute.xlu0 %2424
      %2426 = vrot.lane.b32.xlu0 %v2352, 64
      %v2427 = vpop.permute.xlu0 %2426
      %2428 = vrot.lane.b32.xlu0 %v2353, 64
      %v2429 = vpop.permute.xlu0 %2428
      %2430 = vrot.lane.b32.xlu0 %v2354, 64
      %v2431 = vpop.permute.xlu0 %2430
      %2432 = vrot.lane.b32.xlu0 %v2355, 64
      %v2433 = vpop.permute.xlu0 %2432
      %2434 = vrot.lane.b32.xlu0 %v2356, 64
      %v2435 = vpop.permute.xlu0 %2434
      %2436 = vrot.lane.b32.xlu0 %v2357, 64
      %v2437 = vpop.permute.xlu0 %2436
      %2454 = vrot.lane.b32.xlu0 %v2366, 64
      %v2455 = vpop.permute.xlu0 %2454
      %2456 = vrot.lane.b32.xlu0 %v2367, 64
      %v2457 = vpop.permute.xlu0 %2456
      %2458 = vrot.lane.b32.xlu0 %v2368, 64
      %v2459 = vpop.permute.xlu0 %2458
      %2460 = vrot.lane.b32.xlu0 %v2369, 64
      %v2461 = vpop.permute.xlu0 %2460
      %2462 = vrot.lane.b32.xlu0 %v2370, 64
      %v2463 = vpop.permute.xlu0 %2462
      %2464 = vrot.lane.b32.xlu0 %v2371, 64
      %v2465 = vpop.permute.xlu0 %2464
      %2466 = vrot.lane.b32.xlu0 %v2372, 64
      %v2467 = vpop.permute.xlu0 %2466
      %2468 = vrot.lane.b32.xlu0 %v2373, 64
      %v2469 = vpop.permute.xlu0 %2468
      %2486 = vrot.lane.b32.xlu0 %v2382, 64
      %v2487 = vpop.permute.xlu0 %2486
      %2488 = vrot.lane.b32.xlu0 %v2383, 64
      %v2489 = vpop.permute.xlu0 %2488
      %2490 = vrot.lane.b32.xlu0 %v2384, 64
      %v2491 = vpop.permute.xlu0 %2490
      %2492 = vrot.lane.b32.xlu0 %v2385, 64
      %v2493 = vpop.permute.xlu0 %2492
      %2494 = vrot.lane.b32.xlu0 %v2386, 64
      %v2495 = vpop.permute.xlu0 %2494
      %2496 = vrot.lane.b32.xlu0 %v2387, 64
      %v2497 = vpop.permute.xlu0 %2496
      %2498 = vrot.lane.b32.xlu0 %v2388, 64
      %v2499 = vpop.permute.xlu0 %2498
      %2500 = vrot.lane.b32.xlu0 %v2389, 64
      %v2501 = vpop.permute.xlu0 %2500
      %2518 = vrot.lane.b32.xlu0 %v2398, 64
      %v2519 = vpop.permute.xlu0 %2518
      %2520 = vrot.lane.b32.xlu0 %v2399, 64
      %v2521 = vpop.permute.xlu0 %2520
      %2522 = vrot.lane.b32.xlu0 %v2400, 64
      %v2523 = vpop.permute.xlu0 %2522
      %2524 = vrot.lane.b32.xlu0 %v2401, 64
      %v2525 = vpop.permute.xlu0 %2524
      %2526 = vrot.lane.b32.xlu0 %v2402, 64
      %v2527 = vpop.permute.xlu0 %2526
      %2528 = vrot.lane.b32.xlu0 %v2403, 64
      %v2529 = vpop.permute.xlu0 %2528
      %2530 = vrot.lane.b32.xlu0 %v2404, 64
      %v2531 = vpop.permute.xlu0 %2530
      %2532 = vrot.lane.b32.xlu0 %v2405, 64
      %v2533 = vpop.permute.xlu0 %2532
      %v2542 = vsel %vm225, %v2342, %v2423
      %v2543 = vsel %vm225, %v2343, %v2425
      %v2544 = vsel %vm225, %v2344, %v2427
      %v2545 = vsel %vm225, %v2345, %v2429
      %v2546 = vsel %vm225, %v2346, %v2431
      %v2547 = vsel %vm225, %v2347, %v2433
      %v2548 = vsel %vm225, %v2348, %v2435
      %v2549 = vsel %vm225, %v2349, %v2437
      %v2550 = vsel %vm225, %v2358, %v2455
      %v2551 = vsel %vm225, %v2359, %v2457
      %v2552 = vsel %vm225, %v2360, %v2459
      %v2553 = vsel %vm225, %v2361, %v2461
      %v2554 = vsel %vm225, %v2362, %v2463
      %v2555 = vsel %vm225, %v2363, %v2465
      %v2556 = vsel %vm225, %v2364, %v2467
      %v2557 = vsel %vm225, %v2365, %v2469
      %v2558 = vsel %vm225, %v2374, %v2487
      %v2559 = vsel %vm225, %v2375, %v2489
      %v2560 = vsel %vm225, %v2376, %v2491
      %v2561 = vsel %vm225, %v2377, %v2493
      %v2562 = vsel %vm225, %v2378, %v2495
      %v2563 = vsel %vm225, %v2379, %v2497
      %v2564 = vsel %vm225, %v2380, %v2499
      %v2565 = vsel %vm225, %v2381, %v2501
      %v2566 = vsel %vm225, %v2390, %v2519
      %v2567 = vsel %vm225, %v2391, %v2521
      %v2568 = vsel %vm225, %v2392, %v2523
      %v2569 = vsel %vm225, %v2393, %v2525
      %v2570 = vsel %vm225, %v2394, %v2527
      %v2571 = vsel %vm225, %v2395, %v2529
      %v2572 = vsel %vm225, %v2396, %v2531
      %v2573 = vsel %vm225, %v2397, %v2533
      %v2575 = vlaneseq
      %v2576 = vshrl.u32 %v2575, 7
      %v2577 = vsub.s32 0, %v2576
      %v2578 = vrot.slane %v2333, %v2577
      %v2581 = vsel %vm225, %v2406, 0
      %v2584 = vsel %vm225, %v2407, 0
      %v2587 = vsel %vm225, %v2408, 0
      %v2590 = vsel %vm225, %v2409, 0
      %v2593 = vsel %vm225, %v2410, 0
      %v2596 = vsel %vm225, %v2411, 0
      %v2599 = vsel %vm225, %v2412, 0
      %v2602 = vsel %vm225, %v2413, 0
      %2604 = vmatprep.subr.mxu0 0.0
      %2605 = vmatpush1.msra.mxu0 %v2260
      %2606 = vmatprep.subr.mxu0 0.0
      %2607 = vmatpush1.msra.mxu0 %v2261
      %2608 = vmatprep.subr.mxu0 0.0
      %2609 = vmatpush1.msra.mxu0 %v2262
      %2610 = vmatprep.subr.mxu0 0.0
      %2611 = vmatpush1.msra.mxu0 %v2263
      %2612 = vmatprep.subr.mxu0 0.0
      %2613 = vmatpush1.msra.mxu0 %v2264
      %2614 = vmatprep.subr.mxu0 0.0
      %2615 = vmatpush1.msra.mxu0 %v2265
      %2616 = vmatprep.subr.mxu0 0.0
      %2617 = vmatpush1.msra.mxu0 %v2266
      %2618 = vmatprep.subr.mxu0 0.0
      %2619 = vmatpush1.msra.mxu0 %v2267
      %2620 = vmatprep.subr.mxu0 0.0
      %2621 = vmatpush1.msra.mxu0 %v2268
      %2622 = vmatprep.subr.mxu0 0.0
      %2623 = vmatpush1.msra.mxu0 %v2269
      %2624 = vmatprep.subr.mxu0 0.0
      %2625 = vmatpush1.msra.mxu0 %v2270
      %2626 = vmatprep.subr.mxu0 0.0
      %2627 = vmatpush1.msra.mxu0 %v2271
      %2628 = vmatprep.subr.mxu0 0.0
      %2629 = vmatpush1.msra.mxu0 %v2272
      %2630 = vmatprep.subr.mxu0 0.0
      %2631 = vmatpush1.msra.mxu0 %v2273
      %2632 = vmatprep.subr.mxu0 0.0
      %2633 = vmatpush1.msra.mxu0 %v2274
      %2634 = vmatprep.subr.mxu0 0.0
      %2635 = vmatpush1.msra.mxu0 %v2275
      %2636 = vmatprep.subr.mxu0 0.0
      %2637 = vmatpush1.msra.mxu0 %v2276
      %2638 = vmatprep.subr.mxu0 0.0
      %2639 = vmatpush1.msra.mxu0 %v2277
      %2640 = vmatprep.subr.mxu0 0.0
      %2641 = vmatpush1.msra.mxu0 %v2278
      %2642 = vmatprep.subr.mxu0 0.0
      %2643 = vmatpush1.msra.mxu0 %v2279
      %2644 = vmatprep.subr.mxu0 0.0
      %2645 = vmatpush1.msra.mxu0 %v2280
      %2646 = vmatprep.subr.mxu0 0.0
      %2647 = vmatpush1.msra.mxu0 %v2281
      %2648 = vmatprep.subr.mxu0 0.0
      %2649 = vmatpush1.msra.mxu0 %v2282
      %2650 = vmatprep.subr.mxu0 0.0
      %2651 = vmatpush1.msra.mxu0 %v2283
      %2652 = vmatprep.subr.mxu0 0.0
      %2653 = vmatpush1.msra.mxu0 %v2284
      %2654 = vmatprep.subr.mxu0 0.0
      %2655 = vmatpush1.msra.mxu0 %v2285
      %2656 = vmatprep.subr.mxu0 0.0
      %2657 = vmatpush1.msra.mxu0 %v2286
      %2658 = vmatprep.subr.mxu0 0.0
      %2659 = vmatpush1.msra.mxu0 %v2287
      %2660 = vmatprep.subr.mxu0 0.0
      %2661 = vmatpush1.msra.mxu0 %v2288
      %2662 = vmatprep.subr.mxu0 0.0
      %2663 = vmatpush1.msra.mxu0 %v2289
      %2664 = vmatprep.subr.mxu0 0.0
      %2665 = vmatpush1.msra.mxu0 %v2290
      %2666 = vmatprep.subr.mxu0 0.0
      %2667 = vmatpush1.msra.mxu0 %v2291
      %2668 = vmatprep.mubr.f32.mxu0 %v2550
      %2669 = vmatmul.mubr.f32.gmra.mrb[0].mxu0 %v2542
      %v2670 = vpop.f32.mrb[0].mxu0
      %v2671 = vadd.f32 %v2578, %v2670
      %v2672 = vpop.f32.mrb[0].mxu0
      %2673 = vmatprep.mubr.f32.mxu0 %v2551
      %2674 = vmatmul.mubr.f32.gmra.mrb[0].mxu0 %v2543
      %v2675 = vpop.f32.mrb[0].mxu0
      %v2676 = vadd.f32 %v2578, %v2675
      %v2677 = vpop.f32.mrb[0].mxu0
      %2678 = vmatprep.mubr.f32.mxu0 %v2552
      %2679 = vmatmul.mubr.f32.gmra.mrb[0].mxu0 %v2544
      %v2680 = vpop.f32.mrb[0].mxu0
      %v2681 = vadd.f32 %v2578, %v2680
      %v2682 = vpop.f32.mrb[0].mxu0
      %2683 = vmatprep.mubr.f32.mxu0 %v2553
      %2684 = vmatmul.mubr.f32.gmra.mrb[0].mxu0 %v2545
      %v2685 = vpop.f32.mrb[0].mxu0
      %v2686 = vadd.f32 %v2578, %v2685
      %v2687 = vpop.f32.mrb[0].mxu0
      %2688 = vmatprep.mubr.f32.mxu0 %v2554
      %2689 = vmatmul.mubr.f32.gmra.mrb[0].mxu0 %v2546
      %v2690 = vpop.f32.mrb[0].mxu0
      %v2691 = vadd.f32 %v2578, %v2690
      %v2692 = vpop.f32.mrb[0].mxu0
      %2693 = vmatprep.mubr.f32.mxu0 %v2555
      %2694 = vmatmul.mubr.f32.gmra.mrb[0].mxu0 %v2547
      %v2695 = vpop.f32.mrb[0].mxu0
      %v2696 = vadd.f32 %v2578, %v2695
      %v2697 = vpop.f32.mrb[0].mxu0
      %2698 = vmatprep.mubr.f32.mxu0 %v2556
      %2699 = vmatmul.mubr.f32.gmra.mrb[0].mxu0 %v2548
      %v2700 = vpop.f32.mrb[0].mxu0
      %v2701 = vadd.f32 %v2578, %v2700
      %v2702 = vpop.f32.mrb[0].mxu0
      %2703 = vmatprep.mubr.f32.mxu0 %v2557
      %2704 = vmatmul.mubr.f32.gmra.mrb[0].mxu0 %v2549
      %v2705 = vpop.f32.mrb[0].mxu0
      %v2706 = vadd.f32 %v2578, %v2705
      %v2707 = vpop.f32.mrb[0].mxu0
      %2708 = vdwg.mxu0
      %2709 = vmatprep.subr.mxu0 0.0
      %2710 = vmatpush1.msra.mxu0 %v2292
      %2711 = vmatprep.subr.mxu0 0.0
      %2712 = vmatpush1.msra.mxu0 %v2293
      %2713 = vmatprep.subr.mxu0 0.0
      %2714 = vmatpush1.msra.mxu0 %v2294
      %2715 = vmatprep.subr.mxu0 0.0
      %2716 = vmatpush1.msra.mxu0 %v2295
      %2717 = vmatprep.subr.mxu0 0.0
      %2718 = vmatpush1.msra.mxu0 %v2296
      %2719 = vmatprep.subr.mxu0 0.0
      %2720 = vmatpush1.msra.mxu0 %v2297
      %2721 = vmatprep.subr.mxu0 0.0
      %2722 = vmatpush1.msra.mxu0 %v2298
      %2723 = vmatprep.subr.mxu0 0.0
      %2724 = vmatpush1.msra.mxu0 %v2299
      %2725 = vmatprep.subr.mxu0 0.0
      %2726 = vmatpush1.msra.mxu0 %v2300
      %2727 = vmatprep.subr.mxu0 0.0
      %2728 = vmatpush1.msra.mxu0 %v2301
      %2729 = vmatprep.subr.mxu0 0.0
      %2730 = vmatpush1.msra.mxu0 %v2302
      %2731 = vmatprep.subr.mxu0 0.0
      %2732 = vmatpush1.msra.mxu0 %v2303
      %2733 = vmatprep.subr.mxu0 0.0
      %2734 = vmatpush1.msra.mxu0 %v2304
      %2735 = vmatprep.subr.mxu0 0.0
      %2736 = vmatpush1.msra.mxu0 %v2305
      %2737 = vmatprep.subr.mxu0 0.0
      %2738 = vmatpush1.msra.mxu0 %v2306
      %2739 = vmatprep.subr.mxu0 0.0
      %2740 = vmatpush1.msra.mxu0 %v2307
      %2741 = vmatprep.subr.mxu0 0.0
      %2742 = vmatpush1.msra.mxu0 %v2308
      %2743 = vmatprep.subr.mxu0 0.0
      %2744 = vmatpush1.msra.mxu0 %v2309
      %2745 = vmatprep.subr.mxu0 0.0
      %2746 = vmatpush1.msra.mxu0 %v2310
      %2747 = vmatprep.subr.mxu0 0.0
      %2748 = vmatpush1.msra.mxu0 %v2311
      %2749 = vmatprep.subr.mxu0 0.0
      %2750 = vmatpush1.msra.mxu0 %v2312
      %2751 = vmatprep.subr.mxu0 0.0
      %2752 = vmatpush1.msra.mxu0 %v2313
      %2753 = vmatprep.subr.mxu0 0.0
      %2754 = vmatpush1.msra.mxu0 %v2314
      %2755 = vmatprep.subr.mxu0 0.0
      %2756 = vmatpush1.msra.mxu0 %v2315
      %2757 = vmatprep.subr.mxu0 0.0
      %2758 = vmatpush1.msra.mxu0 %v2316
      %2759 = vmatprep.subr.mxu0 0.0
      %2760 = vmatpush1.msra.mxu0 %v2317
      %2761 = vmatprep.subr.mxu0 0.0
      %2762 = vmatpush1.msra.mxu0 %v2318
      %2763 = vmatprep.subr.mxu0 0.0
      %2764 = vmatpush1.msra.mxu0 %v2319
      %2765 = vmatprep.subr.mxu0 0.0
      %2766 = vmatpush1.msra.mxu0 %v2320
      %2767 = vmatprep.subr.mxu0 0.0
      %2768 = vmatpush1.msra.mxu0 %v2321
      %2769 = vmatprep.subr.mxu0 0.0
      %2770 = vmatpush1.msra.mxu0 %v2322
      %2771 = vmatprep.subr.mxu0 0.0
      %2772 = vmatpush1.msra.mxu0 %v2323
      %2773 = vmatprep.mubr.f32.mxu0 %v2566
      %2774 = vmatmul.mubr.f32.gmra.mrb[0].mxu0 %v2558
      %v2775 = vpop.f32.mrb[0].mxu0
      %v2776 = vadd.f32 %v2671, %v2775
      %v2777 = vpop.f32.mrb[0].mxu0
      %2778 = vmatprep.mubr.f32.mxu0 %v2567
      %2779 = vmatmul.mubr.f32.gmra.mrb[0].mxu0 %v2559
      %v2780 = vpop.f32.mrb[0].mxu0
      %v2781 = vadd.f32 %v2676, %v2780
      %v2782 = vpop.f32.mrb[0].mxu0
      %2783 = vmatprep.mubr.f32.mxu0 %v2568
      %2784 = vmatmul.mubr.f32.gmra.mrb[0].mxu0 %v2560
      %v2785 = vpop.f32.mrb[0].mxu0
      %v2786 = vadd.f32 %v2681, %v2785
      %v2787 = vpop.f32.mrb[0].mxu0
      %2788 = vmatprep.mubr.f32.mxu0 %v2569
      %2789 = vmatmul.mubr.f32.gmra.mrb[0].mxu0 %v2561
      %v2790 = vpop.f32.mrb[0].mxu0
      %v2791 = vadd.f32 %v2686, %v2790
      %v2792 = vpop.f32.mrb[0].mxu0
      %2793 = vmatprep.mubr.f32.mxu0 %v2570
      %2794 = vmatmul.mubr.f32.gmra.mrb[0].mxu0 %v2562
      %v2795 = vpop.f32.mrb[0].mxu0
      %v2796 = vadd.f32 %v2691, %v2795
      %v2797 = vpop.f32.mrb[0].mxu0
      %2798 = vmatprep.mubr.f32.mxu0 %v2571
      %2799 = vmatmul.mubr.f32.gmra.mrb[0].mxu0 %v2563
      %v2800 = vpop.f32.mrb[0].mxu0
      %v2801 = vadd.f32 %v2696, %v2800
      %v2802 = vpop.f32.mrb[0].mxu0
      %2803 = vmatprep.mubr.f32.mxu0 %v2572
      %2804 = vmatmul.mubr.f32.gmra.mrb[0].mxu0 %v2564
      %v2805 = vpop.f32.mrb[0].mxu0
      %v2806 = vadd.f32 %v2701, %v2805
      %v2807 = vpop.f32.mrb[0].mxu0
      %2808 = vmatprep.mubr.f32.mxu0 %v2573
      %2809 = vmatmul.mubr.f32.gmra.mrb[0].mxu0 %v2565
      %v2810 = vpop.f32.mrb[0].mxu0
      %v2811 = vadd.f32 %v2706, %v2810
      %v2812 = vpop.f32.mrb[0].mxu0
      %2813 = vdwg.mxu0
      %2814 = vmatprep.subr.mxu0 0.0
      %2815 = vmatpush1.msra.mxu0 %v2324
      %2816 = vmatprep.subr.mxu0 0.0
      %2817 = vmatpush1.msra.mxu0 %v2325
      %2818 = vmatprep.subr.mxu0 0.0
      %2819 = vmatpush1.msra.mxu0 %v2326
      %2820 = vmatprep.subr.mxu0 0.0
      %2821 = vmatpush1.msra.mxu0 %v2327
      %2822 = vmatprep.subr.mxu0 0.0
      %2823 = vmatpush1.msra.mxu0 %v2328
      %2824 = vmatprep.subr.mxu0 0.0
      %2825 = vmatpush1.msra.mxu0 %v2329
      %2826 = vmatprep.subr.mxu0 0.0
      %2827 = vmatpush1.msra.mxu0 %v2330
      %2828 = vmatprep.subr.mxu0 0.0
      %2829 = vmatpush1.msra.mxu0 %v2331
      %2830 = vmatprep.subr.mxu0 0.0
      %2831 = vmatpush1.msra.mxu0 0.0
      %2832 = vmatprep.subr.mxu0 0.0
      %2833 = vmatpush1.msra.mxu0 0.0
      %2834 = vmatprep.subr.mxu0 0.0
      %2835 = vmatpush1.msra.mxu0 0.0
      %2836 = vmatprep.subr.mxu0 0.0
      %2837 = vmatpush1.msra.mxu0 0.0
      %2838 = vmatprep.subr.mxu0 0.0
      %2839 = vmatpush1.msra.mxu0 0.0
      %2840 = vmatprep.subr.mxu0 0.0
      %2841 = vmatpush1.msra.mxu0 0.0
      %2842 = vmatprep.subr.mxu0 0.0
      %2843 = vmatpush1.msra.mxu0 0.0
      %2844 = vmatprep.subr.mxu0 0.0
      %2845 = vmatpush1.msra.mxu0 0.0
      %2846 = vmatprep.subr.mxu0 0.0
      %2847 = vmatpush1.msra.mxu0 0.0
      %2848 = vmatprep.subr.mxu0 0.0
      %2849 = vmatpush1.msra.mxu0 0.0
      %2850 = vmatprep.subr.mxu0 0.0
      %2851 = vmatpush1.msra.mxu0 0.0
      %2852 = vmatprep.subr.mxu0 0.0
      %2853 = vmatpush1.msra.mxu0 0.0
      %2854 = vmatprep.subr.mxu0 0.0
      %2855 = vmatpush1.msra.mxu0 0.0
      %2856 = vmatprep.subr.mxu0 0.0
      %2857 = vmatpush1.msra.mxu0 0.0
      %2858 = vmatprep.subr.mxu0 0.0
      %2859 = vmatpush1.msra.mxu0 0.0
      %2860 = vmatprep.subr.mxu0 0.0
      %2861 = vmatpush1.msra.mxu0 0.0
      %2862 = vmatprep.subr.mxu0 0.0
      %2863 = vmatpush1.msra.mxu0 0.0
      %2864 = vmatprep.subr.mxu0 0.0
      %2865 = vmatpush1.msra.mxu0 0.0
      %2866 = vmatprep.subr.mxu0 0.0
      %2867 = vmatpush1.msra.mxu0 0.0
      %2868 = vmatprep.subr.mxu0 0.0
      %2869 = vmatpush1.msra.mxu0 0.0
      %2870 = vmatprep.subr.mxu0 0.0
      %2871 = vmatpush1.msra.mxu0 0.0
      %2872 = vmatprep.subr.mxu0 0.0
      %2873 = vmatpush1.msra.mxu0 0.0
      %2874 = vmatprep.subr.mxu0 0.0
      %2875 = vmatpush1.msra.mxu0 0.0
      %2876 = vmatprep.subr.mxu0 0.0
      %2877 = vmatpush1.msra.mxu0 0.0
      %2878 = vmatprep.mubr.f32.mxu0 0.0
      %2879 = vmatmul.mubr.f32.gmra.mrb[0].mxu0 %v2581
      %v2880 = vpop.f32.mrb[0].mxu0
      %v2881 = vadd.f32 %v2776, %v2880
      %v2882 = vpop.f32.mrb[0].mxu0
      %2883 = vmatprep.mubr.f32.mxu0 0.0
      %2884 = vmatmul.mubr.f32.gmra.mrb[0].mxu0 %v2584
      %v2885 = vpop.f32.mrb[0].mxu0
      %v2886 = vadd.f32 %v2781, %v2885
      %v2887 = vpop.f32.mrb[0].mxu0
      %2888 = vmatprep.mubr.f32.mxu0 0.0
      %2889 = vmatmul.mubr.f32.gmra.mrb[0].mxu0 %v2587
      %v2890 = vpop.f32.mrb[0].mxu0
      %v2891 = vadd.f32 %v2786, %v2890
      %v2892 = vpop.f32.mrb[0].mxu0
      %2893 = vmatprep.mubr.f32.mxu0 0.0
      %2894 = vmatmul.mubr.f32.gmra.mrb[0].mxu0 %v2590
      %v2895 = vpop.f32.mrb[0].mxu0
      %v2896 = vadd.f32 %v2791, %v2895
      %v2897 = vpop.f32.mrb[0].mxu0
      %2898 = vmatprep.mubr.f32.mxu0 0.0
      %2899 = vmatmul.mubr.f32.gmra.mrb[0].mxu0 %v2593
      %v2900 = vpop.f32.mrb[0].mxu0
      %v2901 = vadd.f32 %v2796, %v2900
      %v2902 = vpop.f32.mrb[0].mxu0
      %2903 = vmatprep.mubr.f32.mxu0 0.0
      %2904 = vmatmul.mubr.f32.gmra.mrb[0].mxu0 %v2596
      %v2905 = vpop.f32.mrb[0].mxu0
      %v2906 = vadd.f32 %v2801, %v2905
      %v2907 = vpop.f32.mrb[0].mxu0
      %2908 = vmatprep.mubr.f32.mxu0 0.0
      %2909 = vmatmul.mubr.f32.gmra.mrb[0].mxu0 %v2599
      %v2910 = vpop.f32.mrb[0].mxu0
      %v2911 = vadd.f32 %v2806, %v2910
      %v2912 = vpop.f32.mrb[0].mxu0
      %2913 = vmatprep.mubr.f32.mxu0 0.0
      %2914 = vmatmul.mubr.f32.gmra.mrb[0].mxu0 %v2602
      %v2915 = vpop.f32.mrb[0].mxu0
      %v2916 = vadd.f32 %v2811, %v2915
      %v2917 = vpop.f32.mrb[0].mxu0
      %2918 = vdwg.mxu0
      %v2919 = vadd.f32 %v1583, %v2881
      %v2920 = vadd.f32 %v1584, %v2886
      %v2921 = vadd.f32 %v1585, %v2891
      %v2922 = vadd.f32 %v1586, %v2896
      %v2923 = vadd.f32 %v1587, %v2901
      %v2924 = vadd.f32 %v1588, %v2906
      %v2925 = vadd.f32 %v1589, %v2911
      %v2926 = vadd.f32 %v1590, %v2916
      %s2927 = scalar_lea.vmem %s1, 2304
      %v2928 = vld [vmem:[%s2927] sm:$0xff]
      %v2929 = vld [vmem:[%s2927 + $0x8] sm:$0xff]
      %v2930 = vld [vmem:[%s2927 + $0x10] sm:$0xff]
      %v2931 = vld [vmem:[%s2927 + $0x18] sm:$0xff]
      %v2932 = vld [vmem:[%s2927 + $0x20] sm:$0xff]
      %v2933 = vld [vmem:[%s2927 + $0x28] sm:$0xff]
      %v2934 = vld [vmem:[%s2927 + $0x30] sm:$0xff]
      %v2935 = vld [vmem:[%s2927 + $0x38] sm:$0xff]
      %v2936 = vld [vmem:[%s2927 + $0x40] sm:$0xff]
      %v2937 = vld [vmem:[%s2927 + $0x48] sm:$0xff]
      %v2938 = vld [vmem:[%s2927 + $0x50] sm:$0xff]
      %v2939 = vld [vmem:[%s2927 + $0x58] sm:$0xff]
      %v2940 = vld [vmem:[%s2927 + $0x60] sm:$0xff]
      %v2941 = vld [vmem:[%s2927 + $0x68] sm:$0xff]
      %v2942 = vld [vmem:[%s2927 + $0x70] sm:$0xff]
      %v2943 = vld [vmem:[%s2927 + $0x78] sm:$0xff]
      %v2944 = vld [vmem:[%s2927 + $0x80] sm:$0xff]
      %v2945 = vld [vmem:[%s2927 + $0x88] sm:$0xff]
      %v2946 = vld [vmem:[%s2927 + $0x90] sm:$0xff]
      %v2947 = vld [vmem:[%s2927 + $0x98] sm:$0xff]
      %v2948 = vld [vmem:[%s2927 + $0xa0] sm:$0xff]
      %v2949 = vld [vmem:[%s2927 + $0xa8] sm:$0xff]
      %v2950 = vld [vmem:[%s2927 + $0xb0] sm:$0xff]
      %v2951 = vld [vmem:[%s2927 + $0xb8] sm:$0xff]
      %v2952 = vld [vmem:[%s2927 + $0xc0] sm:$0xff]
      %v2953 = vld [vmem:[%s2927 + $0xc8] sm:$0xff]
      %v2954 = vld [vmem:[%s2927 + $0xd0] sm:$0xff]
      %v2955 = vld [vmem:[%s2927 + $0xd8] sm:$0xff]
      %v2956 = vld [vmem:[%s2927 + $0xe0] sm:$0xff]
      %v2957 = vld [vmem:[%s2927 + $0xe8] sm:$0xff]
      %v2958 = vld [vmem:[%s2927 + $0xf0] sm:$0xff]
      %v2959 = vld [vmem:[%s2927 + $0xf8] sm:$0xff]
      %v2960 = vld [vmem:[%s2927 + $0x100] sm:$0xff]
      %v2961 = vld [vmem:[%s2927 + $0x108] sm:$0xff]
      %v2962 = vld [vmem:[%s2927 + $0x110] sm:$0xff]
      %v2963 = vld [vmem:[%s2927 + $0x118] sm:$0xff]
      %v2964 = vld [vmem:[%s2927 + $0x120] sm:$0xff]
      %v2965 = vld [vmem:[%s2927 + $0x128] sm:$0xff]
      %v2966 = vld [vmem:[%s2927 + $0x130] sm:$0xff]
      %v2967 = vld [vmem:[%s2927 + $0x138] sm:$0xff]
      %v2968 = vld [vmem:[%s2927 + $0x140] sm:$0xff]
      %v2969 = vld [vmem:[%s2927 + $0x148] sm:$0xff]
      %v2970 = vld [vmem:[%s2927 + $0x150] sm:$0xff]
      %v2971 = vld [vmem:[%s2927 + $0x158] sm:$0xff]
      %v2972 = vld [vmem:[%s2927 + $0x160] sm:$0xff]
      %v2973 = vld [vmem:[%s2927 + $0x168] sm:$0xff]
      %v2974 = vld [vmem:[%s2927 + $0x170] sm:$0xff]
      %v2975 = vld [vmem:[%s2927 + $0x178] sm:$0xff]
      %v2976 = vld [vmem:[%s2927 + $0x180] sm:$0xff]
      %v2977 = vld [vmem:[%s2927 + $0x188] sm:$0xff]
      %v2978 = vld [vmem:[%s2927 + $0x190] sm:$0xff]
      %v2979 = vld [vmem:[%s2927 + $0x198] sm:$0xff]
      %v2980 = vld [vmem:[%s2927 + $0x1a0] sm:$0xff]
      %v2981 = vld [vmem:[%s2927 + $0x1a8] sm:$0xff]
      %v2982 = vld [vmem:[%s2927 + $0x1b0] sm:$0xff]
      %v2983 = vld [vmem:[%s2927 + $0x1b8] sm:$0xff]
      %v2984 = vld [vmem:[%s2927 + $0x1c0] sm:$0xff]
      %v2985 = vld [vmem:[%s2927 + $0x1c8] sm:$0xff]
      %v2986 = vld [vmem:[%s2927 + $0x1d0] sm:$0xff]
      %v2987 = vld [vmem:[%s2927 + $0x1d8] sm:$0xff]
      %v2988 = vld [vmem:[%s2927 + $0x1e0] sm:$0xff]
      %v2989 = vld [vmem:[%s2927 + $0x1e8] sm:$0xff]
      %v2990 = vld [vmem:[%s2927 + $0x1f0] sm:$0xff]
      %v2991 = vld [vmem:[%s2927 + $0x1f8] sm:$0xff]
      %v2992 = vld [vmem:[%s2927 + $0x200] sm:$0xff]
      %v2993 = vld [vmem:[%s2927 + $0x208] sm:$0xff]
      %v2994 = vld [vmem:[%s2927 + $0x210] sm:$0xff]
      %v2995 = vld [vmem:[%s2927 + $0x218] sm:$0xff]
      %v2996 = vld [vmem:[%s2927 + $0x220] sm:$0xff]
      %v2997 = vld [vmem:[%s2927 + $0x228] sm:$0xff]
      %v2998 = vld [vmem:[%s2927 + $0x230] sm:$0xff]
      %v2999 = vld [vmem:[%s2927 + $0x238] sm:$0xff]
      %s3000 = scalar_lea.vmem %s2, 4
      %v3001 = vld [vmem:[%s3000] sm:$0x1]
      %3002 = vst.msk [vmem:[%s328 + $0x1] sm:$0xff] %vm225, %v2919
      %3003 = vst.msk [vmem:[%s328 + $0x11] sm:$0xff] %vm225, %v2920
      %3004 = vst.msk [vmem:[%s328 + $0x21] sm:$0xff] %vm225, %v2921
      %3005 = vst.msk [vmem:[%s328 + $0x31] sm:$0xff] %vm225, %v2922
      %3006 = vst.msk [vmem:[%s328 + $0x41] sm:$0xff] %vm225, %v2923
      %3007 = vst.msk [vmem:[%s328 + $0x51] sm:$0xff] %vm225, %v2924
      %3008 = vst.msk [vmem:[%s328 + $0x61] sm:$0xff] %vm225, %v2925
      %3009 = vst.msk [vmem:[%s328 + $0x71] sm:$0xff] %vm225, %v2926
      %v3010 = vld [vmem:[#allocation2] sm:$0xff]
      %v3011 = vld [vmem:[#allocation2 + $0x10] sm:$0xff]
      %v3012 = vld [vmem:[#allocation2 + $0x20] sm:$0xff]
      %v3013 = vld [vmem:[#allocation2 + $0x30] sm:$0xff]
      %v3014 = vld [vmem:[#allocation2 + $0x40] sm:$0xff]
      %v3015 = vld [vmem:[#allocation2 + $0x50] sm:$0xff]
      %v3016 = vld [vmem:[#allocation2 + $0x60] sm:$0xff]
      %v3017 = vld [vmem:[#allocation2 + $0x70] sm:$0xff]
      %v3018 = vld [vmem:[#allocation2 + $0x1] sm:$0xff]
      %v3019 = vld [vmem:[#allocation2 + $0x11] sm:$0xff]
      %v3020 = vld [vmem:[#allocation2 + $0x21] sm:$0xff]
      %v3021 = vld [vmem:[#allocation2 + $0x31] sm:$0xff]
      %v3022 = vld [vmem:[#allocation2 + $0x41] sm:$0xff]
      %v3023 = vld [vmem:[#allocation2 + $0x51] sm:$0xff]
      %v3024 = vld [vmem:[#allocation2 + $0x61] sm:$0xff]
      %v3025 = vld [vmem:[#allocation2 + $0x71] sm:$0xff]
      %v3026 = vld [vmem:[#allocation2 + $0x2] sm:$0xff]
      %v3027 = vld [vmem:[#allocation2 + $0x12] sm:$0xff]
      %v3028 = vld [vmem:[#allocation2 + $0x22] sm:$0xff]
      %v3029 = vld [vmem:[#allocation2 + $0x32] sm:$0xff]
      %v3030 = vld [vmem:[#allocation2 + $0x42] sm:$0xff]
      %v3031 = vld [vmem:[#allocation2 + $0x52] sm:$0xff]
      %v3032 = vld [vmem:[#allocation2 + $0x62] sm:$0xff]
      %v3033 = vld [vmem:[#allocation2 + $0x72] sm:$0xff]
      %v3034 = vld [vmem:[%s328] sm:$0xff]
      %v3035 = vld [vmem:[%s328 + $0x10] sm:$0xff]
      %v3036 = vld [vmem:[%s328 + $0x20] sm:$0xff]
      %v3037 = vld [vmem:[%s328 + $0x30] sm:$0xff]
      %v3038 = vld [vmem:[%s328 + $0x40] sm:$0xff]
      %v3039 = vld [vmem:[%s328 + $0x50] sm:$0xff]
      %v3040 = vld [vmem:[%s328 + $0x60] sm:$0xff]
      %v3041 = vld [vmem:[%s328 + $0x70] sm:$0xff]
      %v3042 = vld [vmem:[%s328 + $0x1] sm:$0xff]
      %v3043 = vld [vmem:[%s328 + $0x11] sm:$0xff]
      %v3044 = vld [vmem:[%s328 + $0x21] sm:$0xff]
      %v3045 = vld [vmem:[%s328 + $0x31] sm:$0xff]
      %v3046 = vld [vmem:[%s328 + $0x41] sm:$0xff]
      %v3047 = vld [vmem:[%s328 + $0x51] sm:$0xff]
      %v3048 = vld [vmem:[%s328 + $0x61] sm:$0xff]
      %v3049 = vld [vmem:[%s328 + $0x71] sm:$0xff]
      %v3050 = vld [vmem:[%s328 + $0x2] sm:$0xff]
      %v3051 = vld [vmem:[%s328 + $0x12] sm:$0xff]
      %v3052 = vld [vmem:[%s328 + $0x22] sm:$0xff]
      %v3053 = vld [vmem:[%s328 + $0x32] sm:$0xff]
      %v3054 = vld [vmem:[%s328 + $0x42] sm:$0xff]
      %v3055 = vld [vmem:[%s328 + $0x52] sm:$0xff]
      %v3056 = vld [vmem:[%s328 + $0x62] sm:$0xff]
      %v3057 = vld [vmem:[%s328 + $0x72] sm:$0xff]
      %v3058 = vld [vmem:[%s385] sm:$0xff]
      %v3059 = vld [vmem:[%s385 + $0x10] sm:$0xff]
      %v3060 = vld [vmem:[%s385 + $0x20] sm:$0xff]
      %v3061 = vld [vmem:[%s385 + $0x30] sm:$0xff]
      %v3062 = vld [vmem:[%s385 + $0x40] sm:$0xff]
      %v3063 = vld [vmem:[%s385 + $0x50] sm:$0xff]
      %v3064 = vld [vmem:[%s385 + $0x60] sm:$0xff]
      %v3065 = vld [vmem:[%s385 + $0x70] sm:$0xff]
      %v3066 = vld [vmem:[%s385 + $0x1] sm:$0xff]
      %v3067 = vld [vmem:[%s385 + $0x11] sm:$0xff]
      %v3068 = vld [vmem:[%s385 + $0x21] sm:$0xff]
      %v3069 = vld [vmem:[%s385 + $0x31] sm:$0xff]
      %v3070 = vld [vmem:[%s385 + $0x41] sm:$0xff]
      %v3071 = vld [vmem:[%s385 + $0x51] sm:$0xff]
      %v3072 = vld [vmem:[%s385 + $0x61] sm:$0xff]
      %v3073 = vld [vmem:[%s385 + $0x71] sm:$0xff]
      %v3074 = vld [vmem:[%s385 + $0x2] sm:$0xff]
      %v3075 = vld [vmem:[%s385 + $0x12] sm:$0xff]
      %v3076 = vld [vmem:[%s385 + $0x22] sm:$0xff]
      %v3077 = vld [vmem:[%s385 + $0x32] sm:$0xff]
      %v3078 = vld [vmem:[%s385 + $0x42] sm:$0xff]
      %v3079 = vld [vmem:[%s385 + $0x52] sm:$0xff]
      %v3080 = vld [vmem:[%s385 + $0x62] sm:$0xff]
      %v3081 = vld [vmem:[%s385 + $0x72] sm:$0xff]
      %3090 = vrot.lane.b32.xlu0 %v3018, 64
      %v3091 = vpop.permute.xlu0 %3090
      %3092 = vrot.lane.b32.xlu0 %v3019, 64
      %v3093 = vpop.permute.xlu0 %3092
      %3094 = vrot.lane.b32.xlu0 %v3020, 64
      %v3095 = vpop.permute.xlu0 %3094
      %3096 = vrot.lane.b32.xlu0 %v3021, 64
      %v3097 = vpop.permute.xlu0 %3096
      %3098 = vrot.lane.b32.xlu0 %v3022, 64
      %v3099 = vpop.permute.xlu0 %3098
      %3100 = vrot.lane.b32.xlu0 %v3023, 64
      %v3101 = vpop.permute.xlu0 %3100
      %3102 = vrot.lane.b32.xlu0 %v3024, 64
      %v3103 = vpop.permute.xlu0 %3102
      %3104 = vrot.lane.b32.xlu0 %v3025, 64
      %v3105 = vpop.permute.xlu0 %3104
      %3122 = vrot.lane.b32.xlu0 %v3034, 64
      %v3123 = vpop.permute.xlu0 %3122
      %3124 = vrot.lane.b32.xlu0 %v3035, 64
      %v3125 = vpop.permute.xlu0 %3124
      %3126 = vrot.lane.b32.xlu0 %v3036, 64
      %v3127 = vpop.permute.xlu0 %3126
      %3128 = vrot.lane.b32.xlu0 %v3037, 64
      %v3129 = vpop.permute.xlu0 %3128
      %3130 = vrot.lane.b32.xlu0 %v3038, 64
      %v3131 = vpop.permute.xlu0 %3130
      %3132 = vrot.lane.b32.xlu0 %v3039, 64
      %v3133 = vpop.permute.xlu0 %3132
      %3134 = vrot.lane.b32.xlu0 %v3040, 64
      %v3135 = vpop.permute.xlu0 %3134
      %3136 = vrot.lane.b32.xlu0 %v3041, 64
      %v3137 = vpop.permute.xlu0 %3136
      %3154 = vrot.lane.b32.xlu0 %v3050, 64
      %v3155 = vpop.permute.xlu0 %3154
      %3156 = vrot.lane.b32.xlu0 %v3051, 64
      %v3157 = vpop.permute.xlu0 %3156
      %3158 = vrot.lane.b32.xlu0 %v3052, 64
      %v3159 = vpop.permute.xlu0 %3158
      %3160 = vrot.lane.b32.xlu0 %v3053, 64
      %v3161 = vpop.permute.xlu0 %3160
      %3162 = vrot.lane.b32.xlu0 %v3054, 64
      %v3163 = vpop.permute.xlu0 %3162
      %3164 = vrot.lane.b32.xlu0 %v3055, 64
      %v3165 = vpop.permute.xlu0 %3164
      %3166 = vrot.lane.b32.xlu0 %v3056, 64
      %v3167 = vpop.permute.xlu0 %3166
      %3168 = vrot.lane.b32.xlu0 %v3057, 64
      %v3169 = vpop.permute.xlu0 %3168
      %3186 = vrot.lane.b32.xlu0 %v3066, 64
      %v3187 = vpop.permute.xlu0 %3186
      %3188 = vrot.lane.b32.xlu0 %v3067, 64
      %v3189 = vpop.permute.xlu0 %3188
      %3190 = vrot.lane.b32.xlu0 %v3068, 64
      %v3191 = vpop.permute.xlu0 %3190
      %3192 = vrot.lane.b32.xlu0 %v3069, 64
      %v3193 = vpop.permute.xlu0 %3192
      %3194 = vrot.lane.b32.xlu0 %v3070, 64
      %v3195 = vpop.permute.xlu0 %3194
      %3196 = vrot.lane.b32.xlu0 %v3071, 64
      %v3197 = vpop.permute.xlu0 %3196
      %3198 = vrot.lane.b32.xlu0 %v3072, 64
      %v3199 = vpop.permute.xlu0 %3198
      %3200 = vrot.lane.b32.xlu0 %v3073, 64
      %v3201 = vpop.permute.xlu0 %3200
      %v3210 = vsel %vm225, %v3010, %v3091
      %v3211 = vsel %vm225, %v3011, %v3093
      %v3212 = vsel %vm225, %v3012, %v3095
      %v3213 = vsel %vm225, %v3013, %v3097
      %v3214 = vsel %vm225, %v3014, %v3099
      %v3215 = vsel %vm225, %v3015, %v3101
      %v3216 = vsel %vm225, %v3016, %v3103
      %v3217 = vsel %vm225, %v3017, %v3105
      %v3218 = vsel %vm225, %v3026, %v3123
      %v3219 = vsel %vm225, %v3027, %v3125
      %v3220 = vsel %vm225, %v3028, %v3127
      %v3221 = vsel %vm225, %v3029, %v3129
      %v3222 = vsel %vm225, %v3030, %v3131
      %v3223 = vsel %vm225, %v3031, %v3133
      %v3224 = vsel %vm225, %v3032, %v3135
      %v3225 = vsel %vm225, %v3033, %v3137
      %v3226 = vsel %vm225, %v3042, %v3155
      %v3227 = vsel %vm225, %v3043, %v3157
      %v3228 = vsel %vm225, %v3044, %v3159
      %v3229 = vsel %vm225, %v3045, %v3161
      %v3230 = vsel %vm225, %v3046, %v3163
      %v3231 = vsel %vm225, %v3047, %v3165
      %v3232 = vsel %vm225, %v3048, %v3167
      %v3233 = vsel %vm225, %v3049, %v3169
      %v3234 = vsel %vm225, %v3058, %v3187
      %v3235 = vsel %vm225, %v3059, %v3189
      %v3236 = vsel %vm225, %v3060, %v3191
      %v3237 = vsel %vm225, %v3061, %v3193
      %v3238 = vsel %vm225, %v3062, %v3195
      %v3239 = vsel %vm225, %v3063, %v3197
      %v3240 = vsel %vm225, %v3064, %v3199
      %v3241 = vsel %vm225, %v3065, %v3201
      %v3243 = vlaneseq
      %v3244 = vshrl.u32 %v3243, 7
      %v3245 = vsub.s32 0, %v3244
      %v3246 = vrot.slane %v3001, %v3245
      %v3249 = vsel %vm225, %v3074, 0
      %v3252 = vsel %vm225, %v3075, 0
      %v3255 = vsel %vm225, %v3076, 0
      %v3258 = vsel %vm225, %v3077, 0
      %v3261 = vsel %vm225, %v3078, 0
      %v3264 = vsel %vm225, %v3079, 0
      %v3267 = vsel %vm225, %v3080, 0
      %v3270 = vsel %vm225, %v3081, 0
      %3272 = vmatprep.subr.mxu0 0.0
      %3273 = vmatpush1.msra.mxu0 %v2928
      %3274 = vmatprep.subr.mxu0 0.0
      %3275 = vmatpush1.msra.mxu0 %v2929
      %3276 = vmatprep.subr.mxu0 0.0
      %3277 = vmatpush1.msra.mxu0 %v2930
      %3278 = vmatprep.subr.mxu0 0.0
      %3279 = vmatpush1.msra.mxu0 %v2931
      %3280 = vmatprep.subr.mxu0 0.0
      %3281 = vmatpush1.msra.mxu0 %v2932
      %3282 = vmatprep.subr.mxu0 0.0
      %3283 = vmatpush1.msra.mxu0 %v2933
      %3284 = vmatprep.subr.mxu0 0.0
      %3285 = vmatpush1.msra.mxu0 %v2934
      %3286 = vmatprep.subr.mxu0 0.0
      %3287 = vmatpush1.msra.mxu0 %v2935
      %3288 = vmatprep.subr.mxu0 0.0
      %3289 = vmatpush1.msra.mxu0 %v2936
      %3290 = vmatprep.subr.mxu0 0.0
      %3291 = vmatpush1.msra.mxu0 %v2937
      %3292 = vmatprep.subr.mxu0 0.0
      %3293 = vmatpush1.msra.mxu0 %v2938
      %3294 = vmatprep.subr.mxu0 0.0
      %3295 = vmatpush1.msra.mxu0 %v2939
      %3296 = vmatprep.subr.mxu0 0.0
      %3297 = vmatpush1.msra.mxu0 %v2940
      %3298 = vmatprep.subr.mxu0 0.0
      %3299 = vmatpush1.msra.mxu0 %v2941
      %3300 = vmatprep.subr.mxu0 0.0
      %3301 = vmatpush1.msra.mxu0 %v2942
      %3302 = vmatprep.subr.mxu0 0.0
      %3303 = vmatpush1.msra.mxu0 %v2943
      %3304 = vmatprep.subr.mxu0 0.0
      %3305 = vmatpush1.msra.mxu0 %v2944
      %3306 = vmatprep.subr.mxu0 0.0
      %3307 = vmatpush1.msra.mxu0 %v2945
      %3308 = vmatprep.subr.mxu0 0.0
      %3309 = vmatpush1.msra.mxu0 %v2946
      %3310 = vmatprep.subr.mxu0 0.0
      %3311 = vmatpush1.msra.mxu0 %v2947
      %3312 = vmatprep.subr.mxu0 0.0
      %3313 = vmatpush1.msra.mxu0 %v2948
      %3314 = vmatprep.subr.mxu0 0.0
      %3315 = vmatpush1.msra.mxu0 %v2949
      %3316 = vmatprep.subr.mxu0 0.0
      %3317 = vmatpush1.msra.mxu0 %v2950
      %3318 = vmatprep.subr.mxu0 0.0
      %3319 = vmatpush1.msra.mxu0 %v2951
      %3320 = vmatprep.subr.mxu0 0.0
      %3321 = vmatpush1.msra.mxu0 %v2952
      %3322 = vmatprep.subr.mxu0 0.0
      %3323 = vmatpush1.msra.mxu0 %v2953
      %3324 = vmatprep.subr.mxu0 0.0
      %3325 = vmatpush1.msra.mxu0 %v2954
      %3326 = vmatprep.subr.mxu0 0.0
      %3327 = vmatpush1.msra.mxu0 %v2955
      %3328 = vmatprep.subr.mxu0 0.0
      %3329 = vmatpush1.msra.mxu0 %v2956
      %3330 = vmatprep.subr.mxu0 0.0
      %3331 = vmatpush1.msra.mxu0 %v2957
      %3332 = vmatprep.subr.mxu0 0.0
      %3333 = vmatpush1.msra.mxu0 %v2958
      %3334 = vmatprep.subr.mxu0 0.0
      %3335 = vmatpush1.msra.mxu0 %v2959
      %3336 = vmatprep.mubr.f32.mxu0 %v3218
      %3337 = vmatmul.mubr.f32.gmra.mrb[0].mxu0 %v3210
      %v3338 = vpop.f32.mrb[0].mxu0
      %v3339 = vadd.f32 %v3246, %v3338
      %v3340 = vpop.f32.mrb[0].mxu0
      %3341 = vmatprep.mubr.f32.mxu0 %v3219
      %3342 = vmatmul.mubr.f32.gmra.mrb[0].mxu0 %v3211
      %v3343 = vpop.f32.mrb[0].mxu0
      %v3344 = vadd.f32 %v3246, %v3343
      %v3345 = vpop.f32.mrb[0].mxu0
      %3346 = vmatprep.mubr.f32.mxu0 %v3220
      %3347 = vmatmul.mubr.f32.gmra.mrb[0].mxu0 %v3212
      %v3348 = vpop.f32.mrb[0].mxu0
      %v3349 = vadd.f32 %v3246, %v3348
      %v3350 = vpop.f32.mrb[0].mxu0
      %3351 = vmatprep.mubr.f32.mxu0 %v3221
      %3352 = vmatmul.mubr.f32.gmra.mrb[0].mxu0 %v3213
      %v3353 = vpop.f32.mrb[0].mxu0
      %v3354 = vadd.f32 %v3246, %v3353
      %v3355 = vpop.f32.mrb[0].mxu0
      %3356 = vmatprep.mubr.f32.mxu0 %v3222
      %3357 = vmatmul.mubr.f32.gmra.mrb[0].mxu0 %v3214
      %v3358 = vpop.f32.mrb[0].mxu0
      %v3359 = vadd.f32 %v3246, %v3358
      %v3360 = vpop.f32.mrb[0].mxu0
      %3361 = vmatprep.mubr.f32.mxu0 %v3223
      %3362 = vmatmul.mubr.f32.gmra.mrb[0].mxu0 %v3215
      %v3363 = vpop.f32.mrb[0].mxu0
      %v3364 = vadd.f32 %v3246, %v3363
      %v3365 = vpop.f32.mrb[0].mxu0
      %3366 = vmatprep.mubr.f32.mxu0 %v3224
      %3367 = vmatmul.mubr.f32.gmra.mrb[0].mxu0 %v3216
      %v3368 = vpop.f32.mrb[0].mxu0
      %v3369 = vadd.f32 %v3246, %v3368
      %v3370 = vpop.f32.mrb[0].mxu0
      %3371 = vmatprep.mubr.f32.mxu0 %v3225
      %3372 = vmatmul.mubr.f32.gmra.mrb[0].mxu0 %v3217
      %v3373 = vpop.f32.mrb[0].mxu0
      %v3374 = vadd.f32 %v3246, %v3373
      %v3375 = vpop.f32.mrb[0].mxu0
      %3376 = vdwg.mxu0
      %3377 = vmatprep.subr.mxu0 0.0
      %3378 = vmatpush1.msra.mxu0 %v2960
      %3379 = vmatprep.subr.mxu0 0.0
      %3380 = vmatpush1.msra.mxu0 %v2961
      %3381 = vmatprep.subr.mxu0 0.0
      %3382 = vmatpush1.msra.mxu0 %v2962
      %3383 = vmatprep.subr.mxu0 0.0
      %3384 = vmatpush1.msra.mxu0 %v2963
      %3385 = vmatprep.subr.mxu0 0.0
      %3386 = vmatpush1.msra.mxu0 %v2964
      %3387 = vmatprep.subr.mxu0 0.0
      %3388 = vmatpush1.msra.mxu0 %v2965
      %3389 = vmatprep.subr.mxu0 0.0
      %3390 = vmatpush1.msra.mxu0 %v2966
      %3391 = vmatprep.subr.mxu0 0.0
      %3392 = vmatpush1.msra.mxu0 %v2967
      %3393 = vmatprep.subr.mxu0 0.0
      %3394 = vmatpush1.msra.mxu0 %v2968
      %3395 = vmatprep.subr.mxu0 0.0
      %3396 = vmatpush1.msra.mxu0 %v2969
      %3397 = vmatprep.subr.mxu0 0.0
      %3398 = vmatpush1.msra.mxu0 %v2970
      %3399 = vmatprep.subr.mxu0 0.0
      %3400 = vmatpush1.msra.mxu0 %v2971
      %3401 = vmatprep.subr.mxu0 0.0
      %3402 = vmatpush1.msra.mxu0 %v2972
      %3403 = vmatprep.subr.mxu0 0.0
      %3404 = vmatpush1.msra.mxu0 %v2973
      %3405 = vmatprep.subr.mxu0 0.0
      %3406 = vmatpush1.msra.mxu0 %v2974
      %3407 = vmatprep.subr.mxu0 0.0
      %3408 = vmatpush1.msra.mxu0 %v2975
      %3409 = vmatprep.subr.mxu0 0.0
      %3410 = vmatpush1.msra.mxu0 %v2976
      %3411 = vmatprep.subr.mxu0 0.0
      %3412 = vmatpush1.msra.mxu0 %v2977
      %3413 = vmatprep.subr.mxu0 0.0
      %3414 = vmatpush1.msra.mxu0 %v2978
      %3415 = vmatprep.subr.mxu0 0.0
      %3416 = vmatpush1.msra.mxu0 %v2979
      %3417 = vmatprep.subr.mxu0 0.0
      %3418 = vmatpush1.msra.mxu0 %v2980
      %3419 = vmatprep.subr.mxu0 0.0
      %3420 = vmatpush1.msra.mxu0 %v2981
      %3421 = vmatprep.subr.mxu0 0.0
      %3422 = vmatpush1.msra.mxu0 %v2982
      %3423 = vmatprep.subr.mxu0 0.0
      %3424 = vmatpush1.msra.mxu0 %v2983
      %3425 = vmatprep.subr.mxu0 0.0
      %3426 = vmatpush1.msra.mxu0 %v2984
      %3427 = vmatprep.subr.mxu0 0.0
      %3428 = vmatpush1.msra.mxu0 %v2985
      %3429 = vmatprep.subr.mxu0 0.0
      %3430 = vmatpush1.msra.mxu0 %v2986
      %3431 = vmatprep.subr.mxu0 0.0
      %3432 = vmatpush1.msra.mxu0 %v2987
      %3433 = vmatprep.subr.mxu0 0.0
      %3434 = vmatpush1.msra.mxu0 %v2988
      %3435 = vmatprep.subr.mxu0 0.0
      %3436 = vmatpush1.msra.mxu0 %v2989
      %3437 = vmatprep.subr.mxu0 0.0
      %3438 = vmatpush1.msra.mxu0 %v2990
      %3439 = vmatprep.subr.mxu0 0.0
      %3440 = vmatpush1.msra.mxu0 %v2991
      %3441 = vmatprep.mubr.f32.mxu0 %v3234
      %3442 = vmatmul.mubr.f32.gmra.mrb[0].mxu0 %v3226
      %v3443 = vpop.f32.mrb[0].mxu0
      %v3444 = vadd.f32 %v3339, %v3443
      %v3445 = vpop.f32.mrb[0].mxu0
      %3446 = vmatprep.mubr.f32.mxu0 %v3235
      %3447 = vmatmul.mubr.f32.gmra.mrb[0].mxu0 %v3227
      %v3448 = vpop.f32.mrb[0].mxu0
      %v3449 = vadd.f32 %v3344, %v3448
      %v3450 = vpop.f32.mrb[0].mxu0
      %3451 = vmatprep.mubr.f32.mxu0 %v3236
      %3452 = vmatmul.mubr.f32.gmra.mrb[0].mxu0 %v3228
      %v3453 = vpop.f32.mrb[0].mxu0
      %v3454 = vadd.f32 %v3349, %v3453
      %v3455 = vpop.f32.mrb[0].mxu0
      %3456 = vmatprep.mubr.f32.mxu0 %v3237
      %3457 = vmatmul.mubr.f32.gmra.mrb[0].mxu0 %v3229
      %v3458 = vpop.f32.mrb[0].mxu0
      %v3459 = vadd.f32 %v3354, %v3458
      %v3460 = vpop.f32.mrb[0].mxu0
      %3461 = vmatprep.mubr.f32.mxu0 %v3238
      %3462 = vmatmul.mubr.f32.gmra.mrb[0].mxu0 %v3230
      %v3463 = vpop.f32.mrb[0].mxu0
      %v3464 = vadd.f32 %v3359, %v3463
      %v3465 = vpop.f32.mrb[0].mxu0
      %3466 = vmatprep.mubr.f32.mxu0 %v3239
      %3467 = vmatmul.mubr.f32.gmra.mrb[0].mxu0 %v3231
      %v3468 = vpop.f32.mrb[0].mxu0
      %v3469 = vadd.f32 %v3364, %v3468
      %v3470 = vpop.f32.mrb[0].mxu0
      %3471 = vmatprep.mubr.f32.mxu0 %v3240
      %3472 = vmatmul.mubr.f32.gmra.mrb[0].mxu0 %v3232
      %v3473 = vpop.f32.mrb[0].mxu0
      %v3474 = vadd.f32 %v3369, %v3473
      %v3475 = vpop.f32.mrb[0].mxu0
      %3476 = vmatprep.mubr.f32.mxu0 %v3241
      %3477 = vmatmul.mubr.f32.gmra.mrb[0].mxu0 %v3233
      %v3478 = vpop.f32.mrb[0].mxu0
      %v3479 = vadd.f32 %v3374, %v3478
      %v3480 = vpop.f32.mrb[0].mxu0
      %3481 = vdwg.mxu0
      %3482 = vmatprep.subr.mxu0 0.0
      %3483 = vmatpush1.msra.mxu0 %v2992
      %3484 = vmatprep.subr.mxu0 0.0
      %3485 = vmatpush1.msra.mxu0 %v2993
      %3486 = vmatprep.subr.mxu0 0.0
      %3487 = vmatpush1.msra.mxu0 %v2994
      %3488 = vmatprep.subr.mxu0 0.0
      %3489 = vmatpush1.msra.mxu0 %v2995
      %3490 = vmatprep.subr.mxu0 0.0
      %3491 = vmatpush1.msra.mxu0 %v2996
      %3492 = vmatprep.subr.mxu0 0.0
      %3493 = vmatpush1.msra.mxu0 %v2997
      %3494 = vmatprep.subr.mxu0 0.0
      %3495 = vmatpush1.msra.mxu0 %v2998
      %3496 = vmatprep.subr.mxu0 0.0
      %3497 = vmatpush1.msra.mxu0 %v2999
      %3498 = vmatprep.subr.mxu0 0.0
      %3499 = vmatpush1.msra.mxu0 0.0
      %3500 = vmatprep.subr.mxu0 0.0
      %3501 = vmatpush1.msra.mxu0 0.0
      %3502 = vmatprep.subr.mxu0 0.0
      %3503 = vmatpush1.msra.mxu0 0.0
      %3504 = vmatprep.subr.mxu0 0.0
      %3505 = vmatpush1.msra.mxu0 0.0
      %3506 = vmatprep.subr.mxu0 0.0
      %3507 = vmatpush1.msra.mxu0 0.0
      %3508 = vmatprep.subr.mxu0 0.0
      %3509 = vmatpush1.msra.mxu0 0.0
      %3510 = vmatprep.subr.mxu0 0.0
      %3511 = vmatpush1.msra.mxu0 0.0
      %3512 = vmatprep.subr.mxu0 0.0
      %3513 = vmatpush1.msra.mxu0 0.0
      %3514 = vmatprep.subr.mxu0 0.0
      %3515 = vmatpush1.msra.mxu0 0.0
      %3516 = vmatprep.subr.mxu0 0.0
      %3517 = vmatpush1.msra.mxu0 0.0
      %3518 = vmatprep.subr.mxu0 0.0
      %3519 = vmatpush1.msra.mxu0 0.0
      %3520 = vmatprep.subr.mxu0 0.0
      %3521 = vmatpush1.msra.mxu0 0.0
      %3522 = vmatprep.subr.mxu0 0.0
      %3523 = vmatpush1.msra.mxu0 0.0
      %3524 = vmatprep.subr.mxu0 0.0
      %3525 = vmatpush1.msra.mxu0 0.0
      %3526 = vmatprep.subr.mxu0 0.0
      %3527 = vmatpush1.msra.mxu0 0.0
      %3528 = vmatprep.subr.mxu0 0.0
      %3529 = vmatpush1.msra.mxu0 0.0
      %3530 = vmatprep.subr.mxu0 0.0
      %3531 = vmatpush1.msra.mxu0 0.0
      %3532 = vmatprep.subr.mxu0 0.0
      %3533 = vmatpush1.msra.mxu0 0.0
      %3534 = vmatprep.subr.mxu0 0.0
      %3535 = vmatpush1.msra.mxu0 0.0
      %3536 = vmatprep.subr.mxu0 0.0
      %3537 = vmatpush1.msra.mxu0 0.0
      %3538 = vmatprep.subr.mxu0 0.0
      %3539 = vmatpush1.msra.mxu0 0.0
      %3540 = vmatprep.subr.mxu0 0.0
      %3541 = vmatpush1.msra.mxu0 0.0
      %3542 = vmatprep.subr.mxu0 0.0
      %3543 = vmatpush1.msra.mxu0 0.0
      %3544 = vmatprep.subr.mxu0 0.0
      %3545 = vmatpush1.msra.mxu0 0.0
      %3546 = vmatprep.mubr.f32.mxu0 0.0
      %3547 = vmatmul.mubr.f32.gmra.mrb[0].mxu0 %v3249
      %v3548 = vpop.f32.mrb[0].mxu0
      %v3549 = vadd.f32 %v3444, %v3548
      %v3550 = vpop.f32.mrb[0].mxu0
      %3551 = vmatprep.mubr.f32.mxu0 0.0
      %3552 = vmatmul.mubr.f32.gmra.mrb[0].mxu0 %v3252
      %v3553 = vpop.f32.mrb[0].mxu0
      %v3554 = vadd.f32 %v3449, %v3553
      %v3555 = vpop.f32.mrb[0].mxu0
      %3556 = vmatprep.mubr.f32.mxu0 0.0
      %3557 = vmatmul.mubr.f32.gmra.mrb[0].mxu0 %v3255
      %v3558 = vpop.f32.mrb[0].mxu0
      %v3559 = vadd.f32 %v3454, %v3558
      %v3560 = vpop.f32.mrb[0].mxu0
      %3561 = vmatprep.mubr.f32.mxu0 0.0
      %3562 = vmatmul.mubr.f32.gmra.mrb[0].mxu0 %v3258
      %v3563 = vpop.f32.mrb[0].mxu0
      %v3564 = vadd.f32 %v3459, %v3563
      %v3565 = vpop.f32.mrb[0].mxu0
      %3566 = vmatprep.mubr.f32.mxu0 0.0
      %3567 = vmatmul.mubr.f32.gmra.mrb[0].mxu0 %v3261
      %v3568 = vpop.f32.mrb[0].mxu0
      %v3569 = vadd.f32 %v3464, %v3568
      %v3570 = vpop.f32.mrb[0].mxu0
      %3571 = vmatprep.mubr.f32.mxu0 0.0
      %3572 = vmatmul.mubr.f32.gmra.mrb[0].mxu0 %v3264
      %v3573 = vpop.f32.mrb[0].mxu0
      %v3574 = vadd.f32 %v3469, %v3573
      %v3575 = vpop.f32.mrb[0].mxu0
      %3576 = vmatprep.mubr.f32.mxu0 0.0
      %3577 = vmatmul.mubr.f32.gmra.mrb[0].mxu0 %v3267
      %v3578 = vpop.f32.mrb[0].mxu0
      %v3579 = vadd.f32 %v3474, %v3578
      %v3580 = vpop.f32.mrb[0].mxu0
      %3581 = vmatprep.mubr.f32.mxu0 0.0
      %3582 = vmatmul.mubr.f32.gmra.mrb[0].mxu0 %v3270
      %v3583 = vpop.f32.mrb[0].mxu0
      %v3584 = vadd.f32 %v3479, %v3583
      %v3585 = vpop.f32.mrb[0].mxu0
      %3586 = vdwg.mxu0
      %v3587 = vmax.f32 %v3549, 0.0
      %v3588 = vmax.f32 %v3554, 0.0
      %v3589 = vmax.f32 %v3559, 0.0
      %v3590 = vmax.f32 %v3564, 0.0
      %v3591 = vmax.f32 %v3569, 0.0
      %v3592 = vmax.f32 %v3574, 0.0
      %v3593 = vmax.f32 %v3579, 0.0
      %v3594 = vmax.f32 %v3584, 0.0
      %s3595 = scalar_lea.vmem %s1, 2880
      %v3596 = vld [vmem:[%s3595] sm:$0xff]
      %v3597 = vld [vmem:[%s3595 + $0x8] sm:$0xff]
      %v3598 = vld [vmem:[%s3595 + $0x10] sm:$0xff]
      %v3599 = vld [vmem:[%s3595 + $0x18] sm:$0xff]
      %v3600 = vld [vmem:[%s3595 + $0x20] sm:$0xff]
      %v3601 = vld [vmem:[%s3595 + $0x28] sm:$0xff]
      %v3602 = vld [vmem:[%s3595 + $0x30] sm:$0xff]
      %v3603 = vld [vmem:[%s3595 + $0x38] sm:$0xff]
      %v3604 = vld [vmem:[%s3595 + $0x40] sm:$0xff]
      %v3605 = vld [vmem:[%s3595 + $0x48] sm:$0xff]
      %v3606 = vld [vmem:[%s3595 + $0x50] sm:$0xff]
      %v3607 = vld [vmem:[%s3595 + $0x58] sm:$0xff]
      %v3608 = vld [vmem:[%s3595 + $0x60] sm:$0xff]
      %v3609 = vld [vmem:[%s3595 + $0x68] sm:$0xff]
      %v3610 = vld [vmem:[%s3595 + $0x70] sm:$0xff]
      %v3611 = vld [vmem:[%s3595 + $0x78] sm:$0xff]
      %v3612 = vld [vmem:[%s3595 + $0x80] sm:$0xff]
      %v3613 = vld [vmem:[%s3595 + $0x88] sm:$0xff]
      %v3614 = vld [vmem:[%s3595 + $0x90] sm:$0xff]
      %v3615 = vld [vmem:[%s3595 + $0x98] sm:$0xff]
      %v3616 = vld [vmem:[%s3595 + $0xa0] sm:$0xff]
      %v3617 = vld [vmem:[%s3595 + $0xa8] sm:$0xff]
      %v3618 = vld [vmem:[%s3595 + $0xb0] sm:$0xff]
      %v3619 = vld [vmem:[%s3595 + $0xb8] sm:$0xff]
      %v3620 = vld [vmem:[%s3595 + $0xc0] sm:$0xff]
      %v3621 = vld [vmem:[%s3595 + $0xc8] sm:$0xff]
      %v3622 = vld [vmem:[%s3595 + $0xd0] sm:$0xff]
      %v3623 = vld [vmem:[%s3595 + $0xd8] sm:$0xff]
      %v3624 = vld [vmem:[%s3595 + $0xe0] sm:$0xff]
      %v3625 = vld [vmem:[%s3595 + $0xe8] sm:$0xff]
      %v3626 = vld [vmem:[%s3595 + $0xf0] sm:$0xff]
      %v3627 = vld [vmem:[%s3595 + $0xf8] sm:$0xff]
      %v3628 = vld [vmem:[%s3595 + $0x100] sm:$0xff]
      %v3629 = vld [vmem:[%s3595 + $0x108] sm:$0xff]
      %v3630 = vld [vmem:[%s3595 + $0x110] sm:$0xff]
      %v3631 = vld [vmem:[%s3595 + $0x118] sm:$0xff]
      %v3632 = vld [vmem:[%s3595 + $0x120] sm:$0xff]
      %v3633 = vld [vmem:[%s3595 + $0x128] sm:$0xff]
      %v3634 = vld [vmem:[%s3595 + $0x130] sm:$0xff]
      %v3635 = vld [vmem:[%s3595 + $0x138] sm:$0xff]
      %v3636 = vld [vmem:[%s3595 + $0x140] sm:$0xff]
      %v3637 = vld [vmem:[%s3595 + $0x148] sm:$0xff]
      %v3638 = vld [vmem:[%s3595 + $0x150] sm:$0xff]
      %v3639 = vld [vmem:[%s3595 + $0x158] sm:$0xff]
      %v3640 = vld [vmem:[%s3595 + $0x160] sm:$0xff]
      %v3641 = vld [vmem:[%s3595 + $0x168] sm:$0xff]
      %v3642 = vld [vmem:[%s3595 + $0x170] sm:$0xff]
      %v3643 = vld [vmem:[%s3595 + $0x178] sm:$0xff]
      %v3644 = vld [vmem:[%s3595 + $0x180] sm:$0xff]
      %v3645 = vld [vmem:[%s3595 + $0x188] sm:$0xff]
      %v3646 = vld [vmem:[%s3595 + $0x190] sm:$0xff]
      %v3647 = vld [vmem:[%s3595 + $0x198] sm:$0xff]
      %v3648 = vld [vmem:[%s3595 + $0x1a0] sm:$0xff]
      %v3649 = vld [vmem:[%s3595 + $0x1a8] sm:$0xff]
      %v3650 = vld [vmem:[%s3595 + $0x1b0] sm:$0xff]
      %v3651 = vld [vmem:[%s3595 + $0x1b8] sm:$0xff]
      %v3652 = vld [vmem:[%s3595 + $0x1c0] sm:$0xff]
      %v3653 = vld [vmem:[%s3595 + $0x1c8] sm:$0xff]
      %v3654 = vld [vmem:[%s3595 + $0x1d0] sm:$0xff]
      %v3655 = vld [vmem:[%s3595 + $0x1d8] sm:$0xff]
      %v3656 = vld [vmem:[%s3595 + $0x1e0] sm:$0xff]
      %v3657 = vld [vmem:[%s3595 + $0x1e8] sm:$0xff]
      %v3658 = vld [vmem:[%s3595 + $0x1f0] sm:$0xff]
      %v3659 = vld [vmem:[%s3595 + $0x1f8] sm:$0xff]
      %v3660 = vld [vmem:[%s3595 + $0x200] sm:$0xff]
      %v3661 = vld [vmem:[%s3595 + $0x208] sm:$0xff]
      %v3662 = vld [vmem:[%s3595 + $0x210] sm:$0xff]
      %v3663 = vld [vmem:[%s3595 + $0x218] sm:$0xff]
      %v3664 = vld [vmem:[%s3595 + $0x220] sm:$0xff]
      %v3665 = vld [vmem:[%s3595 + $0x228] sm:$0xff]
      %v3666 = vld [vmem:[%s3595 + $0x230] sm:$0xff]
      %v3667 = vld [vmem:[%s3595 + $0x238] sm:$0xff]
      %s3668 = scalar_lea.vmem %s2, 5
      %v3669 = vld [vmem:[%s3668] sm:$0x1]
      %3670 = vst.msk [vmem:[%s328 + $0x1] sm:$0xff] %vm225, %v3587
      %3671 = vst.msk [vmem:[%s328 + $0x11] sm:$0xff] %vm225, %v3588
      %3672 = vst.msk [vmem:[%s328 + $0x21] sm:$0xff] %vm225, %v3589
      %3673 = vst.msk [vmem:[%s328 + $0x31] sm:$0xff] %vm225, %v3590
      %3674 = vst.msk [vmem:[%s328 + $0x41] sm:$0xff] %vm225, %v3591
      %3675 = vst.msk [vmem:[%s328 + $0x51] sm:$0xff] %vm225, %v3592
      %3676 = vst.msk [vmem:[%s328 + $0x61] sm:$0xff] %vm225, %v3593
      %3677 = vst.msk [vmem:[%s328 + $0x71] sm:$0xff] %vm225, %v3594
      %v3678 = vld [vmem:[#allocation2] sm:$0xff]
      %v3679 = vld [vmem:[#allocation2 + $0x10] sm:$0xff]
      %v3680 = vld [vmem:[#allocation2 + $0x20] sm:$0xff]
      %v3681 = vld [vmem:[#allocation2 + $0x30] sm:$0xff]
      %v3682 = vld [vmem:[#allocation2 + $0x40] sm:$0xff]
      %v3683 = vld [vmem:[#allocation2 + $0x50] sm:$0xff]
      %v3684 = vld [vmem:[#allocation2 + $0x60] sm:$0xff]
      %v3685 = vld [vmem:[#allocation2 + $0x70] sm:$0xff]
      %v3686 = vld [vmem:[#allocation2 + $0x1] sm:$0xff]
      %v3687 = vld [vmem:[#allocation2 + $0x11] sm:$0xff]
      %v3688 = vld [vmem:[#allocation2 + $0x21] sm:$0xff]
      %v3689 = vld [vmem:[#allocation2 + $0x31] sm:$0xff]
      %v3690 = vld [vmem:[#allocation2 + $0x41] sm:$0xff]
      %v3691 = vld [vmem:[#allocation2 + $0x51] sm:$0xff]
      %v3692 = vld [vmem:[#allocation2 + $0x61] sm:$0xff]
      %v3693 = vld [vmem:[#allocation2 + $0x71] sm:$0xff]
      %v3694 = vld [vmem:[#allocation2 + $0x2] sm:$0xff]
      %v3695 = vld [vmem:[#allocation2 + $0x12] sm:$0xff]
      %v3696 = vld [vmem:[#allocation2 + $0x22] sm:$0xff]
      %v3697 = vld [vmem:[#allocation2 + $0x32] sm:$0xff]
      %v3698 = vld [vmem:[#allocation2 + $0x42] sm:$0xff]
      %v3699 = vld [vmem:[#allocation2 + $0x52] sm:$0xff]
      %v3700 = vld [vmem:[#allocation2 + $0x62] sm:$0xff]
      %v3701 = vld [vmem:[#allocation2 + $0x72] sm:$0xff]
      %v3702 = vld [vmem:[%s328] sm:$0xff]
      %v3703 = vld [vmem:[%s328 + $0x10] sm:$0xff]
      %v3704 = vld [vmem:[%s328 + $0x20] sm:$0xff]
      %v3705 = vld [vmem:[%s328 + $0x30] sm:$0xff]
      %v3706 = vld [vmem:[%s328 + $0x40] sm:$0xff]
      %v3707 = vld [vmem:[%s328 + $0x50] sm:$0xff]
      %v3708 = vld [vmem:[%s328 + $0x60] sm:$0xff]
      %v3709 = vld [vmem:[%s328 + $0x70] sm:$0xff]
      %v3710 = vld [vmem:[%s328 + $0x1] sm:$0xff]
      %v3711 = vld [vmem:[%s328 + $0x11] sm:$0xff]
      %v3712 = vld [vmem:[%s328 + $0x21] sm:$0xff]
      %v3713 = vld [vmem:[%s328 + $0x31] sm:$0xff]
      %v3714 = vld [vmem:[%s328 + $0x41] sm:$0xff]
      %v3715 = vld [vmem:[%s328 + $0x51] sm:$0xff]
      %v3716 = vld [vmem:[%s328 + $0x61] sm:$0xff]
      %v3717 = vld [vmem:[%s328 + $0x71] sm:$0xff]
      %v3718 = vld [vmem:[%s328 + $0x2] sm:$0xff]
      %v3719 = vld [vmem:[%s328 + $0x12] sm:$0xff]
      %v3720 = vld [vmem:[%s328 + $0x22] sm:$0xff]
      %v3721 = vld [vmem:[%s328 + $0x32] sm:$0xff]
      %v3722 = vld [vmem:[%s328 + $0x42] sm:$0xff]
      %v3723 = vld [vmem:[%s328 + $0x52] sm:$0xff]
      %v3724 = vld [vmem:[%s328 + $0x62] sm:$0xff]
      %v3725 = vld [vmem:[%s328 + $0x72] sm:$0xff]
      %v3726 = vld [vmem:[%s385] sm:$0xff]
      %v3727 = vld [vmem:[%s385 + $0x10] sm:$0xff]
      %v3728 = vld [vmem:[%s385 + $0x20] sm:$0xff]
      %v3729 = vld [vmem:[%s385 + $0x30] sm:$0xff]
      %v3730 = vld [vmem:[%s385 + $0x40] sm:$0xff]
      %v3731 = vld [vmem:[%s385 + $0x50] sm:$0xff]
      %v3732 = vld [vmem:[%s385 + $0x60] sm:$0xff]
      %v3733 = vld [vmem:[%s385 + $0x70] sm:$0xff]
      %v3734 = vld [vmem:[%s385 + $0x1] sm:$0xff]
      %v3735 = vld [vmem:[%s385 + $0x11] sm:$0xff]
      %v3736 = vld [vmem:[%s385 + $0x21] sm:$0xff]
      %v3737 = vld [vmem:[%s385 + $0x31] sm:$0xff]
      %v3738 = vld [vmem:[%s385 + $0x41] sm:$0xff]
      %v3739 = vld [vmem:[%s385 + $0x51] sm:$0xff]
      %v3740 = vld [vmem:[%s385 + $0x61] sm:$0xff]
      %v3741 = vld [vmem:[%s385 + $0x71] sm:$0xff]
      %v3742 = vld [vmem:[%s385 + $0x2] sm:$0xff]
      %v3743 = vld [vmem:[%s385 + $0x12] sm:$0xff]
      %v3744 = vld [vmem:[%s385 + $0x22] sm:$0xff]
      %v3745 = vld [vmem:[%s385 + $0x32] sm:$0xff]
      %v3746 = vld [vmem:[%s385 + $0x42] sm:$0xff]
      %v3747 = vld [vmem:[%s385 + $0x52] sm:$0xff]
      %v3748 = vld [vmem:[%s385 + $0x62] sm:$0xff]
      %v3749 = vld [vmem:[%s385 + $0x72] sm:$0xff]
      %3758 = vrot.lane.b32.xlu0 %v3686, 64
      %v3759 = vpop.permute.xlu0 %3758
      %3760 = vrot.lane.b32.xlu0 %v3687, 64
      %v3761 = vpop.permute.xlu0 %3760
      %3762 = vrot.lane.b32.xlu0 %v3688, 64
      %v3763 = vpop.permute.xlu0 %3762
      %3764 = vrot.lane.b32.xlu0 %v3689, 64
      %v3765 = vpop.permute.xlu0 %3764
      %3766 = vrot.lane.b32.xlu0 %v3690, 64
      %v3767 = vpop.permute.xlu0 %3766
      %3768 = vrot.lane.b32.xlu0 %v3691, 64
      %v3769 = vpop.permute.xlu0 %3768
      %3770 = vrot.lane.b32.xlu0 %v3692, 64
      %v3771 = vpop.permute.xlu0 %3770
      %3772 = vrot.lane.b32.xlu0 %v3693, 64
      %v3773 = vpop.permute.xlu0 %3772
      %3790 = vrot.lane.b32.xlu0 %v3702, 64
      %v3791 = vpop.permute.xlu0 %3790
      %3792 = vrot.lane.b32.xlu0 %v3703, 64
      %v3793 = vpop.permute.xlu0 %3792
      %3794 = vrot.lane.b32.xlu0 %v3704, 64
      %v3795 = vpop.permute.xlu0 %3794
      %3796 = vrot.lane.b32.xlu0 %v3705, 64
      %v3797 = vpop.permute.xlu0 %3796
      %3798 = vrot.lane.b32.xlu0 %v3706, 64
      %v3799 = vpop.permute.xlu0 %3798
      %3800 = vrot.lane.b32.xlu0 %v3707, 64
      %v3801 = vpop.permute.xlu0 %3800
      %3802 = vrot.lane.b32.xlu0 %v3708, 64
      %v3803 = vpop.permute.xlu0 %3802
      %3804 = vrot.lane.b32.xlu0 %v3709, 64
      %v3805 = vpop.permute.xlu0 %3804
      %3822 = vrot.lane.b32.xlu0 %v3718, 64
      %v3823 = vpop.permute.xlu0 %3822
      %3824 = vrot.lane.b32.xlu0 %v3719, 64
      %v3825 = vpop.permute.xlu0 %3824
      %3826 = vrot.lane.b32.xlu0 %v3720, 64
      %v3827 = vpop.permute.xlu0 %3826
      %3828 = vrot.lane.b32.xlu0 %v3721, 64
      %v3829 = vpop.permute.xlu0 %3828
      %3830 = vrot.lane.b32.xlu0 %v3722, 64
      %v3831 = vpop.permute.xlu0 %3830
      %3832 = vrot.lane.b32.xlu0 %v3723, 64
      %v3833 = vpop.permute.xlu0 %3832
      %3834 = vrot.lane.b32.xlu0 %v3724, 64
      %v3835 = vpop.permute.xlu0 %3834
      %3836 = vrot.lane.b32.xlu0 %v3725, 64
      %v3837 = vpop.permute.xlu0 %3836
      %3854 = vrot.lane.b32.xlu0 %v3734, 64
      %v3855 = vpop.permute.xlu0 %3854
      %3856 = vrot.lane.b32.xlu0 %v3735, 64
      %v3857 = vpop.permute.xlu0 %3856
      %3858 = vrot.lane.b32.xlu0 %v3736, 64
      %v3859 = vpop.permute.xlu0 %3858
      %3860 = vrot.lane.b32.xlu0 %v3737, 64
      %v3861 = vpop.permute.xlu0 %3860
      %3862 = vrot.lane.b32.xlu0 %v3738, 64
      %v3863 = vpop.permute.xlu0 %3862
      %3864 = vrot.lane.b32.xlu0 %v3739, 64
      %v3865 = vpop.permute.xlu0 %3864
      %3866 = vrot.lane.b32.xlu0 %v3740, 64
      %v3867 = vpop.permute.xlu0 %3866
      %3868 = vrot.lane.b32.xlu0 %v3741, 64
      %v3869 = vpop.permute.xlu0 %3868
      %v3878 = vsel %vm225, %v3678, %v3759
      %v3879 = vsel %vm225, %v3679, %v3761
      %v3880 = vsel %vm225, %v3680, %v3763
      %v3881 = vsel %vm225, %v3681, %v3765
      %v3882 = vsel %vm225, %v3682, %v3767
      %v3883 = vsel %vm225, %v3683, %v3769
      %v3884 = vsel %vm225, %v3684, %v3771
      %v3885 = vsel %vm225, %v3685, %v3773
      %v3886 = vsel %vm225, %v3694, %v3791
      %v3887 = vsel %vm225, %v3695, %v3793
      %v3888 = vsel %vm225, %v3696, %v3795
      %v3889 = vsel %vm225, %v3697, %v3797
      %v3890 = vsel %vm225, %v3698, %v3799
      %v3891 = vsel %vm225, %v3699, %v3801
      %v3892 = vsel %vm225, %v3700, %v3803
      %v3893 = vsel %vm225, %v3701, %v3805
      %v3894 = vsel %vm225, %v3710, %v3823
      %v3895 = vsel %vm225, %v3711, %v3825
      %v3896 = vsel %vm225, %v3712, %v3827
      %v3897 = vsel %vm225, %v3713, %v3829
      %v3898 = vsel %vm225, %v3714, %v3831
      %v3899 = vsel %vm225, %v3715, %v3833
      %v3900 = vsel %vm225, %v3716, %v3835
      %v3901 = vsel %vm225, %v3717, %v3837
      %v3902 = vsel %vm225, %v3726, %v3855
      %v3903 = vsel %vm225, %v3727, %v3857
      %v3904 = vsel %vm225, %v3728, %v3859
      %v3905 = vsel %vm225, %v3729, %v3861
      %v3906 = vsel %vm225, %v3730, %v3863
      %v3907 = vsel %vm225, %v3731, %v3865
      %v3908 = vsel %vm225, %v3732, %v3867
      %v3909 = vsel %vm225, %v3733, %v3869
      %v3911 = vlaneseq
      %v3912 = vshrl.u32 %v3911, 7
      %v3913 = vsub.s32 0, %v3912
      %v3914 = vrot.slane %v3669, %v3913
      %v3917 = vsel %vm225, %v3742, 0
      %v3920 = vsel %vm225, %v3743, 0
      %v3923 = vsel %vm225, %v3744, 0
      %v3926 = vsel %vm225, %v3745, 0
      %v3929 = vsel %vm225, %v3746, 0
      %v3932 = vsel %vm225, %v3747, 0
      %v3935 = vsel %vm225, %v3748, 0
      %v3938 = vsel %vm225, %v3749, 0
      %3940 = vmatprep.subr.mxu0 0.0
      %3941 = vmatpush1.msra.mxu0 %v3596
      %3942 = vmatprep.subr.mxu0 0.0
      %3943 = vmatpush1.msra.mxu0 %v3597
      %3944 = vmatprep.subr.mxu0 0.0
      %3945 = vmatpush1.msra.mxu0 %v3598
      %3946 = vmatprep.subr.mxu0 0.0
      %3947 = vmatpush1.msra.mxu0 %v3599
      %3948 = vmatprep.subr.mxu0 0.0
      %3949 = vmatpush1.msra.mxu0 %v3600
      %3950 = vmatprep.subr.mxu0 0.0
      %3951 = vmatpush1.msra.mxu0 %v3601
      %3952 = vmatprep.subr.mxu0 0.0
      %3953 = vmatpush1.msra.mxu0 %v3602
      %3954 = vmatprep.subr.mxu0 0.0
      %3955 = vmatpush1.msra.mxu0 %v3603
      %3956 = vmatprep.subr.mxu0 0.0
      %3957 = vmatpush1.msra.mxu0 %v3604
      %3958 = vmatprep.subr.mxu0 0.0
      %3959 = vmatpush1.msra.mxu0 %v3605
      %3960 = vmatprep.subr.mxu0 0.0
      %3961 = vmatpush1.msra.mxu0 %v3606
      %3962 = vmatprep.subr.mxu0 0.0
      %3963 = vmatpush1.msra.mxu0 %v3607
      %3964 = vmatprep.subr.mxu0 0.0
      %3965 = vmatpush1.msra.mxu0 %v3608
      %3966 = vmatprep.subr.mxu0 0.0
      %3967 = vmatpush1.msra.mxu0 %v3609
      %3968 = vmatprep.subr.mxu0 0.0
      %3969 = vmatpush1.msra.mxu0 %v3610
      %3970 = vmatprep.subr.mxu0 0.0
      %3971 = vmatpush1.msra.mxu0 %v3611
      %3972 = vmatprep.subr.mxu0 0.0
      %3973 = vmatpush1.msra.mxu0 %v3612
      %3974 = vmatprep.subr.mxu0 0.0
      %3975 = vmatpush1.msra.mxu0 %v3613
      %3976 = vmatprep.subr.mxu0 0.0
      %3977 = vmatpush1.msra.mxu0 %v3614
      %3978 = vmatprep.subr.mxu0 0.0
      %3979 = vmatpush1.msra.mxu0 %v3615
      %3980 = vmatprep.subr.mxu0 0.0
      %3981 = vmatpush1.msra.mxu0 %v3616
      %3982 = vmatprep.subr.mxu0 0.0
      %3983 = vmatpush1.msra.mxu0 %v3617
      %3984 = vmatprep.subr.mxu0 0.0
      %3985 = vmatpush1.msra.mxu0 %v3618
      %3986 = vmatprep.subr.mxu0 0.0
      %3987 = vmatpush1.msra.mxu0 %v3619
      %3988 = vmatprep.subr.mxu0 0.0
      %3989 = vmatpush1.msra.mxu0 %v3620
      %3990 = vmatprep.subr.mxu0 0.0
      %3991 = vmatpush1.msra.mxu0 %v3621
      %3992 = vmatprep.subr.mxu0 0.0
      %3993 = vmatpush1.msra.mxu0 %v3622
      %3994 = vmatprep.subr.mxu0 0.0
      %3995 = vmatpush1.msra.mxu0 %v3623
      %3996 = vmatprep.subr.mxu0 0.0
      %3997 = vmatpush1.msra.mxu0 %v3624
      %3998 = vmatprep.subr.mxu0 0.0
      %3999 = vmatpush1.msra.mxu0 %v3625
      %4000 = vmatprep.subr.mxu0 0.0
      %4001 = vmatpush1.msra.mxu0 %v3626
      %4002 = vmatprep.subr.mxu0 0.0
      %4003 = vmatpush1.msra.mxu0 %v3627
      %4004 = vmatprep.mubr.f32.mxu0 %v3886
      %4005 = vmatmul.mubr.f32.gmra.mrb[0].mxu0 %v3878
      %v4006 = vpop.f32.mrb[0].mxu0
      %v4007 = vadd.f32 %v3914, %v4006
      %v4008 = vpop.f32.mrb[0].mxu0
      %4009 = vmatprep.mubr.f32.mxu0 %v3887
      %4010 = vmatmul.mubr.f32.gmra.mrb[0].mxu0 %v3879
      %v4011 = vpop.f32.mrb[0].mxu0
      %v4012 = vadd.f32 %v3914, %v4011
      %v4013 = vpop.f32.mrb[0].mxu0
      %4014 = vmatprep.mubr.f32.mxu0 %v3888
      %4015 = vmatmul.mubr.f32.gmra.mrb[0].mxu0 %v3880
      %v4016 = vpop.f32.mrb[0].mxu0
      %v4017 = vadd.f32 %v3914, %v4016
      %v4018 = vpop.f32.mrb[0].mxu0
      %4019 = vmatprep.mubr.f32.mxu0 %v3889
      %4020 = vmatmul.mubr.f32.gmra.mrb[0].mxu0 %v3881
      %v4021 = vpop.f32.mrb[0].mxu0
      %v4022 = vadd.f32 %v3914, %v4021
      %v4023 = vpop.f32.mrb[0].mxu0
      %4024 = vmatprep.mubr.f32.mxu0 %v3890
      %4025 = vmatmul.mubr.f32.gmra.mrb[0].mxu0 %v3882
      %v4026 = vpop.f32.mrb[0].mxu0
      %v4027 = vadd.f32 %v3914, %v4026
      %v4028 = vpop.f32.mrb[0].mxu0
      %4029 = vmatprep.mubr.f32.mxu0 %v3891
      %4030 = vmatmul.mubr.f32.gmra.mrb[0].mxu0 %v3883
      %v4031 = vpop.f32.mrb[0].mxu0
      %v4032 = vadd.f32 %v3914, %v4031
      %v4033 = vpop.f32.mrb[0].mxu0
      %4034 = vmatprep.mubr.f32.mxu0 %v3892
      %4035 = vmatmul.mubr.f32.gmra.mrb[0].mxu0 %v3884
      %v4036 = vpop.f32.mrb[0].mxu0
      %v4037 = vadd.f32 %v3914, %v4036
      %v4038 = vpop.f32.mrb[0].mxu0
      %4039 = vmatprep.mubr.f32.mxu0 %v3893
      %4040 = vmatmul.mubr.f32.gmra.mrb[0].mxu0 %v3885
      %v4041 = vpop.f32.mrb[0].mxu0
      %v4042 = vadd.f32 %v3914, %v4041
      %v4043 = vpop.f32.mrb[0].mxu0
      %4044 = vdwg.mxu0
      %4045 = vmatprep.subr.mxu0 0.0
      %4046 = vmatpush1.msra.mxu0 %v3628
      %4047 = vmatprep.subr.mxu0 0.0
      %4048 = vmatpush1.msra.mxu0 %v3629
      %4049 = vmatprep.subr.mxu0 0.0
      %4050 = vmatpush1.msra.mxu0 %v3630
      %4051 = vmatprep.subr.mxu0 0.0
      %4052 = vmatpush1.msra.mxu0 %v3631
      %4053 = vmatprep.subr.mxu0 0.0
      %4054 = vmatpush1.msra.mxu0 %v3632
      %4055 = vmatprep.subr.mxu0 0.0
      %4056 = vmatpush1.msra.mxu0 %v3633
      %4057 = vmatprep.subr.mxu0 0.0
      %4058 = vmatpush1.msra.mxu0 %v3634
      %4059 = vmatprep.subr.mxu0 0.0
      %4060 = vmatpush1.msra.mxu0 %v3635
      %4061 = vmatprep.subr.mxu0 0.0
      %4062 = vmatpush1.msra.mxu0 %v3636
      %4063 = vmatprep.subr.mxu0 0.0
      %4064 = vmatpush1.msra.mxu0 %v3637
      %4065 = vmatprep.subr.mxu0 0.0
      %4066 = vmatpush1.msra.mxu0 %v3638
      %4067 = vmatprep.subr.mxu0 0.0
      %4068 = vmatpush1.msra.mxu0 %v3639
      %4069 = vmatprep.subr.mxu0 0.0
      %4070 = vmatpush1.msra.mxu0 %v3640
      %4071 = vmatprep.subr.mxu0 0.0
      %4072 = vmatpush1.msra.mxu0 %v3641
      %4073 = vmatprep.subr.mxu0 0.0
      %4074 = vmatpush1.msra.mxu0 %v3642
      %4075 = vmatprep.subr.mxu0 0.0
      %4076 = vmatpush1.msra.mxu0 %v3643
      %4077 = vmatprep.subr.mxu0 0.0
      %4078 = vmatpush1.msra.mxu0 %v3644
      %4079 = vmatprep.subr.mxu0 0.0
      %4080 = vmatpush1.msra.mxu0 %v3645
      %4081 = vmatprep.subr.mxu0 0.0
      %4082 = vmatpush1.msra.mxu0 %v3646
      %4083 = vmatprep.subr.mxu0 0.0
      %4084 = vmatpush1.msra.mxu0 %v3647
      %4085 = vmatprep.subr.mxu0 0.0
      %4086 = vmatpush1.msra.mxu0 %v3648
      %4087 = vmatprep.subr.mxu0 0.0
      %4088 = vmatpush1.msra.mxu0 %v3649
      %4089 = vmatprep.subr.mxu0 0.0
      %4090 = vmatpush1.msra.mxu0 %v3650
      %4091 = vmatprep.subr.mxu0 0.0
      %4092 = vmatpush1.msra.mxu0 %v3651
      %4093 = vmatprep.subr.mxu0 0.0
      %4094 = vmatpush1.msra.mxu0 %v3652
      %4095 = vmatprep.subr.mxu0 0.0
      %4096 = vmatpush1.msra.mxu0 %v3653
      %4097 = vmatprep.subr.mxu0 0.0
      %4098 = vmatpush1.msra.mxu0 %v3654
      %4099 = vmatprep.subr.mxu0 0.0
      %4100 = vmatpush1.msra.mxu0 %v3655
      %4101 = vmatprep.subr.mxu0 0.0
      %4102 = vmatpush1.msra.mxu0 %v3656
      %4103 = vmatprep.subr.mxu0 0.0
      %4104 = vmatpush1.msra.mxu0 %v3657
      %4105 = vmatprep.subr.mxu0 0.0
      %4106 = vmatpush1.msra.mxu0 %v3658
      %4107 = vmatprep.subr.mxu0 0.0
      %4108 = vmatpush1.msra.mxu0 %v3659
      %4109 = vmatprep.mubr.f32.mxu0 %v3902
      %4110 = vmatmul.mubr.f32.gmra.mrb[0].mxu0 %v3894
      %v4111 = vpop.f32.mrb[0].mxu0
      %v4112 = vadd.f32 %v4007, %v4111
      %v4113 = vpop.f32.mrb[0].mxu0
      %4114 = vmatprep.mubr.f32.mxu0 %v3903
      %4115 = vmatmul.mubr.f32.gmra.mrb[0].mxu0 %v3895
      %v4116 = vpop.f32.mrb[0].mxu0
      %v4117 = vadd.f32 %v4012, %v4116
      %v4118 = vpop.f32.mrb[0].mxu0
      %4119 = vmatprep.mubr.f32.mxu0 %v3904
      %4120 = vmatmul.mubr.f32.gmra.mrb[0].mxu0 %v3896
      %v4121 = vpop.f32.mrb[0].mxu0
      %v4122 = vadd.f32 %v4017, %v4121
      %v4123 = vpop.f32.mrb[0].mxu0
      %4124 = vmatprep.mubr.f32.mxu0 %v3905
      %4125 = vmatmul.mubr.f32.gmra.mrb[0].mxu0 %v3897
      %v4126 = vpop.f32.mrb[0].mxu0
      %v4127 = vadd.f32 %v4022, %v4126
      %v4128 = vpop.f32.mrb[0].mxu0
      %4129 = vmatprep.mubr.f32.mxu0 %v3906
      %4130 = vmatmul.mubr.f32.gmra.mrb[0].mxu0 %v3898
      %v4131 = vpop.f32.mrb[0].mxu0
      %v4132 = vadd.f32 %v4027, %v4131
      %v4133 = vpop.f32.mrb[0].mxu0
      %4134 = vmatprep.mubr.f32.mxu0 %v3907
      %4135 = vmatmul.mubr.f32.gmra.mrb[0].mxu0 %v3899
      %v4136 = vpop.f32.mrb[0].mxu0
      %v4137 = vadd.f32 %v4032, %v4136
      %v4138 = vpop.f32.mrb[0].mxu0
      %4139 = vmatprep.mubr.f32.mxu0 %v3908
      %4140 = vmatmul.mubr.f32.gmra.mrb[0].mxu0 %v3900
      %v4141 = vpop.f32.mrb[0].mxu0
      %v4142 = vadd.f32 %v4037, %v4141
      %v4143 = vpop.f32.mrb[0].mxu0
      %4144 = vmatprep.mubr.f32.mxu0 %v3909
      %4145 = vmatmul.mubr.f32.gmra.mrb[0].mxu0 %v3901
      %v4146 = vpop.f32.mrb[0].mxu0
      %v4147 = vadd.f32 %v4042, %v4146
      %v4148 = vpop.f32.mrb[0].mxu0
      %4149 = vdwg.mxu0
      %4150 = vmatprep.subr.mxu0 0.0
      %4151 = vmatpush1.msra.mxu0 %v3660
      %4152 = vmatprep.subr.mxu0 0.0
      %4153 = vmatpush1.msra.mxu0 %v3661
      %4154 = vmatprep.subr.mxu0 0.0
      %4155 = vmatpush1.msra.mxu0 %v3662
      %4156 = vmatprep.subr.mxu0 0.0
      %4157 = vmatpush1.msra.mxu0 %v3663
      %4158 = vmatprep.subr.mxu0 0.0
      %4159 = vmatpush1.msra.mxu0 %v3664
      %4160 = vmatprep.subr.mxu0 0.0
      %4161 = vmatpush1.msra.mxu0 %v3665
      %4162 = vmatprep.subr.mxu0 0.0
      %4163 = vmatpush1.msra.mxu0 %v3666
      %4164 = vmatprep.subr.mxu0 0.0
      %4165 = vmatpush1.msra.mxu0 %v3667
      %4166 = vmatprep.subr.mxu0 0.0
      %4167 = vmatpush1.msra.mxu0 0.0
      %4168 = vmatprep.subr.mxu0 0.0
      %4169 = vmatpush1.msra.mxu0 0.0
      %4170 = vmatprep.subr.mxu0 0.0
      %4171 = vmatpush1.msra.mxu0 0.0
      %4172 = vmatprep.subr.mxu0 0.0
      %4173 = vmatpush1.msra.mxu0 0.0
      %4174 = vmatprep.subr.mxu0 0.0
      %4175 = vmatpush1.msra.mxu0 0.0
      %4176 = vmatprep.subr.mxu0 0.0
      %4177 = vmatpush1.msra.mxu0 0.0
      %4178 = vmatprep.subr.mxu0 0.0
      %4179 = vmatpush1.msra.mxu0 0.0
      %4180 = vmatprep.subr.mxu0 0.0
      %4181 = vmatpush1.msra.mxu0 0.0
      %4182 = vmatprep.subr.mxu0 0.0
      %4183 = vmatpush1.msra.mxu0 0.0
      %4184 = vmatprep.subr.mxu0 0.0
      %4185 = vmatpush1.msra.mxu0 0.0
      %4186 = vmatprep.subr.mxu0 0.0
      %4187 = vmatpush1.msra.mxu0 0.0
      %4188 = vmatprep.subr.mxu0 0.0
      %4189 = vmatpush1.msra.mxu0 0.0
      %4190 = vmatprep.subr.mxu0 0.0
      %4191 = vmatpush1.msra.mxu0 0.0
      %4192 = vmatprep.subr.mxu0 0.0
      %4193 = vmatpush1.msra.mxu0 0.0
      %4194 = vmatprep.subr.mxu0 0.0
      %4195 = vmatpush1.msra.mxu0 0.0
      %4196 = vmatprep.subr.mxu0 0.0
      %4197 = vmatpush1.msra.mxu0 0.0
      %4198 = vmatprep.subr.mxu0 0.0
      %4199 = vmatpush1.msra.mxu0 0.0
      %4200 = vmatprep.subr.mxu0 0.0
      %4201 = vmatpush1.msra.mxu0 0.0
      %4202 = vmatprep.subr.mxu0 0.0
      %4203 = vmatpush1.msra.mxu0 0.0
      %4204 = vmatprep.subr.mxu0 0.0
      %4205 = vmatpush1.msra.mxu0 0.0
      %4206 = vmatprep.subr.mxu0 0.0
      %4207 = vmatpush1.msra.mxu0 0.0
      %4208 = vmatprep.subr.mxu0 0.0
      %4209 = vmatpush1.msra.mxu0 0.0
      %4210 = vmatprep.subr.mxu0 0.0
      %4211 = vmatpush1.msra.mxu0 0.0
      %4212 = vmatprep.subr.mxu0 0.0
      %4213 = vmatpush1.msra.mxu0 0.0
      %4214 = vmatprep.mubr.f32.mxu0 0.0
      %4215 = vmatmul.mubr.f32.gmra.mrb[0].mxu0 %v3917
      %v4216 = vpop.f32.mrb[0].mxu0
      %v4217 = vadd.f32 %v4112, %v4216
      %v4218 = vpop.f32.mrb[0].mxu0
      %4219 = vmatprep.mubr.f32.mxu0 0.0
      %4220 = vmatmul.mubr.f32.gmra.mrb[0].mxu0 %v3920
      %v4221 = vpop.f32.mrb[0].mxu0
      %v4222 = vadd.f32 %v4117, %v4221
      %v4223 = vpop.f32.mrb[0].mxu0
      %4224 = vmatprep.mubr.f32.mxu0 0.0
      %4225 = vmatmul.mubr.f32.gmra.mrb[0].mxu0 %v3923
      %v4226 = vpop.f32.mrb[0].mxu0
      %v4227 = vadd.f32 %v4122, %v4226
      %v4228 = vpop.f32.mrb[0].mxu0
      %4229 = vmatprep.mubr.f32.mxu0 0.0
      %4230 = vmatmul.mubr.f32.gmra.mrb[0].mxu0 %v3926
      %v4231 = vpop.f32.mrb[0].mxu0
      %v4232 = vadd.f32 %v4127, %v4231
      %v4233 = vpop.f32.mrb[0].mxu0
      %4234 = vmatprep.mubr.f32.mxu0 0.0
      %4235 = vmatmul.mubr.f32.gmra.mrb[0].mxu0 %v3929
      %v4236 = vpop.f32.mrb[0].mxu0
      %v4237 = vadd.f32 %v4132, %v4236
      %v4238 = vpop.f32.mrb[0].mxu0
      %4239 = vmatprep.mubr.f32.mxu0 0.0
      %4240 = vmatmul.mubr.f32.gmra.mrb[0].mxu0 %v3932
      %v4241 = vpop.f32.mrb[0].mxu0
      %v4242 = vadd.f32 %v4137, %v4241
      %v4243 = vpop.f32.mrb[0].mxu0
      %4244 = vmatprep.mubr.f32.mxu0 0.0
      %4245 = vmatmul.mubr.f32.gmra.mrb[0].mxu0 %v3935
      %v4246 = vpop.f32.mrb[0].mxu0
      %v4247 = vadd.f32 %v4142, %v4246
      %v4248 = vpop.f32.mrb[0].mxu0
      %4249 = vmatprep.mubr.f32.mxu0 0.0
      %4250 = vmatmul.mubr.f32.gmra.mrb[0].mxu0 %v3938
      %v4251 = vpop.f32.mrb[0].mxu0
      %v4252 = vadd.f32 %v4147, %v4251
      %v4253 = vpop.f32.mrb[0].mxu0
      %4254 = vdwg.mxu0
      %v4255 = vadd.f32 %v2919, %v4217
      %v4256 = vadd.f32 %v2920, %v4222
      %v4257 = vadd.f32 %v2921, %v4227
      %v4258 = vadd.f32 %v2922, %v4232
      %v4259 = vadd.f32 %v2923, %v4237
      %v4260 = vadd.f32 %v2924, %v4242
      %v4261 = vadd.f32 %v2925, %v4247
      %v4262 = vadd.f32 %v2926, %v4252
      %v4263 = vadd.f32 %v4255, %v247
      %v4264 = vadd.f32 %v4256, %v248
      %v4265 = vadd.f32 %v4257, %v249
      %v4266 = vadd.f32 %v4258, %v250
      %v4267 = vadd.f32 %v4259, %v251
      %v4268 = vadd.f32 %v4260, %v252
      %v4269 = vadd.f32 %v4261, %v253
      %v4270 = vadd.f32 %v4262, %v254
      %4271 = vst.msk [vmem:[%s328 + $0x1] sm:$0xff] %vm225, %v4263
      %4272 = vst.msk [vmem:[%s328 + $0x11] sm:$0xff] %vm225, %v4264
      %4273 = vst.msk [vmem:[%s328 + $0x21] sm:$0xff] %vm225, %v4265
      %4274 = vst.msk [vmem:[%s328 + $0x31] sm:$0xff] %vm225, %v4266
      %4275 = vst.msk [vmem:[%s328 + $0x41] sm:$0xff] %vm225, %v4267
      %4276 = vst.msk [vmem:[%s328 + $0x51] sm:$0xff] %vm225, %v4268
      %4277 = vst.msk [vmem:[%s328 + $0x61] sm:$0xff] %vm225, %v4269
      %4278 = vst.msk [vmem:[%s328 + $0x71] sm:$0xff] %vm225, %v4270
      %v4279 = vld [vmem:[#allocation2] sm:$0xff]
      %v4280 = vld [vmem:[#allocation2 + $0x10] sm:$0xff]
      %v4281 = vld [vmem:[#allocation2 + $0x20] sm:$0xff]
      %v4282 = vld [vmem:[#allocation2 + $0x30] sm:$0xff]
      %v4283 = vld [vmem:[#allocation2 + $0x40] sm:$0xff]
      %v4284 = vld [vmem:[#allocation2 + $0x50] sm:$0xff]
      %v4285 = vld [vmem:[#allocation2 + $0x60] sm:$0xff]
      %v4286 = vld [vmem:[#allocation2 + $0x70] sm:$0xff]
      %v4287 = vld [vmem:[#allocation2 + $0x1] sm:$0xff]
      %v4288 = vld [vmem:[#allocation2 + $0x11] sm:$0xff]
      %v4289 = vld [vmem:[#allocation2 + $0x21] sm:$0xff]
      %v4290 = vld [vmem:[#allocation2 + $0x31] sm:$0xff]
      %v4291 = vld [vmem:[#allocation2 + $0x41] sm:$0xff]
      %v4292 = vld [vmem:[#allocation2 + $0x51] sm:$0xff]
      %v4293 = vld [vmem:[#allocation2 + $0x61] sm:$0xff]
      %v4294 = vld [vmem:[#allocation2 + $0x71] sm:$0xff]
      %v4295 = vld [vmem:[#allocation2 + $0x2] sm:$0xff]
      %v4296 = vld [vmem:[#allocation2 + $0x12] sm:$0xff]
      %v4297 = vld [vmem:[#allocation2 + $0x22] sm:$0xff]
      %v4298 = vld [vmem:[#allocation2 + $0x32] sm:$0xff]
      %v4299 = vld [vmem:[#allocation2 + $0x42] sm:$0xff]
      %v4300 = vld [vmem:[#allocation2 + $0x52] sm:$0xff]
      %v4301 = vld [vmem:[#allocation2 + $0x62] sm:$0xff]
      %v4302 = vld [vmem:[#allocation2 + $0x72] sm:$0xff]
      %v4303 = vld [vmem:[%s328] sm:$0xff]
      %v4304 = vld [vmem:[%s328 + $0x10] sm:$0xff]
      %v4305 = vld [vmem:[%s328 + $0x20] sm:$0xff]
      %v4306 = vld [vmem:[%s328 + $0x30] sm:$0xff]
      %v4307 = vld [vmem:[%s328 + $0x40] sm:$0xff]
      %v4308 = vld [vmem:[%s328 + $0x50] sm:$0xff]
      %v4309 = vld [vmem:[%s328 + $0x60] sm:$0xff]
      %v4310 = vld [vmem:[%s328 + $0x70] sm:$0xff]
      %v4311 = vld [vmem:[%s328 + $0x1] sm:$0xff]
      %v4312 = vld [vmem:[%s328 + $0x11] sm:$0xff]
      %v4313 = vld [vmem:[%s328 + $0x21] sm:$0xff]
      %v4314 = vld [vmem:[%s328 + $0x31] sm:$0xff]
      %v4315 = vld [vmem:[%s328 + $0x41] sm:$0xff]
      %v4316 = vld [vmem:[%s328 + $0x51] sm:$0xff]
      %v4317 = vld [vmem:[%s328 + $0x61] sm:$0xff]
      %v4318 = vld [vmem:[%s328 + $0x71] sm:$0xff]
      %v4319 = vld [vmem:[%s328 + $0x2] sm:$0xff]
      %v4320 = vld [vmem:[%s328 + $0x12] sm:$0xff]
      %v4321 = vld [vmem:[%s328 + $0x22] sm:$0xff]
      %v4322 = vld [vmem:[%s328 + $0x32] sm:$0xff]
      %v4323 = vld [vmem:[%s328 + $0x42] sm:$0xff]
      %v4324 = vld [vmem:[%s328 + $0x52] sm:$0xff]
      %v4325 = vld [vmem:[%s328 + $0x62] sm:$0xff]
      %v4326 = vld [vmem:[%s328 + $0x72] sm:$0xff]
      %v4327 = vld [vmem:[%s385] sm:$0xff]
      %v4328 = vld [vmem:[%s385 + $0x10] sm:$0xff]
      %v4329 = vld [vmem:[%s385 + $0x20] sm:$0xff]
      %v4330 = vld [vmem:[%s385 + $0x30] sm:$0xff]
      %v4331 = vld [vmem:[%s385 + $0x40] sm:$0xff]
      %v4332 = vld [vmem:[%s385 + $0x50] sm:$0xff]
      %v4333 = vld [vmem:[%s385 + $0x60] sm:$0xff]
      %v4334 = vld [vmem:[%s385 + $0x70] sm:$0xff]
      %v4335 = vld [vmem:[%s385 + $0x1] sm:$0xff]
      %v4336 = vld [vmem:[%s385 + $0x11] sm:$0xff]
      %v4337 = vld [vmem:[%s385 + $0x21] sm:$0xff]
      %v4338 = vld [vmem:[%s385 + $0x31] sm:$0xff]
      %v4339 = vld [vmem:[%s385 + $0x41] sm:$0xff]
      %v4340 = vld [vmem:[%s385 + $0x51] sm:$0xff]
      %v4341 = vld [vmem:[%s385 + $0x61] sm:$0xff]
      %v4342 = vld [vmem:[%s385 + $0x71] sm:$0xff]
      %v4343 = vld [vmem:[%s385 + $0x2] sm:$0xff]
      %v4344 = vld [vmem:[%s385 + $0x12] sm:$0xff]
      %v4345 = vld [vmem:[%s385 + $0x22] sm:$0xff]
      %v4346 = vld [vmem:[%s385 + $0x32] sm:$0xff]
      %v4347 = vld [vmem:[%s385 + $0x42] sm:$0xff]
      %v4348 = vld [vmem:[%s385 + $0x52] sm:$0xff]
      %v4349 = vld [vmem:[%s385 + $0x62] sm:$0xff]
      %v4350 = vld [vmem:[%s385 + $0x72] sm:$0xff]
      %4359 = vrot.lane.b32.xlu0 %v4287, 64
      %v4360 = vpop.permute.xlu0 %4359
      %4361 = vrot.lane.b32.xlu0 %v4288, 64
      %v4362 = vpop.permute.xlu0 %4361
      %4363 = vrot.lane.b32.xlu0 %v4289, 64
      %v4364 = vpop.permute.xlu0 %4363
      %4365 = vrot.lane.b32.xlu0 %v4290, 64
      %v4366 = vpop.permute.xlu0 %4365
      %4367 = vrot.lane.b32.xlu0 %v4291, 64
      %v4368 = vpop.permute.xlu0 %4367
      %4369 = vrot.lane.b32.xlu0 %v4292, 64
      %v4370 = vpop.permute.xlu0 %4369
      %4371 = vrot.lane.b32.xlu0 %v4293, 64
      %v4372 = vpop.permute.xlu0 %4371
      %4373 = vrot.lane.b32.xlu0 %v4294, 64
      %v4374 = vpop.permute.xlu0 %4373
      %4391 = vrot.lane.b32.xlu0 %v4303, 64
      %v4392 = vpop.permute.xlu0 %4391
      %4393 = vrot.lane.b32.xlu0 %v4304, 64
      %v4394 = vpop.permute.xlu0 %4393
      %4395 = vrot.lane.b32.xlu0 %v4305, 64
      %v4396 = vpop.permute.xlu0 %4395
      %4397 = vrot.lane.b32.xlu0 %v4306, 64
      %v4398 = vpop.permute.xlu0 %4397
      %4399 = vrot.lane.b32.xlu0 %v4307, 64
      %v4400 = vpop.permute.xlu0 %4399
      %4401 = vrot.lane.b32.xlu0 %v4308, 64
      %v4402 = vpop.permute.xlu0 %4401
      %4403 = vrot.lane.b32.xlu0 %v4309, 64
      %v4404 = vpop.permute.xlu0 %4403
      %4405 = vrot.lane.b32.xlu0 %v4310, 64
      %v4406 = vpop.permute.xlu0 %4405
      %4423 = vrot.lane.b32.xlu0 %v4319, 64
      %v4424 = vpop.permute.xlu0 %4423
      %4425 = vrot.lane.b32.xlu0 %v4320, 64
      %v4426 = vpop.permute.xlu0 %4425
      %4427 = vrot.lane.b32.xlu0 %v4321, 64
      %v4428 = vpop.permute.xlu0 %4427
      %4429 = vrot.lane.b32.xlu0 %v4322, 64
      %v4430 = vpop.permute.xlu0 %4429
      %4431 = vrot.lane.b32.xlu0 %v4323, 64
      %v4432 = vpop.permute.xlu0 %4431
      %4433 = vrot.lane.b32.xlu0 %v4324, 64
      %v4434 = vpop.permute.xlu0 %4433
      %4435 = vrot.lane.b32.xlu0 %v4325, 64
      %v4436 = vpop.permute.xlu0 %4435
      %4437 = vrot.lane.b32.xlu0 %v4326, 64
      %v4438 = vpop.permute.xlu0 %4437
      %4455 = vrot.lane.b32.xlu0 %v4335, 64
      %v4456 = vpop.permute.xlu0 %4455
      %4457 = vrot.lane.b32.xlu0 %v4336, 64
      %v4458 = vpop.permute.xlu0 %4457
      %4459 = vrot.lane.b32.xlu0 %v4337, 64
      %v4460 = vpop.permute.xlu0 %4459
      %4461 = vrot.lane.b32.xlu0 %v4338, 64
      %v4462 = vpop.permute.xlu0 %4461
      %4463 = vrot.lane.b32.xlu0 %v4339, 64
      %v4464 = vpop.permute.xlu0 %4463
      %4465 = vrot.lane.b32.xlu0 %v4340, 64
      %v4466 = vpop.permute.xlu0 %4465
      %4467 = vrot.lane.b32.xlu0 %v4341, 64
      %v4468 = vpop.permute.xlu0 %4467
      %4469 = vrot.lane.b32.xlu0 %v4342, 64
      %v4470 = vpop.permute.xlu0 %4469
      %v4479 = vsel %vm225, %v4279, %v4360
      %v4480 = vsel %vm225, %v4280, %v4362
      %v4481 = vsel %vm225, %v4281, %v4364
      %v4482 = vsel %vm225, %v4282, %v4366
      %v4483 = vsel %vm225, %v4283, %v4368
      %v4484 = vsel %vm225, %v4284, %v4370
      %v4485 = vsel %vm225, %v4285, %v4372
      %v4486 = vsel %vm225, %v4286, %v4374
      %v4487 = vsel %vm225, %v4295, %v4392
      %v4488 = vsel %vm225, %v4296, %v4394
      %v4489 = vsel %vm225, %v4297, %v4396
      %v4490 = vsel %vm225, %v4298, %v4398
      %v4491 = vsel %vm225, %v4299, %v4400
      %v4492 = vsel %vm225, %v4300, %v4402
      %v4493 = vsel %vm225, %v4301, %v4404
      %v4494 = vsel %vm225, %v4302, %v4406
      %v4495 = vsel %vm225, %v4311, %v4424
      %v4496 = vsel %vm225, %v4312, %v4426
      %v4497 = vsel %vm225, %v4313, %v4428
      %v4498 = vsel %vm225, %v4314, %v4430
      %v4499 = vsel %vm225, %v4315, %v4432
      %v4500 = vsel %vm225, %v4316, %v4434
      %v4501 = vsel %vm225, %v4317, %v4436
      %v4502 = vsel %vm225, %v4318, %v4438
      %v4503 = vsel %vm225, %v4327, %v4456
      %v4504 = vsel %vm225, %v4328, %v4458
      %v4505 = vsel %vm225, %v4329, %v4460
      %v4506 = vsel %vm225, %v4330, %v4462
      %v4507 = vsel %vm225, %v4331, %v4464
      %v4508 = vsel %vm225, %v4332, %v4466
      %v4509 = vsel %vm225, %v4333, %v4468
      %v4510 = vsel %vm225, %v4334, %v4470
      %v4511 = vld [vmem:[%s3] sm:$0xff]
      %v4512 = vld [vmem:[%s3 + $0x8] sm:$0xff]
      %v4513 = vld [vmem:[%s3 + $0x10] sm:$0xff]
      %v4514 = vld [vmem:[%s3 + $0x18] sm:$0xff]
      %v4515 = vld [vmem:[%s3 + $0x20] sm:$0xff]
      %v4516 = vld [vmem:[%s3 + $0x28] sm:$0xff]
      %v4517 = vld [vmem:[%s3 + $0x30] sm:$0xff]
      %v4518 = vld [vmem:[%s3 + $0x38] sm:$0xff]
      %v4519 = vld [vmem:[%s3 + $0x40] sm:$0xff]
      %v4520 = vld [vmem:[%s3 + $0x48] sm:$0xff]
      %v4521 = vld [vmem:[%s3 + $0x50] sm:$0xff]
      %v4522 = vld [vmem:[%s3 + $0x58] sm:$0xff]
      %v4523 = vld [vmem:[%s3 + $0x60] sm:$0xff]
      %v4524 = vld [vmem:[%s3 + $0x68] sm:$0xff]
      %v4525 = vld [vmem:[%s3 + $0x70] sm:$0xff]
      %v4526 = vld [vmem:[%s3 + $0x78] sm:$0xff]
      %v4527 = vld [vmem:[%s3 + $0x80] sm:$0xff]
      %v4528 = vld [vmem:[%s3 + $0x88] sm:$0xff]
      %v4529 = vld [vmem:[%s3 + $0x90] sm:$0xff]
      %v4530 = vld [vmem:[%s3 + $0x98] sm:$0xff]
      %v4531 = vld [vmem:[%s3 + $0xa0] sm:$0xff]
      %v4532 = vld [vmem:[%s3 + $0xa8] sm:$0xff]
      %v4533 = vld [vmem:[%s3 + $0xb0] sm:$0xff]
      %v4534 = vld [vmem:[%s3 + $0xb8] sm:$0xff]
      %v4535 = vld [vmem:[%s3 + $0xc0] sm:$0xff]
      %v4536 = vld [vmem:[%s3 + $0xc8] sm:$0xff]
      %v4537 = vld [vmem:[%s3 + $0xd0] sm:$0xff]
      %v4538 = vld [vmem:[%s3 + $0xd8] sm:$0xff]
      %v4539 = vld [vmem:[%s3 + $0xe0] sm:$0xff]
      %v4540 = vld [vmem:[%s3 + $0xe8] sm:$0xff]
      %v4541 = vld [vmem:[%s3 + $0xf0] sm:$0xff]
      %v4542 = vld [vmem:[%s3 + $0xf8] sm:$0xff]
      %v4543 = vld [vmem:[%s3 + $0x100] sm:$0xff]
      %v4544 = vld [vmem:[%s3 + $0x108] sm:$0xff]
      %v4545 = vld [vmem:[%s3 + $0x110] sm:$0xff]
      %v4546 = vld [vmem:[%s3 + $0x118] sm:$0xff]
      %v4547 = vld [vmem:[%s3 + $0x120] sm:$0xff]
      %v4548 = vld [vmem:[%s3 + $0x128] sm:$0xff]
      %v4549 = vld [vmem:[%s3 + $0x130] sm:$0xff]
      %v4550 = vld [vmem:[%s3 + $0x138] sm:$0xff]
      %v4551 = vld [vmem:[%s3 + $0x140] sm:$0xff]
      %v4552 = vld [vmem:[%s3 + $0x148] sm:$0xff]
      %v4553 = vld [vmem:[%s3 + $0x150] sm:$0xff]
      %v4554 = vld [vmem:[%s3 + $0x158] sm:$0xff]
      %v4555 = vld [vmem:[%s3 + $0x160] sm:$0xff]
      %v4556 = vld [vmem:[%s3 + $0x168] sm:$0xff]
      %v4557 = vld [vmem:[%s3 + $0x170] sm:$0xff]
      %v4558 = vld [vmem:[%s3 + $0x178] sm:$0xff]
      %v4559 = vld [vmem:[%s3 + $0x180] sm:$0xff]
      %v4560 = vld [vmem:[%s3 + $0x188] sm:$0xff]
      %v4561 = vld [vmem:[%s3 + $0x190] sm:$0xff]
      %v4562 = vld [vmem:[%s3 + $0x198] sm:$0xff]
      %v4563 = vld [vmem:[%s3 + $0x1a0] sm:$0xff]
      %v4564 = vld [vmem:[%s3 + $0x1a8] sm:$0xff]
      %v4565 = vld [vmem:[%s3 + $0x1b0] sm:$0xff]
      %v4566 = vld [vmem:[%s3 + $0x1b8] sm:$0xff]
      %v4567 = vld [vmem:[%s3 + $0x1c0] sm:$0xff]
      %v4568 = vld [vmem:[%s3 + $0x1c8] sm:$0xff]
      %v4569 = vld [vmem:[%s3 + $0x1d0] sm:$0xff]
      %v4570 = vld [vmem:[%s3 + $0x1d8] sm:$0xff]
      %v4571 = vld [vmem:[%s3 + $0x1e0] sm:$0xff]
      %v4572 = vld [vmem:[%s3 + $0x1e8] sm:$0xff]
      %v4573 = vld [vmem:[%s3 + $0x1f0] sm:$0xff]
      %v4574 = vld [vmem:[%s3 + $0x1f8] sm:$0xff]
      %v4575 = vld [vmem:[%s3 + $0x200] sm:$0xff]
      %v4576 = vld [vmem:[%s3 + $0x208] sm:$0xff]
      %v4577 = vld [vmem:[%s3 + $0x210] sm:$0xff]
      %v4578 = vld [vmem:[%s3 + $0x218] sm:$0xff]
      %v4579 = vld [vmem:[%s3 + $0x220] sm:$0xff]
      %v4580 = vld [vmem:[%s3 + $0x228] sm:$0xff]
      %v4581 = vld [vmem:[%s3 + $0x230] sm:$0xff]
      %v4582 = vld [vmem:[%s3 + $0x238] sm:$0xff]
      %v4583 = vld [vmem:[%s4] sm:$0x1]
      %v4585 = vlaneseq
      %v4586 = vshrl.u32 %v4585, 7
      %v4587 = vsub.s32 0, %v4586
      %v4588 = vrot.slane %v4583, %v4587
      %v4591 = vsel %vm225, %v4343, 0
      %v4594 = vsel %vm225, %v4344, 0
      %v4597 = vsel %vm225, %v4345, 0
      %v4600 = vsel %vm225, %v4346, 0
      %v4603 = vsel %vm225, %v4347, 0
      %v4606 = vsel %vm225, %v4348, 0
      %v4609 = vsel %vm225, %v4349, 0
      %v4612 = vsel %vm225, %v4350, 0
      %4614 = vmatprep.subr.mxu0 0.0
      %4615 = vmatpush1.msra.mxu0 %v4511
      %4616 = vmatprep.subr.mxu0 0.0
      %4617 = vmatpush1.msra.mxu0 %v4512
      %4618 = vmatprep.subr.mxu0 0.0
      %4619 = vmatpush1.msra.mxu0 %v4513
      %4620 = vmatprep.subr.mxu0 0.0
      %4621 = vmatpush1.msra.mxu0 %v4514
      %4622 = vmatprep.subr.mxu0 0.0
      %4623 = vmatpush1.msra.mxu0 %v4515
      %4624 = vmatprep.subr.mxu0 0.0
      %4625 = vmatpush1.msra.mxu0 %v4516
      %4626 = vmatprep.subr.mxu0 0.0
      %4627 = vmatpush1.msra.mxu0 %v4517
      %4628 = vmatprep.subr.mxu0 0.0
      %4629 = vmatpush1.msra.mxu0 %v4518
      %4630 = vmatprep.subr.mxu0 0.0
      %4631 = vmatpush1.msra.mxu0 %v4519
      %4632 = vmatprep.subr.mxu0 0.0
      %4633 = vmatpush1.msra.mxu0 %v4520
      %4634 = vmatprep.subr.mxu0 0.0
      %4635 = vmatpush1.msra.mxu0 %v4521
      %4636 = vmatprep.subr.mxu0 0.0
      %4637 = vmatpush1.msra.mxu0 %v4522
      %4638 = vmatprep.subr.mxu0 0.0
      %4639 = vmatpush1.msra.mxu0 %v4523
      %4640 = vmatprep.subr.mxu0 0.0
      %4641 = vmatpush1.msra.mxu0 %v4524
      %4642 = vmatprep.subr.mxu0 0.0
      %4643 = vmatpush1.msra.mxu0 %v4525
      %4644 = vmatprep.subr.mxu0 0.0
      %4645 = vmatpush1.msra.mxu0 %v4526
      %4646 = vmatprep.subr.mxu0 0.0
      %4647 = vmatpush1.msra.mxu0 %v4527
      %4648 = vmatprep.subr.mxu0 0.0
      %4649 = vmatpush1.msra.mxu0 %v4528
      %4650 = vmatprep.subr.mxu0 0.0
      %4651 = vmatpush1.msra.mxu0 %v4529
      %4652 = vmatprep.subr.mxu0 0.0
      %4653 = vmatpush1.msra.mxu0 %v4530
      %4654 = vmatprep.subr.mxu0 0.0
      %4655 = vmatpush1.msra.mxu0 %v4531
      %4656 = vmatprep.subr.mxu0 0.0
      %4657 = vmatpush1.msra.mxu0 %v4532
      %4658 = vmatprep.subr.mxu0 0.0
      %4659 = vmatpush1.msra.mxu0 %v4533
      %4660 = vmatprep.subr.mxu0 0.0
      %4661 = vmatpush1.msra.mxu0 %v4534
      %4662 = vmatprep.subr.mxu0 0.0
      %4663 = vmatpush1.msra.mxu0 %v4535
      %4664 = vmatprep.subr.mxu0 0.0
      %4665 = vmatpush1.msra.mxu0 %v4536
      %4666 = vmatprep.subr.mxu0 0.0
      %4667 = vmatpush1.msra.mxu0 %v4537
      %4668 = vmatprep.subr.mxu0 0.0
      %4669 = vmatpush1.msra.mxu0 %v4538
      %4670 = vmatprep.subr.mxu0 0.0
      %4671 = vmatpush1.msra.mxu0 %v4539
      %4672 = vmatprep.subr.mxu0 0.0
      %4673 = vmatpush1.msra.mxu0 %v4540
      %4674 = vmatprep.subr.mxu0 0.0
      %4675 = vmatpush1.msra.mxu0 %v4541
      %4676 = vmatprep.subr.mxu0 0.0
      %4677 = vmatpush1.msra.mxu0 %v4542
      %4678 = vmatprep.mubr.f32.mxu0 %v4487
      %4679 = vmatmul.mubr.f32.gmra.mrb[0].mxu0 %v4479
      %v4680 = vpop.f32.mrb[0].mxu0
      %v4681 = vadd.f32 %v4588, %v4680
      %v4682 = vpop.f32.mrb[0].mxu0
      %4683 = vmatprep.mubr.f32.mxu0 %v4488
      %4684 = vmatmul.mubr.f32.gmra.mrb[0].mxu0 %v4480
      %v4685 = vpop.f32.mrb[0].mxu0
      %v4686 = vadd.f32 %v4588, %v4685
      %v4687 = vpop.f32.mrb[0].mxu0
      %4688 = vmatprep.mubr.f32.mxu0 %v4489
      %4689 = vmatmul.mubr.f32.gmra.mrb[0].mxu0 %v4481
      %v4690 = vpop.f32.mrb[0].mxu0
      %v4691 = vadd.f32 %v4588, %v4690
      %v4692 = vpop.f32.mrb[0].mxu0
      %4693 = vmatprep.mubr.f32.mxu0 %v4490
      %4694 = vmatmul.mubr.f32.gmra.mrb[0].mxu0 %v4482
      %v4695 = vpop.f32.mrb[0].mxu0
      %v4696 = vadd.f32 %v4588, %v4695
      %v4697 = vpop.f32.mrb[0].mxu0
      %4698 = vmatprep.mubr.f32.mxu0 %v4491
      %4699 = vmatmul.mubr.f32.gmra.mrb[0].mxu0 %v4483
      %v4700 = vpop.f32.mrb[0].mxu0
      %v4701 = vadd.f32 %v4588, %v4700
      %v4702 = vpop.f32.mrb[0].mxu0
      %4703 = vmatprep.mubr.f32.mxu0 %v4492
      %4704 = vmatmul.mubr.f32.gmra.mrb[0].mxu0 %v4484
      %v4705 = vpop.f32.mrb[0].mxu0
      %v4706 = vadd.f32 %v4588, %v4705
      %v4707 = vpop.f32.mrb[0].mxu0
      %4708 = vmatprep.mubr.f32.mxu0 %v4493
      %4709 = vmatmul.mubr.f32.gmra.mrb[0].mxu0 %v4485
      %v4710 = vpop.f32.mrb[0].mxu0
      %v4711 = vadd.f32 %v4588, %v4710
      %v4712 = vpop.f32.mrb[0].mxu0
      %4713 = vmatprep.mubr.f32.mxu0 %v4494
      %4714 = vmatmul.mubr.f32.gmra.mrb[0].mxu0 %v4486
      %v4715 = vpop.f32.mrb[0].mxu0
      %v4716 = vadd.f32 %v4588, %v4715
      %v4717 = vpop.f32.mrb[0].mxu0
      %4718 = vdwg.mxu0
      %4719 = vmatprep.subr.mxu0 0.0
      %4720 = vmatpush1.msra.mxu0 %v4543
      %4721 = vmatprep.subr.mxu0 0.0
      %4722 = vmatpush1.msra.mxu0 %v4544
      %4723 = vmatprep.subr.mxu0 0.0
      %4724 = vmatpush1.msra.mxu0 %v4545
      %4725 = vmatprep.subr.mxu0 0.0
      %4726 = vmatpush1.msra.mxu0 %v4546
      %4727 = vmatprep.subr.mxu0 0.0
      %4728 = vmatpush1.msra.mxu0 %v4547
      %4729 = vmatprep.subr.mxu0 0.0
      %4730 = vmatpush1.msra.mxu0 %v4548
      %4731 = vmatprep.subr.mxu0 0.0
      %4732 = vmatpush1.msra.mxu0 %v4549
      %4733 = vmatprep.subr.mxu0 0.0
      %4734 = vmatpush1.msra.mxu0 %v4550
      %4735 = vmatprep.subr.mxu0 0.0
      %4736 = vmatpush1.msra.mxu0 %v4551
      %4737 = vmatprep.subr.mxu0 0.0
      %4738 = vmatpush1.msra.mxu0 %v4552
      %4739 = vmatprep.subr.mxu0 0.0
      %4740 = vmatpush1.msra.mxu0 %v4553
      %4741 = vmatprep.subr.mxu0 0.0
      %4742 = vmatpush1.msra.mxu0 %v4554
      %4743 = vmatprep.subr.mxu0 0.0
      %4744 = vmatpush1.msra.mxu0 %v4555
      %4745 = vmatprep.subr.mxu0 0.0
      %4746 = vmatpush1.msra.mxu0 %v4556
      %4747 = vmatprep.subr.mxu0 0.0
      %4748 = vmatpush1.msra.mxu0 %v4557
      %4749 = vmatprep.subr.mxu0 0.0
      %4750 = vmatpush1.msra.mxu0 %v4558
      %4751 = vmatprep.subr.mxu0 0.0
      %4752 = vmatpush1.msra.mxu0 %v4559
      %4753 = vmatprep.subr.mxu0 0.0
      %4754 = vmatpush1.msra.mxu0 %v4560
      %4755 = vmatprep.subr.mxu0 0.0
      %4756 = vmatpush1.msra.mxu0 %v4561
      %4757 = vmatprep.subr.mxu0 0.0
      %4758 = vmatpush1.msra.mxu0 %v4562
      %4759 = vmatprep.subr.mxu0 0.0
      %4760 = vmatpush1.msra.mxu0 %v4563
      %4761 = vmatprep.subr.mxu0 0.0
      %4762 = vmatpush1.msra.mxu0 %v4564
      %4763 = vmatprep.subr.mxu0 0.0
      %4764 = vmatpush1.msra.mxu0 %v4565
      %4765 = vmatprep.subr.mxu0 0.0
      %4766 = vmatpush1.msra.mxu0 %v4566
      %4767 = vmatprep.subr.mxu0 0.0
      %4768 = vmatpush1.msra.mxu0 %v4567
      %4769 = vmatprep.subr.mxu0 0.0
      %4770 = vmatpush1.msra.mxu0 %v4568
      %4771 = vmatprep.subr.mxu0 0.0
      %4772 = vmatpush1.msra.mxu0 %v4569
      %4773 = vmatprep.subr.mxu0 0.0
      %4774 = vmatpush1.msra.mxu0 %v4570
      %4775 = vmatprep.subr.mxu0 0.0
      %4776 = vmatpush1.msra.mxu0 %v4571
      %4777 = vmatprep.subr.mxu0 0.0
      %4778 = vmatpush1.msra.mxu0 %v4572
      %4779 = vmatprep.subr.mxu0 0.0
      %4780 = vmatpush1.msra.mxu0 %v4573
      %4781 = vmatprep.subr.mxu0 0.0
      %4782 = vmatpush1.msra.mxu0 %v4574
      %4783 = vmatprep.mubr.f32.mxu0 %v4503
      %4784 = vmatmul.mubr.f32.gmra.mrb[0].mxu0 %v4495
      %v4785 = vpop.f32.mrb[0].mxu0
      %v4786 = vadd.f32 %v4681, %v4785
      %v4787 = vpop.f32.mrb[0].mxu0
      %4788 = vmatprep.mubr.f32.mxu0 %v4504
      %4789 = vmatmul.mubr.f32.gmra.mrb[0].mxu0 %v4496
      %v4790 = vpop.f32.mrb[0].mxu0
      %v4791 = vadd.f32 %v4686, %v4790
      %v4792 = vpop.f32.mrb[0].mxu0
      %4793 = vmatprep.mubr.f32.mxu0 %v4505
      %4794 = vmatmul.mubr.f32.gmra.mrb[0].mxu0 %v4497
      %v4795 = vpop.f32.mrb[0].mxu0
      %v4796 = vadd.f32 %v4691, %v4795
      %v4797 = vpop.f32.mrb[0].mxu0
      %4798 = vmatprep.mubr.f32.mxu0 %v4506
      %4799 = vmatmul.mubr.f32.gmra.mrb[0].mxu0 %v4498
      %v4800 = vpop.f32.mrb[0].mxu0
      %v4801 = vadd.f32 %v4696, %v4800
      %v4802 = vpop.f32.mrb[0].mxu0
      %4803 = vmatprep.mubr.f32.mxu0 %v4507
      %4804 = vmatmul.mubr.f32.gmra.mrb[0].mxu0 %v4499
      %v4805 = vpop.f32.mrb[0].mxu0
      %v4806 = vadd.f32 %v4701, %v4805
      %v4807 = vpop.f32.mrb[0].mxu0
      %4808 = vmatprep.mubr.f32.mxu0 %v4508
      %4809 = vmatmul.mubr.f32.gmra.mrb[0].mxu0 %v4500
      %v4810 = vpop.f32.mrb[0].mxu0
      %v4811 = vadd.f32 %v4706, %v4810
      %v4812 = vpop.f32.mrb[0].mxu0
      %4813 = vmatprep.mubr.f32.mxu0 %v4509
      %4814 = vmatmul.mubr.f32.gmra.mrb[0].mxu0 %v4501
      %v4815 = vpop.f32.mrb[0].mxu0
      %v4816 = vadd.f32 %v4711, %v4815
      %v4817 = vpop.f32.mrb[0].mxu0
      %4818 = vmatprep.mubr.f32.mxu0 %v4510
      %4819 = vmatmul.mubr.f32.gmra.mrb[0].mxu0 %v4502
      %v4820 = vpop.f32.mrb[0].mxu0
      %v4821 = vadd.f32 %v4716, %v4820
      %v4822 = vpop.f32.mrb[0].mxu0
      %4823 = vdwg.mxu0
      %4824 = vmatprep.subr.mxu0 0.0
      %4825 = vmatpush1.msra.mxu0 %v4575
      %4826 = vmatprep.subr.mxu0 0.0
      %4827 = vmatpush1.msra.mxu0 %v4576
      %4828 = vmatprep.subr.mxu0 0.0
      %4829 = vmatpush1.msra.mxu0 %v4577
      %4830 = vmatprep.subr.mxu0 0.0
      %4831 = vmatpush1.msra.mxu0 %v4578
      %4832 = vmatprep.subr.mxu0 0.0
      %4833 = vmatpush1.msra.mxu0 %v4579
      %4834 = vmatprep.subr.mxu0 0.0
      %4835 = vmatpush1.msra.mxu0 %v4580
      %4836 = vmatprep.subr.mxu0 0.0
      %4837 = vmatpush1.msra.mxu0 %v4581
      %4838 = vmatprep.subr.mxu0 0.0
      %4839 = vmatpush1.msra.mxu0 %v4582
      %4840 = vmatprep.subr.mxu0 0.0
      %4841 = vmatpush1.msra.mxu0 0.0
      %4842 = vmatprep.subr.mxu0 0.0
      %4843 = vmatpush1.msra.mxu0 0.0
      %4844 = vmatprep.subr.mxu0 0.0
      %4845 = vmatpush1.msra.mxu0 0.0
      %4846 = vmatprep.subr.mxu0 0.0
      %4847 = vmatpush1.msra.mxu0 0.0
      %4848 = vmatprep.subr.mxu0 0.0
      %4849 = vmatpush1.msra.mxu0 0.0
      %4850 = vmatprep.subr.mxu0 0.0
      %4851 = vmatpush1.msra.mxu0 0.0
      %4852 = vmatprep.subr.mxu0 0.0
      %4853 = vmatpush1.msra.mxu0 0.0
      %4854 = vmatprep.subr.mxu0 0.0
      %4855 = vmatpush1.msra.mxu0 0.0
      %4856 = vmatprep.subr.mxu0 0.0
      %4857 = vmatpush1.msra.mxu0 0.0
      %4858 = vmatprep.subr.mxu0 0.0
      %4859 = vmatpush1.msra.mxu0 0.0
      %4860 = vmatprep.subr.mxu0 0.0
      %4861 = vmatpush1.msra.mxu0 0.0
      %4862 = vmatprep.subr.mxu0 0.0
      %4863 = vmatpush1.msra.mxu0 0.0
      %4864 = vmatprep.subr.mxu0 0.0
      %4865 = vmatpush1.msra.mxu0 0.0
      %4866 = vmatprep.subr.mxu0 0.0
      %4867 = vmatpush1.msra.mxu0 0.0
      %4868 = vmatprep.subr.mxu0 0.0
      %4869 = vmatpush1.msra.mxu0 0.0
      %4870 = vmatprep.subr.mxu0 0.0
      %4871 = vmatpush1.msra.mxu0 0.0
      %4872 = vmatprep.subr.mxu0 0.0
      %4873 = vmatpush1.msra.mxu0 0.0
      %4874 = vmatprep.subr.mxu0 0.0
      %4875 = vmatpush1.msra.mxu0 0.0
      %4876 = vmatprep.subr.mxu0 0.0
      %4877 = vmatpush1.msra.mxu0 0.0
      %4878 = vmatprep.subr.mxu0 0.0
      %4879 = vmatpush1.msra.mxu0 0.0
      %4880 = vmatprep.subr.mxu0 0.0
      %4881 = vmatpush1.msra.mxu0 0.0
      %4882 = vmatprep.subr.mxu0 0.0
      %4883 = vmatpush1.msra.mxu0 0.0
      %4884 = vmatprep.subr.mxu0 0.0
      %4885 = vmatpush1.msra.mxu0 0.0
      %4886 = vmatprep.subr.mxu0 0.0
      %4887 = vmatpush1.msra.mxu0 0.0
      %4888 = vmatprep.mubr.f32.mxu0 0.0
      %4889 = vmatmul.mubr.f32.gmra.mrb[0].mxu0 %v4591
      %v4890 = vpop.f32.mrb[0].mxu0
      %v4891 = vadd.f32 %v4786, %v4890
      %v4892 = vpop.f32.mrb[0].mxu0
      %4893 = vmatprep.mubr.f32.mxu0 0.0
      %4894 = vmatmul.mubr.f32.gmra.mrb[0].mxu0 %v4594
      %v4895 = vpop.f32.mrb[0].mxu0
      %v4896 = vadd.f32 %v4791, %v4895
      %v4897 = vpop.f32.mrb[0].mxu0
      %4898 = vmatprep.mubr.f32.mxu0 0.0
      %4899 = vmatmul.mubr.f32.gmra.mrb[0].mxu0 %v4597
      %v4900 = vpop.f32.mrb[0].mxu0
      %v4901 = vadd.f32 %v4796, %v4900
      %v4902 = vpop.f32.mrb[0].mxu0
      %4903 = vmatprep.mubr.f32.mxu0 0.0
      %4904 = vmatmul.mubr.f32.gmra.mrb[0].mxu0 %v4600
      %v4905 = vpop.f32.mrb[0].mxu0
      %v4906 = vadd.f32 %v4801, %v4905
      %v4907 = vpop.f32.mrb[0].mxu0
      %4908 = vmatprep.mubr.f32.mxu0 0.0
      %4909 = vmatmul.mubr.f32.gmra.mrb[0].mxu0 %v4603
      %v4910 = vpop.f32.mrb[0].mxu0
      %v4911 = vadd.f32 %v4806, %v4910
      %v4912 = vpop.f32.mrb[0].mxu0
      %4913 = vmatprep.mubr.f32.mxu0 0.0
      %4914 = vmatmul.mubr.f32.gmra.mrb[0].mxu0 %v4606
      %v4915 = vpop.f32.mrb[0].mxu0
      %v4916 = vadd.f32 %v4811, %v4915
      %v4917 = vpop.f32.mrb[0].mxu0
      %4918 = vmatprep.mubr.f32.mxu0 0.0
      %4919 = vmatmul.mubr.f32.gmra.mrb[0].mxu0 %v4609
      %v4920 = vpop.f32.mrb[0].mxu0
      %v4921 = vadd.f32 %v4816, %v4920
      %v4922 = vpop.f32.mrb[0].mxu0
      %4923 = vmatprep.mubr.f32.mxu0 0.0
      %4924 = vmatmul.mubr.f32.gmra.mrb[0].mxu0 %v4612
      %v4925 = vpop.f32.mrb[0].mxu0
      %v4926 = vadd.f32 %v4821, %v4925
      %v4927 = vpop.f32.mrb[0].mxu0
      %4928 = vdwg.mxu0
      %vm4929 = vcmask 97280
      %4930 = vst.msk [vmem:[%s224] sm:$0xff] %vm4929, %v4891
      %4931 = vst.msk [vmem:[%s224 + $0x8] sm:$0xff] %vm4929, %v4896
      %4932 = vst.msk [vmem:[%s224 + $0x10] sm:$0xff] %vm4929, %v4901
      %4933 = vst.msk [vmem:[%s224 + $0x18] sm:$0xff] %vm4929, %v4906
      %4934 = vst.msk [vmem:[%s224 + $0x20] sm:$0xff] %vm4929, %v4911
      %4935 = vst.msk [vmem:[%s224 + $0x28] sm:$0xff] %vm4929, %v4916
      %4936 = vst.msk [vmem:[%s224 + $0x30] sm:$0xff] %vm4929, %v4921
      %4937 = vst.msk [vmem:[%s224 + $0x38] sm:$0xff] %vm4929, %v4926
      %p4938 = scmp.lt.s32.totalorder %s16, 1
      %s4939 = scalar_select %p4938, %s16, 1
      %s4940 = smul.addr %s4939, 8
      %s4941 = smul.addr %s4940, 8
      %s4942 = scalar_lea.vmem %s5, %s4941
      // Predicated region
      $region41: #{feature_reconsnet_apply.1} parent=39 // pred_check
        %p4943 = pneg %p144
      $region42: #{feature_reconsnet_apply.1} parent=39 // pred_check_branch
        %4945 = sbr.rel (%p4943) target = $region44
      $region43: #{feature_reconsnet_apply.1} parent=39 // pred_region
        _
      $region44: #{feature_reconsnet_apply.1} parent=39 // pred_fallthru
        _
    $region40: #{feature_reconsnet_apply.1} parent=5 // pred_fallthru
      _
    %p4946 = scmp.le.s32.totalorder 2, %s11
    // Predicated region
    $region45: #{feature_reconsnet_apply.1} parent=5 // pred_check
      %p4947 = pneg %p4946
    $region46: #{feature_reconsnet_apply.1} parent=5 // pred_check_branch
      %4949 = sbr.rel (%p4947) target = $region48
    $region47: #{feature_reconsnet_apply.1} parent=5 // pred_region
      %s4950 = ssub.s32 %s11, 2
      // Predicated region
      $region49: #{feature_reconsnet_apply.1} parent=47 // pred_check
        %p4951 = pneg %p150
      $region50: #{feature_reconsnet_apply.1} parent=47 // pred_check_branch
        %4953 = sbr.rel (%p4951) target = $region52
      $region51: #{feature_reconsnet_apply.1} parent=47 // pred_region
        %p4954 = scmp.lt.s32.totalorder %s17, 1
        %s4955 = scalar_select %p4954, %s17, 1
        %s4956 = smul.addr %s4955, 8
        %s4957 = smul.addr %s4956, 8
        %s4958 = scalar_lea.vmem %s5, %s4957
      $region52: #{feature_reconsnet_apply.1} parent=47 // pred_fallthru
        _
    $region48: #{feature_reconsnet_apply.1} parent=5 // pred_fallthru
      _
  $region6: #{feature_reconsnet_apply.1} parent=0 // loop_footer
    %s15 = sadd.s32 1, %s11
  $region7: #{feature_reconsnet_apply.1} parent=0 // loop_footer_branch
    %10 = sbr.rel target = $region3
  $region8: #{feature_reconsnet_apply.1} parent=0 // loop_exit
    _

</llo_original>
